<compile_context>
chip_gen: v7x
topology: tpu7x:2x2x1
jax: 0.10.0
libtpu: 0.0.40
codegen_flags: <defaults>
</compile_context>

<pallas_src>
import functools

import jax
import jax.numpy as jnp
from jax.experimental import pallas as pl
from jax.experimental.pallas import tpu as pltpu


def _round_up(x, m):
    return ((x + m - 1) // m) * m


def _cdiv(a, b):
    return -(-a // b)


def _vmem_cap_bytes():
    """Physical VMEM capacity of the current chip (conservative fallback)."""
    try:
        info = pltpu.get_tpu_info()
        for attr in ("vmem_capacity_bytes", "vmem_bytes", "vmem_size_bytes"):
            v = getattr(info, attr, None)
            if v:
                return int(v)
    except Exception:
        pass
    return 64 << 20  # v7x is the smallest (64 MiB); safe everywhere.


def _pick_tm(mi, n, tm_max):
    """Pick the M (extended output rows) tile; prefer an even cell count."""
    tm = min(tm_max, _round_up(mi, 16))
    mt = _cdiv(mi, tm)
    if n * mt == 1 and mi > 16:
        # Split M so both v7x TensorCores get work even at batch 1.
        tm = max(16, _round_up(_cdiv(mi, 2), 16))
        mt = _cdiv(mi, tm)
    elif (n * mt) % 2 == 1 and mi > tm:
        tm2 = max(16, _round_up(_cdiv(mi, mt + 1), 16))
        mt2 = _cdiv(mi, tm2)
        if (n * mt2) % 2 == 0:
            tm, mt = tm2, mt2
    return tm, tm * mt, mt


# ----------------------------------------------------------------------------
# Pallas kernel: out = relu( sum_t shift_t(x) @ (W_t * bn_scale) + bias [+res] )
# All taps are accumulated inside one kernel invocation (f32), so there is no
# reduction grid axis and no scratch accumulator.
# ----------------------------------------------------------------------------
def _conv_taps_kernel(x_ref, w_ref, b_ref, *rest, taps, tm, win, relu,
                      has_res, single_m):
    if has_res:
        r_ref, o_ref = rest
    else:
        (o_ref,) = rest

    acc = jnp.zeros(o_ref.shape, jnp.float32)

    if single_m:
        # One M tile per image: every tap is a *static* offset load.
        for t, (phase, shift) in enumerate(taps):
            lhs = x_ref[phase, pl.ds(shift, tm), :]
            acc = acc + jnp.dot(lhs, w_ref[t],
                                preferred_element_type=jnp.float32)
    else:
        # Aligned dynamic window load, then static in-value tap slices.
        row0 = pl.multiple_of(pl.program_id(1) * tm, 16)
        used = sorted({p for p, _ in taps})
        windows = {p: x_ref[p, pl.ds(row0, win), :] for p in used}
        for t, (phase, shift) in enumerate(taps):
            lhs = windows[phase][shift:shift + tm, :]
            acc = acc + jnp.dot(lhs, w_ref[t],
                                preferred_element_type=jnp.float32)

    y = acc + b_ref[...]
    if has_res:
        y = y + r_ref[...].astype(jnp.float32)
    if relu:
        y = jnp.maximum(y, 0.0)
    o_ref[...] = y.astype(o_ref.dtype)


# ----------------------------------------------------------------------------
# One Conv2d + BatchNorm2d (+ReLU) (+residual) as a single fused Pallas call.
# ----------------------------------------------------------------------------
def conv_bn(x, w, bn_scale, bn_bias, *, stride, pad, relu, residual=None,
            out_dtype=jnp.float32, tm_max=512):
    """x: (N, H, W, Cin) NHWC; w: (Cout, Cin, KH, KW) (PyTorch layout)."""
    n, h, wd, cin = x.shape
    cout, cin_w, kh, kw = w.shape
    assert cin_w == cin

    x = x.astype(jnp.bfloat16)

    # 1x1 strided conv: subsample first -> stride-1 conv (avoids unused phases).
    if kh == 1 and kw == 1 and stride > 1:
        assert pad == 0
        x = x[:, ::stride, ::stride, :]
        n, h, wd, cin = x.shape
        stride = 1

    s = stride
    ho = (h + 2 * pad - kh) // s + 1
    wo = (wd + 2 * pad - kw) // s + 1

    # Spatial zero-pad, then pad so H/W are divisible by the stride.
    hp, wp = h + 2 * pad, wd + 2 * pad
    hs, ws = _cdiv(hp, s), _cdiv(wp, s)
    xpad = jnp.pad(x, ((0, 0),
                       (pad, hs * s - hp + pad),
                       (pad, ws * s - wp + pad),
                       (0, 0)))
    # Space-to-depth into s*s phases, flattened spatially per phase.
    xph = xpad.reshape(n, hs, s, ws, s, cin).transpose(0, 2, 4, 1, 3, 5)
    xph = xph.reshape(n, s * s, hs * ws, cin)

    # Tap table: tap (di, dj) -> (phase index, flat row shift).
    taps = []
    for di in range(kh):
        for dj in range(kw):
            taps.append(((di % s) * s + (dj % s), (di // s) * ws + (dj // s)))
    smax = max(shift for _, shift in taps)
    smax_pad = _round_up(smax, 16) if smax else 0

    # Extended output: ho rows of ws columns per image (cols >= wo are garbage).
    mi = ho * ws
    tm, mp, mt = _pick_tm(mi, n, tm_max)
    win = tm + smax_pad
    single_m = (mt == 1)

    lp = _round_up(max(hs * ws, mp + smax_pad), 16)
    xph = jnp.pad(xph, ((0, 0), (0, 0), (0, lp - hs * ws), (0, 0)))

    # Weights: (KH*KW, Cin, Cp), BN scale folded in f32, then bf16. Lane-dense.
    cp = _round_up(cout, 128)
    wt = jnp.transpose(w, (2, 3, 1, 0)).reshape(kh * kw, cin, cout)
    wt = wt.astype(jnp.float32) * bn_scale.reshape(1, 1, cout).astype(jnp.float32)
    wt = jnp.pad(wt, ((0, 0), (0, 0), (0, cp - cout))).astype(jnp.bfloat16)

    bias = jnp.pad(bn_bias.reshape(1, cout).astype(jnp.float32),
                   ((0, 0), (0, cp - cout)))

    operands = [xph, wt, bias]
    in_specs = [
        pl.BlockSpec((None, s * s, lp, cin), lambda i, j: (i, 0, 0, 0)),
        pl.BlockSpec((kh * kw, cin, cp), lambda i, j: (0, 0, 0)),
        pl.BlockSpec((1, cp), lambda i, j: (0, 0)),
    ]

    has_res = residual is not None
    if has_res:
        res = residual.astype(jnp.bfloat16)
        assert res.shape == (n, ho, wo, cout)
        res = jnp.pad(res, ((0, 0), (0, 0), (0, ws - wo), (0, cp - cout)))
        res = res.reshape(n, mi, cp)
        res = jnp.pad(res, ((0, 0), (0, mp - mi), (0, 0)))
        operands.append(res)
        in_specs.append(pl.BlockSpec((None, tm, cp), lambda i, j: (i, j, 0)))

    kernel = functools.partial(
        _conv_taps_kernel, taps=tuple(taps), tm=tm, win=win, relu=relu,
        has_res=has_res, single_m=single_m)

    # VMEM budget: double-buffered operands + f32 accumulator + tap windows.
    out_bytes = tm * cp * jnp.dtype(out_dtype).itemsize
    n_phases_used = len({p for p, _ in taps})
    need = (2 * (s * s) * lp * cin * 2        # input (bf16)
            + 2 * kh * kw * cin * cp * 2      # weights (bf16)
            + 2 * cp * 4                      # bias (f32)
            + 2 * out_bytes                   # output
            + (2 * tm * cp * 2 if has_res else 0)   # residual (bf16)
            + tm * cp * 4                     # f32 accumulator temporaries
            + n_phases_used * win * cin * 2)  # tap windows
    cap = _vmem_cap_bytes()
    vmem_limit = int(min(max(need + (8 << 20), 32 << 20), (cap * 3) // 4))

    out = pl.pallas_call(
        kernel,
        out_shape=jax.ShapeDtypeStruct((n, mp, cp), out_dtype),
        grid_spec=pltpu.PrefetchScalarGridSpec(
            num_scalar_prefetch=0,
            grid=(n, mt),
            in_specs=in_specs,
            out_specs=pl.BlockSpec((None, tm, cp), lambda i, j: (i, j, 0)),
        ),
        compiler_params=pltpu.CompilerParams(
            dimension_semantics=("parallel", "parallel"),
            vmem_limit_bytes=vmem_limit,
        ),
    )(*operands)

    # Drop padded rows/channels and the per-row garbage columns.
    out = out[:, :mi, :cout].reshape(n, ho, ws, cout)[:, :, :wo, :]
    return out


def _fold_bn(gamma, beta, mean, var, eps=1e-5):
    scale = gamma / jnp.sqrt(var + eps)
    bias = beta - mean * scale
    return scale, bias


# ----------------------------------------------------------------------------
# BasicBlock forward (NHWC)
# ----------------------------------------------------------------------------
def basic_block_forward(x_nhwc, params, strides):
    # conv1: 3x3, stride=strides, pad=1, BN, ReLU    -> bf16 (consumer is bf16)
    s1, b1 = _fold_bn(*params["bn1"])
    y = conv_bn(x_nhwc, params["w1"], s1, b1, stride=strides, pad=1,
                relu=True, out_dtype=jnp.bfloat16)

    # shortcut
    if strides != 1:
        ssc, bsc = _fold_bn(*params["bn_sc"])
        sc = conv_bn(x_nhwc, params["w_sc"], ssc, bsc, stride=strides, pad=0,
                     relu=False, out_dtype=jnp.bfloat16)
    else:
        assert x_nhwc.shape[-1] == params["w1"].shape[0], \
            "identity shortcut requires in_channels == out_channels"
        sc = x_nhwc.astype(jnp.bfloat16)

    # conv2: 3x3, stride=1, pad=1, BN (no ReLU), then +shortcut, ReLU — fused.
    s2, b2 = _fold_bn(*params["bn2"])
    out = conv_bn(y, params["w2"], s2, b2, stride=1, pad=1, relu=True,
                  residual=sc, out_dtype=jnp.float32)
    return out


# ----------------------------------------------------------------------------
# References
#   * _ref_basic_block_f32: module semantics, full f32 (loose tolerance)
#   * _ref_basic_block_q:   mirrors the kernel's bf16 quantization (tight tol.)
# ----------------------------------------------------------------------------
def _ref_conv_bn_f32(x, w, scale, bias, stride, pad, relu):
    y = jax.lax.conv_general_dilated(
        x.astype(jnp.float32), jnp.transpose(w, (2, 3, 1, 0)),
        window_strides=(stride, stride), padding=[(pad, pad), (pad, pad)],
        dimension_numbers=("NHWC", "HWIO", "NHWC"))
    y = y * scale + bias
    return jnp.maximum(y, 0.0) if relu else y


def _ref_conv_bn_q(x, w, scale, bias, stride, pad, relu, out_dtype):
    xq = x.astype(jnp.bfloat16)
    wf = jnp.transpose(w, (2, 3, 1, 0)).astype(jnp.float32) * scale
    wq = wf.astype(jnp.bfloat16)
    y = jax.lax.conv_general_dilated(
        xq, wq, window_strides=(stride, stride),
        padding=[(pad, pad), (pad, pad)],
        dimension_numbers=("NHWC", "HWIO", "NHWC"),
        preferred_element_type=jnp.float32)
    y = y + bias
    if relu:
        y = jnp.maximum(y, 0.0)
    return y.astype(out_dtype)


def _ref_basic_block_f32(x, params, strides):
    s1, b1 = _fold_bn(*params["bn1"])
    y = _ref_conv_bn_f32(x, params["w1"], s1, b1, strides, 1, True)
    if strides != 1:
        ssc, bsc = _fold_bn(*params["bn_sc"])
        sc = _ref_conv_bn_f32(x, params["w_sc"], ssc, bsc, strides, 0, False)
    else:
        sc = x
    s2, b2 = _fold_bn(*params["bn2"])
    out = _ref_conv_bn_f32(y, params["w2"], s2, b2, 1, 1, False)
    return jnp.maximum(out + sc, 0.0)


def _ref_basic_block_q(x, params, strides):
    s1, b1 = _fold_bn(*params["bn1"])
    y = _ref_conv_bn_q(x, params["w1"], s1, b1, strides, 1, True, jnp.bfloat16)
    if strides != 1:
        ssc, bsc = _fold_bn(*params["bn_sc"])
        sc = _ref_conv_bn_q(x, params["w_sc"], ssc, bsc, strides, 0, False,
                            jnp.bfloat16)
    else:
        sc = x.astype(jnp.bfloat16)
    s2, b2 = _fold_bn(*params["bn2"])
    out = _ref_conv_bn_q(y, params["w2"], s2, b2, 1, 1, False, jnp.float32)
    return jnp.maximum(out + sc.astype(jnp.float32), 0.0)


# ----------------------------------------------------------------------------
if __name__ == "__main__":
    key = jax.random.PRNGKey(0)
    kx, k1, k2, k3 = jax.random.split(key, 4)

    # Small shapes: N=2, Cin=4, H=W=16, Cout=8, strides=2 (shortcut = 1x1 conv+BN)
    N, Cin, H, W = 2, 4, 16, 16
    Cout, strides = 8, 2

    x_nchw = jax.random.normal(kx, (N, Cin, H, W), jnp.float32)  # PyTorch NCHW
    x_nhwc = jnp.transpose(x_nchw, (0, 2, 3, 1))                  # kernel layout

    def bn_params(c, off):
        gamma = 1.0 + 0.1 * jnp.arange(c, dtype=jnp.float32)
        beta = 0.05 * jnp.arange(c, dtype=jnp.float32) + off
        mean = 0.01 * jnp.arange(c, dtype=jnp.float32)
        var = 1.0 + 0.02 * jnp.arange(c, dtype=jnp.float32)
        return (gamma, beta, mean, var)

    params = {
        "w1": 0.1 * jax.random.normal(k1, (Cout, Cin, 3, 3), jnp.float32),
        "bn1": bn_params(Cout, 0.0),
        "w2": 0.1 * jax.random.normal(k2, (Cout, Cout, 3, 3), jnp.float32),
        "bn2": bn_params(Cout, 0.1),
        "w_sc": 0.1 * jax.random.normal(k3, (Cout, Cin, 1, 1), jnp.float32),
        "bn_sc": bn_params(Cout, -0.1),
    }

    fwd = jax.jit(basic_block_forward, static_argnames=("strides",))
    out = jax.block_until_ready(fwd(x_nhwc, params, strides=strides))
    assert out.shape == (N, H // strides, W // strides, Cout), out.shape

    # Tight check against a reference with the same bf16 quantization strategy.
    ref_q = jax.block_until_ready(_ref_basic_block_q(x_nhwc, params, strides))
    assert jnp.allclose(out, ref_q, atol=3e-2, rtol=3e-2), \
        float(jnp.max(jnp.abs(out - ref_q)))

    # Looser check against the full-f32 module semantics.
    ref_f32 = jax.block_until_ready(_ref_basic_block_f32(x_nhwc, params, strides))
    assert jnp.allclose(out, ref_f32, atol=7e-2, rtol=7e-2), \
        float(jnp.max(jnp.abs(out - ref_f32)))

    print("KERNEL_OK")
</pallas_src>

<mosaic_0001>
module attributes {stable_mosaic.version = 11 : i64} {
  func.func @_conv_taps_kernel(%arg0: i32, %arg1: i32, %arg2: memref<1x4x96x4xbf16, #tpu.memory_space<vmem>>, %arg3: memref<9x4x128xbf16, #tpu.memory_space<vmem>>, %arg4: memref<1x128xf32, #tpu.memory_space<vmem>>, %arg5: memref<1x80x128xbf16, #tpu.memory_space<vmem>>) attributes {dimension_semantics = [#tpu.dimension_semantics<parallel>, #tpu.dimension_semantics<parallel>], iteration_bounds = array<i64: 2, 1>, scalar_prefetch = 0 : i64, scratch_operands = 0 : i64, tpu.core_type = #tpu.core_type<tc>, window_params = [{transform_indices = @transform_0, window_bounds = array<i64: 1, 4, 96, 4>}, {pipeline_mode = #tpu.pipeline_mode<synchronous>, transform_indices = @transform_1, window_bounds = array<i64: 9, 4, 128>}, {pipeline_mode = #tpu.pipeline_mode<synchronous>, transform_indices = @transform_2, window_bounds = array<i64: 1, 128>}, {transform_indices = @transform_3, window_bounds = array<i64: 1, 80, 128>}]} {
    %cst = arith.constant 0.000000e+00 : f32
    %0 = vector.broadcast %cst : f32 to vector<80x128xf32>
    %c0 = arith.constant 0 : index
    %c0_0 = arith.constant 0 : index
    %c0_1 = arith.constant 0 : index
    %c0_2 = arith.constant 0 : index
    %1 = vector.load %arg2[%c0, %c0_0, %c0_1, %c0_2] : memref<1x4x96x4xbf16, #tpu.memory_space<vmem>>, vector<1x1x80x4xbf16>
    %2 = vector.shape_cast %1 : vector<1x1x80x4xbf16> to vector<80x4xbf16>
    %c0_3 = arith.constant 0 : index
    %c0_4 = arith.constant 0 : index
    %c0_5 = arith.constant 0 : index
    %3 = vector.load %arg3[%c0_3, %c0_4, %c0_5] : memref<9x4x128xbf16, #tpu.memory_space<vmem>>, vector<1x4x128xbf16>
    %4 = vector.shape_cast %3 : vector<1x4x128xbf16> to vector<4x128xbf16>
    %cst_6 = arith.constant dense<0.000000e+00> : vector<80x128xf32>
    %5 = tpu.matmul %2, %4, %cst_6 {dimension_numbers = #tpu.dot_dimension_numbers<[1], [0], [0], [1], [0, 0, 1, 1], [], []>} : vector<80x4xbf16>, vector<4x128xbf16>, vector<80x128xf32> -> vector<80x128xf32>
    %6 = arith.addf %0, %5 : vector<80x128xf32>
    %c0_7 = arith.constant 0 : index
    %c1 = arith.constant 1 : index
    %c0_8 = arith.constant 0 : index
    %c0_9 = arith.constant 0 : index
    %7 = vector.load %arg2[%c0_7, %c1, %c0_8, %c0_9] : memref<1x4x96x4xbf16, #tpu.memory_space<vmem>>, vector<1x1x80x4xbf16>
    %8 = vector.shape_cast %7 : vector<1x1x80x4xbf16> to vector<80x4xbf16>
    %c1_10 = arith.constant 1 : index
    %c0_11 = arith.constant 0 : index
    %c0_12 = arith.constant 0 : index
    %9 = vector.load %arg3[%c1_10, %c0_11, %c0_12] : memref<9x4x128xbf16, #tpu.memory_space<vmem>>, vector<1x4x128xbf16>
    %10 = vector.shape_cast %9 : vector<1x4x128xbf16> to vector<4x128xbf16>
    %cst_13 = arith.constant dense<0.000000e+00> : vector<80x128xf32>
    %11 = tpu.matmul %8, %10, %cst_13 {dimension_numbers = #tpu.dot_dimension_numbers<[1], [0], [0], [1], [0, 0, 1, 1], [], []>} : vector<80x4xbf16>, vector<4x128xbf16>, vector<80x128xf32> -> vector<80x128xf32>
    %12 = arith.addf %6, %11 : vector<80x128xf32>
    %c0_14 = arith.constant 0 : index
    %c0_15 = arith.constant 0 : index
    %c1_16 = arith.constant 1 : index
    %c0_17 = arith.constant 0 : index
    %13 = vector.load %arg2[%c0_14, %c0_15, %c1_16, %c0_17] : memref<1x4x96x4xbf16, #tpu.memory_space<vmem>>, vector<1x1x80x4xbf16>
    %14 = vector.shape_cast %13 : vector<1x1x80x4xbf16> to vector<80x4xbf16>
    %c2 = arith.constant 2 : index
    %c0_18 = arith.constant 0 : index
    %c0_19 = arith.constant 0 : index
    %15 = vector.load %arg3[%c2, %c0_18, %c0_19] : memref<9x4x128xbf16, #tpu.memory_space<vmem>>, vector<1x4x128xbf16>
    %16 = vector.shape_cast %15 : vector<1x4x128xbf16> to vector<4x128xbf16>
    %cst_20 = arith.constant dense<0.000000e+00> : vector<80x128xf32>
    %17 = tpu.matmul %14, %16, %cst_20 {dimension_numbers = #tpu.dot_dimension_numbers<[1], [0], [0], [1], [0, 0, 1, 1], [], []>} : vector<80x4xbf16>, vector<4x128xbf16>, vector<80x128xf32> -> vector<80x128xf32>
    %18 = arith.addf %12, %17 : vector<80x128xf32>
    %c0_21 = arith.constant 0 : index
    %c2_22 = arith.constant 2 : index
    %c0_23 = arith.constant 0 : index
    %c0_24 = arith.constant 0 : index
    %19 = vector.load %arg2[%c0_21, %c2_22, %c0_23, %c0_24] : memref<1x4x96x4xbf16, #tpu.memory_space<vmem>>, vector<1x1x80x4xbf16>
    %20 = vector.shape_cast %19 : vector<1x1x80x4xbf16> to vector<80x4xbf16>
    %c3 = arith.constant 3 : index
    %c0_25 = arith.constant 0 : index
    %c0_26 = arith.constant 0 : index
    %21 = vector.load %arg3[%c3, %c0_25, %c0_26] : memref<9x4x128xbf16, #tpu.memory_space<vmem>>, vector<1x4x128xbf16>
    %22 = vector.shape_cast %21 : vector<1x4x128xbf16> to vector<4x128xbf16>
    %cst_27 = arith.constant dense<0.000000e+00> : vector<80x128xf32>
    %23 = tpu.matmul %20, %22, %cst_27 {dimension_numbers = #tpu.dot_dimension_numbers<[1], [0], [0], [1], [0, 0, 1, 1], [], []>} : vector<80x4xbf16>, vector<4x128xbf16>, vector<80x128xf32> -> vector<80x128xf32>
    %24 = arith.addf %18, %23 : vector<80x128xf32>
    %c0_28 = arith.constant 0 : index
    %c3_29 = arith.constant 3 : index
    %c0_30 = arith.constant 0 : index
    %c0_31 = arith.constant 0 : index
    %25 = vector.load %arg2[%c0_28, %c3_29, %c0_30, %c0_31] : memref<1x4x96x4xbf16, #tpu.memory_space<vmem>>, vector<1x1x80x4xbf16>
    %26 = vector.shape_cast %25 : vector<1x1x80x4xbf16> to vector<80x4xbf16>
    %c4 = arith.constant 4 : index
    %c0_32 = arith.constant 0 : index
    %c0_33 = arith.constant 0 : index
    %27 = vector.load %arg3[%c4, %c0_32, %c0_33] : memref<9x4x128xbf16, #tpu.memory_space<vmem>>, vector<1x4x128xbf16>
    %28 = vector.shape_cast %27 : vector<1x4x128xbf16> to vector<4x128xbf16>
    %cst_34 = arith.constant dense<0.000000e+00> : vector<80x128xf32>
    %29 = tpu.matmul %26, %28, %cst_34 {dimension_numbers = #tpu.dot_dimension_numbers<[1], [0], [0], [1], [0, 0, 1, 1], [], []>} : vector<80x4xbf16>, vector<4x128xbf16>, vector<80x128xf32> -> vector<80x128xf32>
    %30 = arith.addf %24, %29 : vector<80x128xf32>
    %c0_35 = arith.constant 0 : index
    %c2_36 = arith.constant 2 : index
    %c1_37 = arith.constant 1 : index
    %c0_38 = arith.constant 0 : index
    %31 = vector.load %arg2[%c0_35, %c2_36, %c1_37, %c0_38] : memref<1x4x96x4xbf16, #tpu.memory_space<vmem>>, vector<1x1x80x4xbf16>
    %32 = vector.shape_cast %31 : vector<1x1x80x4xbf16> to vector<80x4xbf16>
    %c5 = arith.constant 5 : index
    %c0_39 = arith.constant 0 : index
    %c0_40 = arith.constant 0 : index
    %33 = vector.load %arg3[%c5, %c0_39, %c0_40] : memref<9x4x128xbf16, #tpu.memory_space<vmem>>, vector<1x4x128xbf16>
    %34 = vector.shape_cast %33 : vector<1x4x128xbf16> to vector<4x128xbf16>
    %cst_41 = arith.constant dense<0.000000e+00> : vector<80x128xf32>
    %35 = tpu.matmul %32, %34, %cst_41 {dimension_numbers = #tpu.dot_dimension_numbers<[1], [0], [0], [1], [0, 0, 1, 1], [], []>} : vector<80x4xbf16>, vector<4x128xbf16>, vector<80x128xf32> -> vector<80x128xf32>
    %36 = arith.addf %30, %35 : vector<80x128xf32>
    %c0_42 = arith.constant 0 : index
    %c0_43 = arith.constant 0 : index
    %c9 = arith.constant 9 : index
    %c0_44 = arith.constant 0 : index
    %37 = vector.load %arg2[%c0_42, %c0_43, %c9, %c0_44] : memref<1x4x96x4xbf16, #tpu.memory_space<vmem>>, vector<1x1x80x4xbf16>
    %38 = vector.shape_cast %37 : vector<1x1x80x4xbf16> to vector<80x4xbf16>
    %c6 = arith.constant 6 : index
    %c0_45 = arith.constant 0 : index
    %c0_46 = arith.constant 0 : index
    %39 = vector.load %arg3[%c6, %c0_45, %c0_46] : memref<9x4x128xbf16, #tpu.memory_space<vmem>>, vector<1x4x128xbf16>
    %40 = vector.shape_cast %39 : vector<1x4x128xbf16> to vector<4x128xbf16>
    %cst_47 = arith.constant dense<0.000000e+00> : vector<80x128xf32>
    %41 = tpu.matmul %38, %40, %cst_47 {dimension_numbers = #tpu.dot_dimension_numbers<[1], [0], [0], [1], [0, 0, 1, 1], [], []>} : vector<80x4xbf16>, vector<4x128xbf16>, vector<80x128xf32> -> vector<80x128xf32>
    %42 = arith.addf %36, %41 : vector<80x128xf32>
    %c0_48 = arith.constant 0 : index
    %c1_49 = arith.constant 1 : index
    %c9_50 = arith.constant 9 : index
    %c0_51 = arith.constant 0 : index
    %43 = vector.load %arg2[%c0_48, %c1_49, %c9_50, %c0_51] : memref<1x4x96x4xbf16, #tpu.memory_space<vmem>>, vector<1x1x80x4xbf16>
    %44 = vector.shape_cast %43 : vector<1x1x80x4xbf16> to vector<80x4xbf16>
    %c7 = arith.constant 7 : index
    %c0_52 = arith.constant 0 : index
    %c0_53 = arith.constant 0 : index
    %45 = vector.load %arg3[%c7, %c0_52, %c0_53] : memref<9x4x128xbf16, #tpu.memory_space<vmem>>, vector<1x4x128xbf16>
    %46 = vector.shape_cast %45 : vector<1x4x128xbf16> to vector<4x128xbf16>
    %cst_54 = arith.constant dense<0.000000e+00> : vector<80x128xf32>
    %47 = tpu.matmul %44, %46, %cst_54 {dimension_numbers = #tpu.dot_dimension_numbers<[1], [0], [0], [1], [0, 0, 1, 1], [], []>} : vector<80x4xbf16>, vector<4x128xbf16>, vector<80x128xf32> -> vector<80x128xf32>
    %48 = arith.addf %42, %47 : vector<80x128xf32>
    %c0_55 = arith.constant 0 : index
    %c0_56 = arith.constant 0 : index
    %c10 = arith.constant 10 : index
    %c0_57 = arith.constant 0 : index
    %49 = vector.load %arg2[%c0_55, %c0_56, %c10, %c0_57] : memref<1x4x96x4xbf16, #tpu.memory_space<vmem>>, vector<1x1x80x4xbf16>
    %50 = vector.shape_cast %49 : vector<1x1x80x4xbf16> to vector<80x4xbf16>
    %c8 = arith.constant 8 : index
    %c0_58 = arith.constant 0 : index
    %c0_59 = arith.constant 0 : index
    %51 = vector.load %arg3[%c8, %c0_58, %c0_59] : memref<9x4x128xbf16, #tpu.memory_space<vmem>>, vector<1x4x128xbf16>
    %52 = vector.shape_cast %51 : vector<1x4x128xbf16> to vector<4x128xbf16>
    %cst_60 = arith.constant dense<0.000000e+00> : vector<80x128xf32>
    %53 = tpu.matmul %50, %52, %cst_60 {dimension_numbers = #tpu.dot_dimension_numbers<[1], [0], [0], [1], [0, 0, 1, 1], [], []>} : vector<80x4xbf16>, vector<4x128xbf16>, vector<80x128xf32> -> vector<80x128xf32>
    %54 = arith.addf %48, %53 : vector<80x128xf32>
    %c0_61 = arith.constant 0 : index
    %c0_62 = arith.constant 0 : index
    %55 = vector.load %arg4[%c0_61, %c0_62] : memref<1x128xf32, #tpu.memory_space<vmem>>, vector<1x128xf32>
    %56 = vector.broadcast %55 : vector<1x128xf32> to vector<80x128xf32>
    %57 = arith.addf %54, %56 : vector<80x128xf32>
    %cst_63 = arith.constant 0.000000e+00 : f32
    %58 = vector.broadcast %cst_63 : f32 to vector<80x128xf32>
    %59 = arith.maximumf %57, %58 : vector<80x128xf32>
    %60 = arith.truncf %59 : vector<80x128xf32> to vector<80x128xbf16>
    %c0_64 = arith.constant 0 : index
    %c0_65 = arith.constant 0 : index
    %c0_66 = arith.constant 0 : index
    %61 = vector.load %arg5[%c0_64, %c0_65, %c0_66] : memref<1x80x128xbf16, #tpu.memory_space<vmem>>, vector<1x80x128xbf16>
    %62 = vector.shape_cast %61 : vector<1x80x128xbf16> to vector<80x128xbf16>
    %63 = vector.shape_cast %60 : vector<80x128xbf16> to vector<1x80x128xbf16>
    tpu.vector_store %arg5[%c0_64, %c0_65, %c0_66], %63 {strides = array<i32>} : memref<1x80x128xbf16, #tpu.memory_space<vmem>>, vector<1x80x128xbf16>,
    return
  }
  func.func @transform_0(%arg0: i32, %arg1: i32) -> (i32, i32, i32, i32) {
    %c0_i32 = arith.constant 0 : i32
    %c0_i32_0 = arith.constant 0 : i32
    %c0_i32_1 = arith.constant 0 : i32
    %c0_i32_2 = arith.constant 0 : i32
    return %arg0, %c0_i32, %c0_i32_0, %c0_i32_1 : i32, i32, i32, i32
  }
  func.func @transform_1(%arg0: i32, %arg1: i32) -> (i32, i32, i32) {
    %c0_i32 = arith.constant 0 : i32
    %c0_i32_0 = arith.constant 0 : i32
    %c0_i32_1 = arith.constant 0 : i32
    %c0_i32_2 = arith.constant 0 : i32
    return %c0_i32, %c0_i32_0, %c0_i32_1 : i32, i32, i32
  }
  func.func @transform_2(%arg0: i32, %arg1: i32) -> (i32, i32) {
    %c0_i32 = arith.constant 0 : i32
    %c0_i32_0 = arith.constant 0 : i32
    %c0_i32_1 = arith.constant 0 : i32
    return %c0_i32, %c0_i32_0 : i32, i32
  }
  func.func @transform_3(%arg0: i32, %arg1: i32) -> (i32, i32, i32) {
    %c0_i32 = arith.constant 0 : i32
    %c0_i32_0 = arith.constant 0 : i32
    return %arg0, %arg1, %c0_i32 : i32, i32, i32
  }
}

module attributes {stable_mosaic.version = 11 : i64} {
  func.func @_conv_taps_kernel(%arg0: i32, %arg1: i32, %arg2: memref<1x1x64x4xbf16, #tpu.memory_space<vmem>>, %arg3: memref<1x4x128xbf16, #tpu.memory_space<vmem>>, %arg4: memref<1x128xf32, #tpu.memory_space<vmem>>, %arg5: memref<1x64x128xbf16, #tpu.memory_space<vmem>>) attributes {dimension_semantics = [#tpu.dimension_semantics<parallel>, #tpu.dimension_semantics<parallel>], iteration_bounds = array<i64: 2, 1>, scalar_prefetch = 0 : i64, scratch_operands = 0 : i64, tpu.core_type = #tpu.core_type<tc>, window_params = [{transform_indices = @transform_0, window_bounds = array<i64: 1, 1, 64, 4>}, {pipeline_mode = #tpu.pipeline_mode<synchronous>, transform_indices = @transform_1, window_bounds = array<i64: 1, 4, 128>}, {pipeline_mode = #tpu.pipeline_mode<synchronous>, transform_indices = @transform_2, window_bounds = array<i64: 1, 128>}, {transform_indices = @transform_3, window_bounds = array<i64: 1, 64, 128>}]} {
    %cst = arith.constant 0.000000e+00 : f32
    %0 = vector.broadcast %cst : f32 to vector<64x128xf32>
    %c0 = arith.constant 0 : index
    %c0_0 = arith.constant 0 : index
    %c0_1 = arith.constant 0 : index
    %c0_2 = arith.constant 0 : index
    %1 = vector.load %arg2[%c0, %c0_0, %c0_1, %c0_2] : memref<1x1x64x4xbf16, #tpu.memory_space<vmem>>, vector<1x1x64x4xbf16>
    %2 = vector.shape_cast %1 : vector<1x1x64x4xbf16> to vector<64x4xbf16>
    %c0_3 = arith.constant 0 : index
    %c0_4 = arith.constant 0 : index
    %c0_5 = arith.constant 0 : index
    %3 = vector.load %arg3[%c0_3, %c0_4, %c0_5] : memref<1x4x128xbf16, #tpu.memory_space<vmem>>, vector<1x4x128xbf16>
    %4 = vector.shape_cast %3 : vector<1x4x128xbf16> to vector<4x128xbf16>
    %cst_6 = arith.constant dense<0.000000e+00> : vector<64x128xf32>
    %5 = tpu.matmul %2, %4, %cst_6 {dimension_numbers = #tpu.dot_dimension_numbers<[1], [0], [0], [1], [0, 0, 1, 1], [], []>} : vector<64x4xbf16>, vector<4x128xbf16>, vector<64x128xf32> -> vector<64x128xf32>
    %6 = arith.addf %0, %5 : vector<64x128xf32>
    %c0_7 = arith.constant 0 : index
    %c0_8 = arith.constant 0 : index
    %7 = vector.load %arg4[%c0_7, %c0_8] : memref<1x128xf32, #tpu.memory_space<vmem>>, vector<1x128xf32>
    %8 = vector.broadcast %7 : vector<1x128xf32> to vector<64x128xf32>
    %9 = arith.addf %6, %8 : vector<64x128xf32>
    %10 = arith.truncf %9 : vector<64x128xf32> to vector<64x128xbf16>
    %c0_9 = arith.constant 0 : index
    %c0_10 = arith.constant 0 : index
    %c0_11 = arith.constant 0 : index
    %11 = vector.load %arg5[%c0_9, %c0_10, %c0_11] : memref<1x64x128xbf16, #tpu.memory_space<vmem>>, vector<1x64x128xbf16>
    %12 = vector.shape_cast %11 : vector<1x64x128xbf16> to vector<64x128xbf16>
    %13 = vector.shape_cast %10 : vector<64x128xbf16> to vector<1x64x128xbf16>
    tpu.vector_store %arg5[%c0_9, %c0_10, %c0_11], %13 {strides = array<i32>} : memref<1x64x128xbf16, #tpu.memory_space<vmem>>, vector<1x64x128xbf16>,
    return
  }
  func.func @transform_0(%arg0: i32, %arg1: i32) -> (i32, i32, i32, i32) {
    %c0_i32 = arith.constant 0 : i32
    %c0_i32_0 = arith.constant 0 : i32
    %c0_i32_1 = arith.constant 0 : i32
    %c0_i32_2 = arith.constant 0 : i32
    return %arg0, %c0_i32, %c0_i32_0, %c0_i32_1 : i32, i32, i32, i32
  }
  func.func @transform_1(%arg0: i32, %arg1: i32) -> (i32, i32, i32) {
    %c0_i32 = arith.constant 0 : i32
    %c0_i32_0 = arith.constant 0 : i32
    %c0_i32_1 = arith.constant 0 : i32
    %c0_i32_2 = arith.constant 0 : i32
    return %c0_i32, %c0_i32_0, %c0_i32_1 : i32, i32, i32
  }
  func.func @transform_2(%arg0: i32, %arg1: i32) -> (i32, i32) {
    %c0_i32 = arith.constant 0 : i32
    %c0_i32_0 = arith.constant 0 : i32
    %c0_i32_1 = arith.constant 0 : i32
    return %c0_i32, %c0_i32_0 : i32, i32
  }
  func.func @transform_3(%arg0: i32, %arg1: i32) -> (i32, i32, i32) {
    %c0_i32 = arith.constant 0 : i32
    %c0_i32_0 = arith.constant 0 : i32
    return %arg0, %arg1, %c0_i32 : i32, i32, i32
  }
}

module attributes {stable_mosaic.version = 11 : i64} {
  func.func @_conv_taps_kernel(%arg0: i32, %arg1: i32, %arg2: memref<1x1x112x8xbf16, #tpu.memory_space<vmem>>, %arg3: memref<9x8x128xbf16, #tpu.memory_space<vmem>>, %arg4: memref<1x128xf32, #tpu.memory_space<vmem>>, %arg5: memref<1x80x128xbf16, #tpu.memory_space<vmem>>, %arg6: memref<1x80x128xf32, #tpu.memory_space<vmem>>) attributes {dimension_semantics = [#tpu.dimension_semantics<parallel>, #tpu.dimension_semantics<parallel>], iteration_bounds = array<i64: 2, 1>, scalar_prefetch = 0 : i64, scratch_operands = 0 : i64, tpu.core_type = #tpu.core_type<tc>, window_params = [{transform_indices = @transform_0, window_bounds = array<i64: 1, 1, 112, 8>}, {pipeline_mode = #tpu.pipeline_mode<synchronous>, transform_indices = @transform_1, window_bounds = array<i64: 9, 8, 128>}, {pipeline_mode = #tpu.pipeline_mode<synchronous>, transform_indices = @transform_2, window_bounds = array<i64: 1, 128>}, {transform_indices = @transform_3, window_bounds = array<i64: 1, 80, 128>}, {transform_indices = @transform_4, window_bounds = array<i64: 1, 80, 128>}]} {
    %cst = arith.constant 0.000000e+00 : f32
    %0 = vector.broadcast %cst : f32 to vector<80x128xf32>
    %c0 = arith.constant 0 : index
    %c0_0 = arith.constant 0 : index
    %c0_1 = arith.constant 0 : index
    %c0_2 = arith.constant 0 : index
    %1 = vector.load %arg2[%c0, %c0_0, %c0_1, %c0_2] : memref<1x1x112x8xbf16, #tpu.memory_space<vmem>>, vector<1x1x80x8xbf16>
    %2 = vector.shape_cast %1 : vector<1x1x80x8xbf16> to vector<80x8xbf16>
    %c0_3 = arith.constant 0 : index
    %c0_4 = arith.constant 0 : index
    %c0_5 = arith.constant 0 : index
    %3 = vector.load %arg3[%c0_3, %c0_4, %c0_5] : memref<9x8x128xbf16, #tpu.memory_space<vmem>>, vector<1x8x128xbf16>
    %4 = vector.shape_cast %3 : vector<1x8x128xbf16> to vector<8x128xbf16>
    %cst_6 = arith.constant dense<0.000000e+00> : vector<80x128xf32>
    %5 = tpu.matmul %2, %4, %cst_6 {dimension_numbers = #tpu.dot_dimension_numbers<[1], [0], [0], [1], [0, 0, 1, 1], [], []>} : vector<80x8xbf16>, vector<8x128xbf16>, vector<80x128xf32> -> vector<80x128xf32>
    %6 = arith.addf %0, %5 : vector<80x128xf32>
    %c0_7 = arith.constant 0 : index
    %c0_8 = arith.constant 0 : index
    %c1 = arith.constant 1 : index
    %c0_9 = arith.constant 0 : index
    %7 = vector.load %arg2[%c0_7, %c0_8, %c1, %c0_9] : memref<1x1x112x8xbf16, #tpu.memory_space<vmem>>, vector<1x1x80x8xbf16>
    %8 = vector.shape_cast %7 : vector<1x1x80x8xbf16> to vector<80x8xbf16>
    %c1_10 = arith.constant 1 : index
    %c0_11 = arith.constant 0 : index
    %c0_12 = arith.constant 0 : index
    %9 = vector.load %arg3[%c1_10, %c0_11, %c0_12] : memref<9x8x128xbf16, #tpu.memory_space<vmem>>, vector<1x8x128xbf16>
    %10 = vector.shape_cast %9 : vector<1x8x128xbf16> to vector<8x128xbf16>
    %cst_13 = arith.constant dense<0.000000e+00> : vector<80x128xf32>
    %11 = tpu.matmul %8, %10, %cst_13 {dimension_numbers = #tpu.dot_dimension_numbers<[1], [0], [0], [1], [0, 0, 1, 1], [], []>} : vector<80x8xbf16>, vector<8x128xbf16>, vector<80x128xf32> -> vector<80x128xf32>
    %12 = arith.addf %6, %11 : vector<80x128xf32>
    %c0_14 = arith.constant 0 : index
    %c0_15 = arith.constant 0 : index
    %c2 = arith.constant 2 : index
    %c0_16 = arith.constant 0 : index
    %13 = vector.load %arg2[%c0_14, %c0_15, %c2, %c0_16] : memref<1x1x112x8xbf16, #tpu.memory_space<vmem>>, vector<1x1x80x8xbf16>
    %14 = vector.shape_cast %13 : vector<1x1x80x8xbf16> to vector<80x8xbf16>
    %c2_17 = arith.constant 2 : index
    %c0_18 = arith.constant 0 : index
    %c0_19 = arith.constant 0 : index
    %15 = vector.load %arg3[%c2_17, %c0_18, %c0_19] : memref<9x8x128xbf16, #tpu.memory_space<vmem>>, vector<1x8x128xbf16>
    %16 = vector.shape_cast %15 : vector<1x8x128xbf16> to vector<8x128xbf16>
    %cst_20 = arith.constant dense<0.000000e+00> : vector<80x128xf32>
    %17 = tpu.matmul %14, %16, %cst_20 {dimension_numbers = #tpu.dot_dimension_numbers<[1], [0], [0], [1], [0, 0, 1, 1], [], []>} : vector<80x8xbf16>, vector<8x128xbf16>, vector<80x128xf32> -> vector<80x128xf32>
    %18 = arith.addf %12, %17 : vector<80x128xf32>
    %c0_21 = arith.constant 0 : index
    %c0_22 = arith.constant 0 : index
    %c10 = arith.constant 10 : index
    %c0_23 = arith.constant 0 : index
    %19 = vector.load %arg2[%c0_21, %c0_22, %c10, %c0_23] : memref<1x1x112x8xbf16, #tpu.memory_space<vmem>>, vector<1x1x80x8xbf16>
    %20 = vector.shape_cast %19 : vector<1x1x80x8xbf16> to vector<80x8xbf16>
    %c3 = arith.constant 3 : index
    %c0_24 = arith.constant 0 : index
    %c0_25 = arith.constant 0 : index
    %21 = vector.load %arg3[%c3, %c0_24, %c0_25] : memref<9x8x128xbf16, #tpu.memory_space<vmem>>, vector<1x8x128xbf16>
    %22 = vector.shape_cast %21 : vector<1x8x128xbf16> to vector<8x128xbf16>
    %cst_26 = arith.constant dense<0.000000e+00> : vector<80x128xf32>
    %23 = tpu.matmul %20, %22, %cst_26 {dimension_numbers = #tpu.dot_dimension_numbers<[1], [0], [0], [1], [0, 0, 1, 1], [], []>} : vector<80x8xbf16>, vector<8x128xbf16>, vector<80x128xf32> -> vector<80x128xf32>
    %24 = arith.addf %18, %23 : vector<80x128xf32>
    %c0_27 = arith.constant 0 : index
    %c0_28 = arith.constant 0 : index
    %c11 = arith.constant 11 : index
    %c0_29 = arith.constant 0 : index
    %25 = vector.load %arg2[%c0_27, %c0_28, %c11, %c0_29] : memref<1x1x112x8xbf16, #tpu.memory_space<vmem>>, vector<1x1x80x8xbf16>
    %26 = vector.shape_cast %25 : vector<1x1x80x8xbf16> to vector<80x8xbf16>
    %c4 = arith.constant 4 : index
    %c0_30 = arith.constant 0 : index
    %c0_31 = arith.constant 0 : index
    %27 = vector.load %arg3[%c4, %c0_30, %c0_31] : memref<9x8x128xbf16, #tpu.memory_space<vmem>>, vector<1x8x128xbf16>
    %28 = vector.shape_cast %27 : vector<1x8x128xbf16> to vector<8x128xbf16>
    %cst_32 = arith.constant dense<0.000000e+00> : vector<80x128xf32>
    %29 = tpu.matmul %26, %28, %cst_32 {dimension_numbers = #tpu.dot_dimension_numbers<[1], [0], [0], [1], [0, 0, 1, 1], [], []>} : vector<80x8xbf16>, vector<8x128xbf16>, vector<80x128xf32> -> vector<80x128xf32>
    %30 = arith.addf %24, %29 : vector<80x128xf32>
    %c0_33 = arith.constant 0 : index
    %c0_34 = arith.constant 0 : index
    %c12 = arith.constant 12 : index
    %c0_35 = arith.constant 0 : index
    %31 = vector.load %arg2[%c0_33, %c0_34, %c12, %c0_35] : memref<1x1x112x8xbf16, #tpu.memory_space<vmem>>, vector<1x1x80x8xbf16>
    %32 = vector.shape_cast %31 : vector<1x1x80x8xbf16> to vector<80x8xbf16>
    %c5 = arith.constant 5 : index
    %c0_36 = arith.constant 0 : index
    %c0_37 = arith.constant 0 : index
    %33 = vector.load %arg3[%c5, %c0_36, %c0_37] : memref<9x8x128xbf16, #tpu.memory_space<vmem>>, vector<1x8x128xbf16>
    %34 = vector.shape_cast %33 : vector<1x8x128xbf16> to vector<8x128xbf16>
    %cst_38 = arith.constant dense<0.000000e+00> : vector<80x128xf32>
    %35 = tpu.matmul %32, %34, %cst_38 {dimension_numbers = #tpu.dot_dimension_numbers<[1], [0], [0], [1], [0, 0, 1, 1], [], []>} : vector<80x8xbf16>, vector<8x128xbf16>, vector<80x128xf32> -> vector<80x128xf32>
    %36 = arith.addf %30, %35 : vector<80x128xf32>
    %c0_39 = arith.constant 0 : index
    %c0_40 = arith.constant 0 : index
    %c20 = arith.constant 20 : index
    %c0_41 = arith.constant 0 : index
    %37 = vector.load %arg2[%c0_39, %c0_40, %c20, %c0_41] : memref<1x1x112x8xbf16, #tpu.memory_space<vmem>>, vector<1x1x80x8xbf16>
    %38 = vector.shape_cast %37 : vector<1x1x80x8xbf16> to vector<80x8xbf16>
    %c6 = arith.constant 6 : index
    %c0_42 = arith.constant 0 : index
    %c0_43 = arith.constant 0 : index
    %39 = vector.load %arg3[%c6, %c0_42, %c0_43] : memref<9x8x128xbf16, #tpu.memory_space<vmem>>, vector<1x8x128xbf16>
    %40 = vector.shape_cast %39 : vector<1x8x128xbf16> to vector<8x128xbf16>
    %cst_44 = arith.constant dense<0.000000e+00> : vector<80x128xf32>
    %41 = tpu.matmul %38, %40, %cst_44 {dimension_numbers = #tpu.dot_dimension_numbers<[1], [0], [0], [1], [0, 0, 1, 1], [], []>} : vector<80x8xbf16>, vector<8x128xbf16>, vector<80x128xf32> -> vector<80x128xf32>
    %42 = arith.addf %36, %41 : vector<80x128xf32>
    %c0_45 = arith.constant 0 : index
    %c0_46 = arith.constant 0 : index
    %c21 = arith.constant 21 : index
    %c0_47 = arith.constant 0 : index
    %43 = vector.load %arg2[%c0_45, %c0_46, %c21, %c0_47] : memref<1x1x112x8xbf16, #tpu.memory_space<vmem>>, vector<1x1x80x8xbf16>
    %44 = vector.shape_cast %43 : vector<1x1x80x8xbf16> to vector<80x8xbf16>
    %c7 = arith.constant 7 : index
    %c0_48 = arith.constant 0 : index
    %c0_49 = arith.constant 0 : index
    %45 = vector.load %arg3[%c7, %c0_48, %c0_49] : memref<9x8x128xbf16, #tpu.memory_space<vmem>>, vector<1x8x128xbf16>
    %46 = vector.shape_cast %45 : vector<1x8x128xbf16> to vector<8x128xbf16>
    %cst_50 = arith.constant dense<0.000000e+00> : vector<80x128xf32>
    %47 = tpu.matmul %44, %46, %cst_50 {dimension_numbers = #tpu.dot_dimension_numbers<[1], [0], [0], [1], [0, 0, 1, 1], [], []>} : vector<80x8xbf16>, vector<8x128xbf16>, vector<80x128xf32> -> vector<80x128xf32>
    %48 = arith.addf %42, %47 : vector<80x128xf32>
    %c0_51 = arith.constant 0 : index
    %c0_52 = arith.constant 0 : index
    %c22 = arith.constant 22 : index
    %c0_53 = arith.constant 0 : index
    %49 = vector.load %arg2[%c0_51, %c0_52, %c22, %c0_53] : memref<1x1x112x8xbf16, #tpu.memory_space<vmem>>, vector<1x1x80x8xbf16>
    %50 = vector.shape_cast %49 : vector<1x1x80x8xbf16> to vector<80x8xbf16>
    %c8 = arith.constant 8 : index
    %c0_54 = arith.constant 0 : index
    %c0_55 = arith.constant 0 : index
    %51 = vector.load %arg3[%c8, %c0_54, %c0_55] : memref<9x8x128xbf16, #tpu.memory_space<vmem>>, vector<1x8x128xbf16>
    %52 = vector.shape_cast %51 : vector<1x8x128xbf16> to vector<8x128xbf16>
    %cst_56 = arith.constant dense<0.000000e+00> : vector<80x128xf32>
    %53 = tpu.matmul %50, %52, %cst_56 {dimension_numbers = #tpu.dot_dimension_numbers<[1], [0], [0], [1], [0, 0, 1, 1], [], []>} : vector<80x8xbf16>, vector<8x128xbf16>, vector<80x128xf32> -> vector<80x128xf32>
    %54 = arith.addf %48, %53 : vector<80x128xf32>
    %c0_57 = arith.constant 0 : index
    %c0_58 = arith.constant 0 : index
    %55 = vector.load %arg4[%c0_57, %c0_58] : memref<1x128xf32, #tpu.memory_space<vmem>>, vector<1x128xf32>
    %56 = vector.broadcast %55 : vector<1x128xf32> to vector<80x128xf32>
    %57 = arith.addf %54, %56 : vector<80x128xf32>
    %c0_59 = arith.constant 0 : index
    %c0_60 = arith.constant 0 : index
    %c0_61 = arith.constant 0 : index
    %58 = vector.load %arg5[%c0_59, %c0_60, %c0_61] : memref<1x80x128xbf16, #tpu.memory_space<vmem>>, vector<1x80x128xbf16>
    %59 = vector.shape_cast %58 : vector<1x80x128xbf16> to vector<80x128xbf16>
    %60 = arith.extf %59 : vector<80x128xbf16> to vector<80x128xf32>
    %61 = arith.addf %57, %60 : vector<80x128xf32>
    %cst_62 = arith.constant 0.000000e+00 : f32
    %62 = vector.broadcast %cst_62 : f32 to vector<80x128xf32>
    %63 = arith.maximumf %61, %62 : vector<80x128xf32>
    %c0_63 = arith.constant 0 : index
    %c0_64 = arith.constant 0 : index
    %c0_65 = arith.constant 0 : index
    %64 = vector.load %arg6[%c0_63, %c0_64, %c0_65] : memref<1x80x128xf32, #tpu.memory_space<vmem>>, vector<1x80x128xf32>
    %65 = vector.shape_cast %64 : vector<1x80x128xf32> to vector<80x128xf32>
    %66 = vector.shape_cast %63 : vector<80x128xf32> to vector<1x80x128xf32>
    tpu.vector_store %arg6[%c0_63, %c0_64, %c0_65], %66 {strides = array<i32>} : memref<1x80x128xf32, #tpu.memory_space<vmem>>, vector<1x80x128xf32>,
    return
  }
  func.func @transform_0(%arg0: i32, %arg1: i32) -> (i32, i32, i32, i32) {
    %c0_i32 = arith.constant 0 : i32
    %c0_i32_0 = arith.constant 0 : i32
    %c0_i32_1 = arith.constant 0 : i32
    %c0_i32_2 = arith.constant 0 : i32
    return %arg0, %c0_i32, %c0_i32_0, %c0_i32_1 : i32, i32, i32, i32
  }
  func.func @transform_1(%arg0: i32, %arg1: i32) -> (i32, i32, i32) {
    %c0_i32 = arith.constant 0 : i32
    %c0_i32_0 = arith.constant 0 : i32
    %c0_i32_1 = arith.constant 0 : i32
    %c0_i32_2 = arith.constant 0 : i32
    return %c0_i32, %c0_i32_0, %c0_i32_1 : i32, i32, i32
  }
  func.func @transform_2(%arg0: i32, %arg1: i32) -> (i32, i32) {
    %c0_i32 = arith.constant 0 : i32
    %c0_i32_0 = arith.constant 0 : i32
    %c0_i32_1 = arith.constant 0 : i32
    return %c0_i32, %c0_i32_0 : i32, i32
  }
  func.func @transform_3(%arg0: i32, %arg1: i32) -> (i32, i32, i32) {
    %c0_i32 = arith.constant 0 : i32
    %c0_i32_0 = arith.constant 0 : i32
    return %arg0, %arg1, %c0_i32 : i32, i32, i32
  }
  func.func @transform_4(%arg0: i32, %arg1: i32) -> (i32, i32, i32) {
    %c0_i32 = arith.constant 0 : i32
    %c0_i32_0 = arith.constant 0 : i32
    return %arg0, %arg1, %c0_i32 : i32, i32, i32
  }
}

</mosaic_0001>

<llo_original>
// kernel: basic_block_forward.4
$region0: #{basic_block_forward.4}
  #allocation0 [shape = 'u32[]', space=smem, size = 0x4, offset = 0x4, fixed_abs, tag = 'smem constant byte address 0x4 - core index']
  #allocation1 [shape = 'u32[144,128]{1,0:T(1,128)}', space=vmem, size = 0x12000, scoped, tag = 'internal scratch']
  %s0 = inlined_call_operand.vmem [shape: bf16[2,1,64,4], index: 0, kind: input, shape index: {}]
  %s1 = inlined_call_operand.vmem [shape: bf16[1,4,128], index: 1, kind: input, shape index: {}]
  %s2 = inlined_call_operand.vmem [shape: f32[1,128], index: 2, kind: input, shape index: {}]
  %s3 = inlined_call_operand.vmem [shape: bf16[2,64,128], index: 3, kind: output, shape index: {}]
  %s4 = sld [smem:[#allocation0]]
  $region45: #{basic_block_forward.4} parent=0
    _
  %s6 = ssub.s32 1, %s4
  %s7 = scalar_select 0, %s6, %s4
  loop: start=0, step=1, limit=4
  $region2: #{basic_block_forward.4} parent=0 // loop_pre_header
    _
  $region3: #{basic_block_forward.4} parent=0 // loop_header
    %s9 = sphi 0, %s13
    %p10 = scmp.ge.s32.totalorder %s9, 4
    %s16 = sphi 0, %s28
    %s17 = sphi 0, %s24
    %s18 = sphi 0, %s16
    %s19 = sphi 0, %s17
    %s20 = sphi 0, %s18
    %s21 = sphi 0, %s19
    %s31 = sphi 0, %s33
    %s34 = sphi 0, %s31
    %s35 = sphi 0, %s34
    %s51 = sphi 0, %s35
    %s55 = sphi 0, %s55
    %s57 = sphi 0, %s55
    %s58 = sphi 0, %s57
    %s72 = sphi 0, %s58
    %s76 = sphi 0, %s76
    %s78 = sphi 0, %s76
    %s79 = sphi 0, %s78
    %s93 = sphi 0, %s79
    %s101 = sphi 0, %s103
    %s104 = sphi 0, %s101
    %s105 = sphi 0, %s104
    %s121 = sphi 0, %s105
  $region4: #{basic_block_forward.4} parent=0 // loop_header_branch
    %12 = sbr.rel (%p10) target = $region8
  $region5: #{basic_block_forward.4} parent=0 // loop_body
    %s14 = ssub.s32 %s9, 1
    %s15 = ssub.s32 %s9, 2
    %s22 = sadd.s32 1, %s17
    %p23 = scmp.ge.s32.totalorder %s22, 1
    %s24 = scalar_select %p23, 0, %s22
    %s25 = sadd.s32 1, %s16
    %s26 = scalar_select %p23, %s25, %s16
    %p27 = scmp.ge.s32.totalorder %s26, 2
    %s28 = scalar_select %p27, 0, %s26
    %s29 = ssub.s32 %s16, %s28
    %p30 = scmp.eq.s32.totalorder %s29, 0
    %s32 = sadd.s32 %s31, 1
    %s33 = scalar_select %p30, %s31, %s32
    %p36 = pneg %p30
    %p37 = scmp.eq.s32.totalorder %s9, 1
    %p38 = por %p36, %p37
    %p39 = scmp.ne.s32.totalorder %s31, %s34
    %p40 = scmp.eq.s32.totalorder %s9, 0
    %p41 = por %p39, %p40
    %p42 = scmp.ne.s32.totalorder %s31, %s34
    %p43 = scmp.eq.s32.totalorder %s14, 1
    %p44 = por %p42, %p43
    %p45 = scmp.ne.s32.totalorder %s34, %s35
    %p46 = scmp.eq.s32.totalorder %s14, 0
    %p47 = por %p45, %p46
    %p48 = scmp.ne.s32.totalorder %s34, %s35
    %p49 = scmp.eq.s32.totalorder %s15, 1
    %p50 = por %p48, %p49
    %p52 = scmp.ne.s32.totalorder %s35, %s51
    %p53 = scmp.eq.s32.totalorder %s15, 0
    %p54 = por %p52, %p53
    %s56 = sadd.s32 %s55, 1
    %p59 = scmp.eq.s32.totalorder %s9, 1
    %p60 = scmp.ne.s32.totalorder %s55, %s57
    %p61 = scmp.eq.s32.totalorder %s9, 0
    %p62 = por %p60, %p61
    %p63 = scmp.ne.s32.totalorder %s55, %s57
    %p64 = scmp.eq.s32.totalorder %s14, 1
    %p65 = por %p63, %p64
    %p66 = scmp.ne.s32.totalorder %s57, %s58
    %p67 = scmp.eq.s32.totalorder %s14, 0
    %p68 = por %p66, %p67
    %p69 = scmp.ne.s32.totalorder %s57, %s58
    %p70 = scmp.eq.s32.totalorder %s15, 1
    %p71 = por %p69, %p70
    %p73 = scmp.ne.s32.totalorder %s58, %s72
    %p74 = scmp.eq.s32.totalorder %s15, 0
    %p75 = por %p73, %p74
    %s77 = sadd.s32 %s76, 1
    %p80 = scmp.eq.s32.totalorder %s9, 1
    %p81 = scmp.ne.s32.totalorder %s76, %s78
    %p82 = scmp.eq.s32.totalorder %s9, 0
    %p83 = por %p81, %p82
    %p84 = scmp.ne.s32.totalorder %s76, %s78
    %p85 = scmp.eq.s32.totalorder %s14, 1
    %p86 = por %p84, %p85
    %p87 = scmp.ne.s32.totalorder %s78, %s79
    %p88 = scmp.eq.s32.totalorder %s14, 0
    %p89 = por %p87, %p88
    %p90 = scmp.ne.s32.totalorder %s78, %s79
    %p91 = scmp.eq.s32.totalorder %s15, 1
    %p92 = por %p90, %p91
    %p94 = scmp.ne.s32.totalorder %s79, %s93
    %p95 = scmp.eq.s32.totalorder %s15, 0
    %p96 = por %p94, %p95
    %s97 = ssub.s32 %s16, %s28
    %s98 = ssub.s32 %s17, %s24
    %s99 = sor.u32 %s97, %s98
    %p100 = scmp.eq.s32.totalorder %s99, 0
    %s102 = sadd.s32 %s101, 1
    %s103 = scalar_select %p100, %s101, %s102
    %p106 = pneg %p100
    %p107 = scmp.eq.s32.totalorder %s9, 1
    %p108 = por %p106, %p107
    %p109 = scmp.ne.s32.totalorder %s101, %s104
    %p110 = scmp.eq.s32.totalorder %s9, 0
    %p111 = por %p109, %p110
    %p112 = scmp.ne.s32.totalorder %s101, %s104
    %p113 = scmp.eq.s32.totalorder %s14, 1
    %p114 = por %p112, %p113
    %p115 = scmp.ne.s32.totalorder %s104, %s105
    %p116 = scmp.eq.s32.totalorder %s14, 0
    %p117 = por %p115, %p116
    %p118 = scmp.ne.s32.totalorder %s104, %s105
    %p119 = scmp.eq.s32.totalorder %s15, 1
    %p120 = por %p118, %p119
    %p122 = scmp.ne.s32.totalorder %s105, %s121
    %p123 = scmp.eq.s32.totalorder %s15, 0
    %p124 = por %p122, %p123
    %p125 = scmp.le.s32.totalorder 1, %s9
    %p126 = scmp.lt.s32.totalorder %s9, 3
    %p127 = pnand %p125, %p126
    %p128 = pneg %p127
    // Predicated region
    $region9: #{basic_block_forward.4} parent=5 // pred_check
      _
    $region10: #{basic_block_forward.4} parent=5 // pred_check_branch
      %130 = sbr.rel (%p127) target = $region12
    $region11: #{basic_block_forward.4} parent=5 // pred_region
      %s131 = ssub.s32 %s9, 1
      // Predicated region
      $region13: #{basic_block_forward.4} parent=11 // pred_check
        %p132 = pneg %p68
      $region14: #{basic_block_forward.4} parent=11 // pred_check_branch
        %134 = sbr.rel (%p132) target = $region16
      $region15: #{basic_block_forward.4} parent=11 // pred_region
        _
      $region16: #{basic_block_forward.4} parent=11 // pred_fallthru
        _
      // Predicated region
      $region17: #{basic_block_forward.4} parent=11 // pred_check
        %p135 = pneg %p89
      $region18: #{basic_block_forward.4} parent=11 // pred_check_branch
        %137 = sbr.rel (%p135) target = $region20
      $region19: #{basic_block_forward.4} parent=11 // pred_region
        _
      $region20: #{basic_block_forward.4} parent=11 // pred_fallthru
        _
    $region12: #{basic_block_forward.4} parent=5 // pred_fallthru
      _
    %p138 = scmp.lt.s32.totalorder %s9, 2
    // Predicated region
    $region21: #{basic_block_forward.4} parent=5 // pred_check
      %p139 = pneg %p138
    $region22: #{basic_block_forward.4} parent=5 // pred_check_branch
      %141 = sbr.rel (%p139) target = $region24
    $region23: #{basic_block_forward.4} parent=5 // pred_region
      // Predicated region
      $region25: #{basic_block_forward.4} parent=23 // pred_check
        %p142 = pneg %p41
      $region26: #{basic_block_forward.4} parent=23 // pred_check_branch
        %144 = sbr.rel (%p142) target = $region28
      $region27: #{basic_block_forward.4} parent=23 // pred_region
        %p145 = scmp.lt.s32.totalorder %s16, 1
        %s146 = scalar_select %p145, %s16, 1
        %s147 = smul.addr %s146, 8
        %s148 = smul.addr %s147, 4
        %s149 = scalar_lea.vmem %s0, %s148
      $region28: #{basic_block_forward.4} parent=23 // pred_fallthru
        _
    $region24: #{basic_block_forward.4} parent=5 // pred_fallthru
      _
    %p150 = scmp.le.s32.totalorder 1, %s9
    %p151 = scmp.lt.s32.totalorder %s9, 3
    %p152 = pnand %p150, %p151
    %p153 = pneg %p152
    // Predicated region
    $region29: #{basic_block_forward.4} parent=5 // pred_check
      _
    $region30: #{basic_block_forward.4} parent=5 // pred_check_branch
      %155 = sbr.rel (%p152) target = $region32
    $region31: #{basic_block_forward.4} parent=5 // pred_region
      %s156 = ssub.s32 %s9, 1
      %p157 = scmp.lt.s32.totalorder %s18, 1
      %s158 = scalar_select %p157, %s18, 1
      %s159 = smul.addr %s158, 8
      %s160 = smul.addr %s159, 4
      %s161 = scalar_lea.vmem %s0, %s160
      %p162 = pneg %p47
      %p163 = pneg %p44
      %p164 = pneg %p68
      %p165 = pneg %p65
      %p166 = pneg %p89
      %p167 = pneg %p86
      %p168 = pneg %p117
      %p169 = pneg %p114
      %s170 = smul.u32 8, %s19
      %p171 = scmp.lt.s32.totalorder %s18, 1
      %s172 = scalar_select %p171, %s18, 1
      %p173 = scmp.lt.s32.totalorder %s170, 7
      %s174 = scalar_select %p173, %s170, 7
      %s175 = smul.addr %s172, 8
      %s176 = sadd.s32 %s174, %s175
      %s177 = smul.addr %s176, 4
      %s178 = scalar_lea.vmem %s3, %s177
      %p179 = scmp.lt.s32.totalorder %s18, 1
      %s180 = scalar_select %p179, %s18, 1
      %s181 = smul.addr %s180, 8
      %s182 = smul.addr %s181, 4
      %s183 = scalar_lea.vmem %s0, %s182
      %s184 = smul.u32 8, %s19
      %p185 = scmp.lt.s32.totalorder %s18, 1
      %s186 = scalar_select %p185, %s18, 1
      %p187 = scmp.lt.s32.totalorder %s184, 7
      %s188 = scalar_select %p187, %s184, 7
      %s189 = smul.addr %s186, 8
      %s190 = sadd.s32 %s188, %s189
      %s191 = smul.addr %s190, 4
      %s192 = scalar_lea.vmem %s3, %s191
      %s193 = smul.u32 8, %s19
      %v195 = vld [vmem:[%s183] sm:$0xf]
      %v196 = vld [vmem:[%s183 + $0x4] sm:$0xf]
      %v197 = vld [vmem:[%s183 + $0x8] sm:$0xf]
      %v198 = vld [vmem:[%s183 + $0xc] sm:$0xf]
      %v199 = vld [vmem:[%s183 + $0x10] sm:$0xf]
      %v200 = vld [vmem:[%s183 + $0x14] sm:$0xf]
      %v201 = vld [vmem:[%s183 + $0x18] sm:$0xf]
      %v202 = vld [vmem:[%s183 + $0x1c] sm:$0xf]
      %v203 = vld [vmem:[%s1] sm:$0x3]
      %v204 = vld [vmem:[%s2] sm:$0x1]
      %v206 = vlaneseq
      %v207 = vshrl.u32 %v206, 7
      %v208 = vsub.s32 0, %v207
      %v209 = vrot.slane %v204, %v208
      %v219 = vunpack.c.l.b16 %v195
      %v220 = vunpack.c.l.b16 %v196
      %v221 = vunpack.c.l.b16 %v197
      %v222 = vunpack.c.l.b16 %v198
      %v223 = vunpack.c.l.b16 %v199
      %v224 = vunpack.c.l.b16 %v200
      %v225 = vunpack.c.l.b16 %v201
      %v226 = vunpack.c.l.b16 %v202
      %v227 = vpack.c.b16 %v220, %v219
      %v228 = vpack.c.b16 %v222, %v221
      %v229 = vpack.c.b16 %v224, %v223
      %v230 = vpack.c.b16 %v226, %v225
      %vm231 = vcmask 31744
      %v233 = vsel %vm231, %v227, 0
      %v236 = vsel %vm231, %v228, 0
      %v239 = vsel %vm231, %v229, 0
      %v242 = vsel %vm231, %v230, 0
      %vm244 = vcmask 1041408
      %v246 = vsel %vm244, %v203, 0
      %248 = vmatprep.subr.bf16.mxu0 0
      %249 = vmatpush1.bf16.msra.mxu0 %v246
      %250 = vmatprep.subr.bf16.mxu0 0
      %251 = vmatpush1.bf16.msra.mxu0 0
      %252 = vmatprep.subr.bf16.mxu0 0
      %253 = vmatpush1.bf16.msra.mxu0 0
      %254 = vmatprep.subr.bf16.mxu0 0
      %255 = vmatpush1.bf16.msra.mxu0 0
      %256 = vmatprep.subr.bf16.mxu0 0
      %257 = vmatpush1.bf16.msra.mxu0 0
      %258 = vmatprep.subr.bf16.mxu0 0
      %259 = vmatpush1.bf16.msra.mxu0 0
      %260 = vmatprep.subr.bf16.mxu0 0
      %261 = vmatpush1.bf16.msra.mxu0 0
      %262 = vmatprep.subr.bf16.mxu0 0
      %263 = vmatpush1.bf16.msra.mxu0 0
      %264 = vmatprep.subr.bf16.mxu0 0
      %265 = vmatpush1.bf16.msra.mxu0 0
      %266 = vmatprep.subr.bf16.mxu0 0
      %267 = vmatpush1.bf16.msra.mxu0 0
      %268 = vmatprep.subr.bf16.mxu0 0
      %269 = vmatpush1.bf16.msra.mxu0 0
      %270 = vmatprep.subr.bf16.mxu0 0
      %271 = vmatpush1.bf16.msra.mxu0 0
      %272 = vmatprep.subr.bf16.mxu0 0
      %273 = vmatpush1.bf16.msra.mxu0 0
      %274 = vmatprep.subr.bf16.mxu0 0
      %275 = vmatpush1.bf16.msra.mxu0 0
      %276 = vmatprep.subr.bf16.mxu0 0
      %277 = vmatpush1.bf16.msra.mxu0 0
      %278 = vmatprep.subr.bf16.mxu0 0
      %279 = vmatpush1.bf16.msra.mxu0 0
      %280 = vmatprep.mubr.bf16.mxu0 0
      %281 = vmatmul.mubr.bf16.gmra.mrb[0].mxu0 %v233
      %v282 = vpop.f32.mrb[0].mxu0
      %v283 = vadd.f32 %v209, %v282
      %v284 = vpop.f32.mrb[0].mxu0
      %v285 = vpop.f32.mrb[0].mxu0
      %v286 = vadd.f32 %v209, %v285
      %v287 = vpop.f32.mrb[0].mxu0
      %288 = vmatprep.mubr.bf16.mxu0 0
      %289 = vmatmul.mubr.bf16.gmra.mrb[0].mxu0 %v236
      %v290 = vpop.f32.mrb[0].mxu0
      %v291 = vadd.f32 %v209, %v290
      %v292 = vpop.f32.mrb[0].mxu0
      %v293 = vpop.f32.mrb[0].mxu0
      %v294 = vadd.f32 %v209, %v293
      %v295 = vpop.f32.mrb[0].mxu0
      %296 = vmatprep.mubr.bf16.mxu0 0
      %297 = vmatmul.mubr.bf16.gmra.mrb[0].mxu0 %v239
      %v298 = vpop.f32.mrb[0].mxu0
      %v299 = vadd.f32 %v209, %v298
      %v300 = vpop.f32.mrb[0].mxu0
      %v301 = vpop.f32.mrb[0].mxu0
      %v302 = vadd.f32 %v209, %v301
      %v303 = vpop.f32.mrb[0].mxu0
      %304 = vmatprep.mubr.bf16.mxu0 0
      %305 = vmatmul.mubr.bf16.gmra.mrb[0].mxu0 %v242
      %v306 = vpop.f32.mrb[0].mxu0
      %v307 = vadd.f32 %v209, %v306
      %v308 = vpop.f32.mrb[0].mxu0
      %v309 = vpop.f32.mrb[0].mxu0
      %v310 = vadd.f32 %v209, %v309
      %v311 = vpop.f32.mrb[0].mxu0
      %312 = vdwg.mxu0
      %v313 = vpack.c.bf16 %v286, %v283
      %v314 = vpack.c.bf16 %v294, %v291
      %v315 = vpack.c.bf16 %v302, %v299
      %v316 = vpack.c.bf16 %v310, %v307
      %v321 = vunpack.c.l.b16 %v313
      %v322 = vunpack.c.h.b16 %v313
      %v323 = vunpack.c.l.b16 %v314
      %v324 = vunpack.c.h.b16 %v314
      %v325 = vunpack.c.l.b16 %v315
      %v326 = vunpack.c.h.b16 %v315
      %v327 = vunpack.c.l.b16 %v316
      %v328 = vunpack.c.h.b16 %v316
      %v329 = vpack.c.b16 %v321, %v321
      %v330 = vpack.c.b16 %v322, %v322
      %v331 = vpack.c.b16 %v323, %v323
      %v332 = vpack.c.b16 %v324, %v324
      %v333 = vpack.c.b16 %v325, %v325
      %v334 = vpack.c.b16 %v326, %v326
      %v335 = vpack.c.b16 %v327, %v327
      %v336 = vpack.c.b16 %v328, %v328
      %345 = vst [vmem:[%s192] sm:$0xf] %v329
      %346 = vst [vmem:[%s192 + $0x4] sm:$0xf] %v330
      %347 = vst [vmem:[%s192 + $0x8] sm:$0xf] %v331
      %348 = vst [vmem:[%s192 + $0xc] sm:$0xf] %v332
      %349 = vst [vmem:[%s192 + $0x10] sm:$0xf] %v333
      %350 = vst [vmem:[%s192 + $0x14] sm:$0xf] %v334
      %351 = vst [vmem:[%s192 + $0x18] sm:$0xf] %v335
      %352 = vst [vmem:[%s192 + $0x1c] sm:$0xf] %v336
      %s353 = smul.u32 8, %s19
      %p354 = scmp.lt.s32.totalorder %s18, 1
      %s355 = scalar_select %p354, %s18, 1
      %p356 = scmp.lt.s32.totalorder %s353, 7
      %s357 = scalar_select %p356, %s353, 7
      %s358 = smul.addr %s355, 8
      %s359 = sadd.s32 %s357, %s358
      %s360 = smul.addr %s359, 4
      %s361 = scalar_lea.vmem %s3, %s360
      // Predicated region
      $region33: #{basic_block_forward.4} parent=31 // pred_check
        %p362 = pneg %p114
      $region34: #{basic_block_forward.4} parent=31 // pred_check_branch
        %364 = sbr.rel (%p362) target = $region36
      $region35: #{basic_block_forward.4} parent=31 // pred_region
        %s365 = smul.u32 8, %s19
      $region36: #{basic_block_forward.4} parent=31 // pred_fallthru
        _
    $region32: #{basic_block_forward.4} parent=5 // pred_fallthru
      _
    %p366 = scmp.le.s32.totalorder 2, %s9
    // Predicated region
    $region37: #{basic_block_forward.4} parent=5 // pred_check
      %p367 = pneg %p366
    $region38: #{basic_block_forward.4} parent=5 // pred_check_branch
      %369 = sbr.rel (%p367) target = $region40
    $region39: #{basic_block_forward.4} parent=5 // pred_region
      %s370 = ssub.s32 %s9, 2
      // Predicated region
      $region41: #{basic_block_forward.4} parent=39 // pred_check
        %p371 = pneg %p120
      $region42: #{basic_block_forward.4} parent=39 // pred_check_branch
        %373 = sbr.rel (%p371) target = $region44
      $region43: #{basic_block_forward.4} parent=39 // pred_region
        %s374 = smul.u32 8, %s21
        %p375 = scmp.lt.s32.totalorder %s20, 1
        %s376 = scalar_select %p375, %s20, 1
        %p377 = scmp.lt.s32.totalorder %s374, 7
        %s378 = scalar_select %p377, %s374, 7
        %s379 = smul.addr %s376, 8
        %s380 = sadd.s32 %s378, %s379
        %s381 = smul.addr %s380, 4
        %s382 = scalar_lea.vmem %s3, %s381
      $region44: #{basic_block_forward.4} parent=39 // pred_fallthru
        _
    $region40: #{basic_block_forward.4} parent=5 // pred_fallthru
      _
  $region6: #{basic_block_forward.4} parent=0 // loop_footer
    %s13 = sadd.s32 1, %s9
  $region7: #{basic_block_forward.4} parent=0 // loop_footer_branch
    %8 = sbr.rel target = $region3
  $region8: #{basic_block_forward.4} parent=0 // loop_exit
    _

// kernel: basic_block_forward.3
$region0: #{basic_block_forward.3}
  #allocation0 [shape = 'u32[]', space=smem, size = 0x4, offset = 0x4, fixed_abs, tag = 'smem constant byte address 0x4 - core index']
  #allocation1 [shape = 'u32[144,128]{1,0:T(1,128)}', space=vmem, size = 0x12000, scoped, tag = 'internal scratch']
  %s0 = inlined_call_operand.vmem [shape: bf16[2,4,96,4], index: 0, kind: input, shape index: {}]
  %s1 = inlined_call_operand.vmem [shape: bf16[9,4,128], index: 1, kind: input, shape index: {}]
  %s2 = inlined_call_operand.vmem [shape: f32[1,128], index: 2, kind: input, shape index: {}]
  %s3 = inlined_call_operand.vmem [shape: bf16[2,80,128], index: 3, kind: output, shape index: {}]
  %s4 = sld [smem:[#allocation0]]
  $region45: #{basic_block_forward.3} parent=0
    _
  %s6 = ssub.s32 1, %s4
  %s7 = scalar_select 0, %s6, %s4
  loop: start=0, step=1, limit=4
  $region2: #{basic_block_forward.3} parent=0 // loop_pre_header
    _
  $region3: #{basic_block_forward.3} parent=0 // loop_header
    %s9 = sphi 0, %s13
    %p10 = scmp.ge.s32.totalorder %s9, 4
    %s16 = sphi 0, %s28
    %s17 = sphi 0, %s24
    %s18 = sphi 0, %s16
    %s19 = sphi 0, %s17
    %s20 = sphi 0, %s18
    %s21 = sphi 0, %s19
    %s31 = sphi 0, %s33
    %s34 = sphi 0, %s31
    %s35 = sphi 0, %s34
    %s51 = sphi 0, %s35
    %s55 = sphi 0, %s55
    %s57 = sphi 0, %s55
    %s58 = sphi 0, %s57
    %s72 = sphi 0, %s58
    %s76 = sphi 0, %s76
    %s78 = sphi 0, %s76
    %s79 = sphi 0, %s78
    %s93 = sphi 0, %s79
    %s101 = sphi 0, %s103
    %s104 = sphi 0, %s101
    %s105 = sphi 0, %s104
    %s121 = sphi 0, %s105
  $region4: #{basic_block_forward.3} parent=0 // loop_header_branch
    %12 = sbr.rel (%p10) target = $region8
  $region5: #{basic_block_forward.3} parent=0 // loop_body
    %s14 = ssub.s32 %s9, 1
    %s15 = ssub.s32 %s9, 2
    %s22 = sadd.s32 1, %s17
    %p23 = scmp.ge.s32.totalorder %s22, 1
    %s24 = scalar_select %p23, 0, %s22
    %s25 = sadd.s32 1, %s16
    %s26 = scalar_select %p23, %s25, %s16
    %p27 = scmp.ge.s32.totalorder %s26, 2
    %s28 = scalar_select %p27, 0, %s26
    %s29 = ssub.s32 %s16, %s28
    %p30 = scmp.eq.s32.totalorder %s29, 0
    %s32 = sadd.s32 %s31, 1
    %s33 = scalar_select %p30, %s31, %s32
    %p36 = pneg %p30
    %p37 = scmp.eq.s32.totalorder %s9, 1
    %p38 = por %p36, %p37
    %p39 = scmp.ne.s32.totalorder %s31, %s34
    %p40 = scmp.eq.s32.totalorder %s9, 0
    %p41 = por %p39, %p40
    %p42 = scmp.ne.s32.totalorder %s31, %s34
    %p43 = scmp.eq.s32.totalorder %s14, 1
    %p44 = por %p42, %p43
    %p45 = scmp.ne.s32.totalorder %s34, %s35
    %p46 = scmp.eq.s32.totalorder %s14, 0
    %p47 = por %p45, %p46
    %p48 = scmp.ne.s32.totalorder %s34, %s35
    %p49 = scmp.eq.s32.totalorder %s15, 1
    %p50 = por %p48, %p49
    %p52 = scmp.ne.s32.totalorder %s35, %s51
    %p53 = scmp.eq.s32.totalorder %s15, 0
    %p54 = por %p52, %p53
    %s56 = sadd.s32 %s55, 1
    %p59 = scmp.eq.s32.totalorder %s9, 1
    %p60 = scmp.ne.s32.totalorder %s55, %s57
    %p61 = scmp.eq.s32.totalorder %s9, 0
    %p62 = por %p60, %p61
    %p63 = scmp.ne.s32.totalorder %s55, %s57
    %p64 = scmp.eq.s32.totalorder %s14, 1
    %p65 = por %p63, %p64
    %p66 = scmp.ne.s32.totalorder %s57, %s58
    %p67 = scmp.eq.s32.totalorder %s14, 0
    %p68 = por %p66, %p67
    %p69 = scmp.ne.s32.totalorder %s57, %s58
    %p70 = scmp.eq.s32.totalorder %s15, 1
    %p71 = por %p69, %p70
    %p73 = scmp.ne.s32.totalorder %s58, %s72
    %p74 = scmp.eq.s32.totalorder %s15, 0
    %p75 = por %p73, %p74
    %s77 = sadd.s32 %s76, 1
    %p80 = scmp.eq.s32.totalorder %s9, 1
    %p81 = scmp.ne.s32.totalorder %s76, %s78
    %p82 = scmp.eq.s32.totalorder %s9, 0
    %p83 = por %p81, %p82
    %p84 = scmp.ne.s32.totalorder %s76, %s78
    %p85 = scmp.eq.s32.totalorder %s14, 1
    %p86 = por %p84, %p85
    %p87 = scmp.ne.s32.totalorder %s78, %s79
    %p88 = scmp.eq.s32.totalorder %s14, 0
    %p89 = por %p87, %p88
    %p90 = scmp.ne.s32.totalorder %s78, %s79
    %p91 = scmp.eq.s32.totalorder %s15, 1
    %p92 = por %p90, %p91
    %p94 = scmp.ne.s32.totalorder %s79, %s93
    %p95 = scmp.eq.s32.totalorder %s15, 0
    %p96 = por %p94, %p95
    %s97 = ssub.s32 %s16, %s28
    %s98 = ssub.s32 %s17, %s24
    %s99 = sor.u32 %s97, %s98
    %p100 = scmp.eq.s32.totalorder %s99, 0
    %s102 = sadd.s32 %s101, 1
    %s103 = scalar_select %p100, %s101, %s102
    %p106 = pneg %p100
    %p107 = scmp.eq.s32.totalorder %s9, 1
    %p108 = por %p106, %p107
    %p109 = scmp.ne.s32.totalorder %s101, %s104
    %p110 = scmp.eq.s32.totalorder %s9, 0
    %p111 = por %p109, %p110
    %p112 = scmp.ne.s32.totalorder %s101, %s104
    %p113 = scmp.eq.s32.totalorder %s14, 1
    %p114 = por %p112, %p113
    %p115 = scmp.ne.s32.totalorder %s104, %s105
    %p116 = scmp.eq.s32.totalorder %s14, 0
    %p117 = por %p115, %p116
    %p118 = scmp.ne.s32.totalorder %s104, %s105
    %p119 = scmp.eq.s32.totalorder %s15, 1
    %p120 = por %p118, %p119
    %p122 = scmp.ne.s32.totalorder %s105, %s121
    %p123 = scmp.eq.s32.totalorder %s15, 0
    %p124 = por %p122, %p123
    %p125 = scmp.le.s32.totalorder 1, %s9
    %p126 = scmp.lt.s32.totalorder %s9, 3
    %p127 = pnand %p125, %p126
    %p128 = pneg %p127
    // Predicated region
    $region9: #{basic_block_forward.3} parent=5 // pred_check
      _
    $region10: #{basic_block_forward.3} parent=5 // pred_check_branch
      %130 = sbr.rel (%p127) target = $region12
    $region11: #{basic_block_forward.3} parent=5 // pred_region
      %s131 = ssub.s32 %s9, 1
      // Predicated region
      $region13: #{basic_block_forward.3} parent=11 // pred_check
        %p132 = pneg %p68
      $region14: #{basic_block_forward.3} parent=11 // pred_check_branch
        %134 = sbr.rel (%p132) target = $region16
      $region15: #{basic_block_forward.3} parent=11 // pred_region
        _
      $region16: #{basic_block_forward.3} parent=11 // pred_fallthru
        _
      // Predicated region
      $region17: #{basic_block_forward.3} parent=11 // pred_check
        %p135 = pneg %p89
      $region18: #{basic_block_forward.3} parent=11 // pred_check_branch
        %137 = sbr.rel (%p135) target = $region20
      $region19: #{basic_block_forward.3} parent=11 // pred_region
        _
      $region20: #{basic_block_forward.3} parent=11 // pred_fallthru
        _
    $region12: #{basic_block_forward.3} parent=5 // pred_fallthru
      _
    %p138 = scmp.lt.s32.totalorder %s9, 2
    // Predicated region
    $region21: #{basic_block_forward.3} parent=5 // pred_check
      %p139 = pneg %p138
    $region22: #{basic_block_forward.3} parent=5 // pred_check_branch
      %141 = sbr.rel (%p139) target = $region24
    $region23: #{basic_block_forward.3} parent=5 // pred_region
      // Predicated region
      $region25: #{basic_block_forward.3} parent=23 // pred_check
        %p142 = pneg %p41
      $region26: #{basic_block_forward.3} parent=23 // pred_check_branch
        %144 = sbr.rel (%p142) target = $region28
      $region27: #{basic_block_forward.3} parent=23 // pred_region
        %p145 = scmp.lt.s32.totalorder %s16, 1
        %s146 = scalar_select %p145, %s16, 1
        %s147 = smul.addr %s146, 48
        %s148 = smul.addr %s147, 4
        %s149 = scalar_lea.vmem %s0, %s148
      $region28: #{basic_block_forward.3} parent=23 // pred_fallthru
        _
    $region24: #{basic_block_forward.3} parent=5 // pred_fallthru
      _
    %p150 = scmp.le.s32.totalorder 1, %s9
    %p151 = scmp.lt.s32.totalorder %s9, 3
    %p152 = pnand %p150, %p151
    %p153 = pneg %p152
    // Predicated region
    $region29: #{basic_block_forward.3} parent=5 // pred_check
      _
    $region30: #{basic_block_forward.3} parent=5 // pred_check_branch
      %155 = sbr.rel (%p152) target = $region32
    $region31: #{basic_block_forward.3} parent=5 // pred_region
      %s156 = ssub.s32 %s9, 1
      %p157 = scmp.lt.s32.totalorder %s18, 1
      %s158 = scalar_select %p157, %s18, 1
      %s159 = smul.addr %s158, 48
      %s160 = smul.addr %s159, 4
      %s161 = scalar_lea.vmem %s0, %s160
      %p162 = pneg %p47
      %p163 = pneg %p44
      %p164 = pneg %p68
      %p165 = pneg %p65
      %p166 = pneg %p89
      %p167 = pneg %p86
      %p168 = pneg %p117
      %p169 = pneg %p114
      %s170 = smul.u32 10, %s19
      %p171 = scmp.lt.s32.totalorder %s18, 1
      %s172 = scalar_select %p171, %s18, 1
      %p173 = scmp.lt.s32.totalorder %s170, 9
      %s174 = scalar_select %p173, %s170, 9
      %s175 = smul.addr %s172, 10
      %s176 = sadd.s32 %s174, %s175
      %s177 = smul.addr %s176, 4
      %s178 = scalar_lea.vmem %s3, %s177
      %p179 = scmp.lt.s32.totalorder %s18, 1
      %s180 = scalar_select %p179, %s18, 1
      %s181 = smul.addr %s180, 48
      %s182 = smul.addr %s181, 4
      %s183 = scalar_lea.vmem %s0, %s182
      %s184 = smul.u32 10, %s19
      %p185 = scmp.lt.s32.totalorder %s18, 1
      %s186 = scalar_select %p185, %s18, 1
      %p187 = scmp.lt.s32.totalorder %s184, 9
      %s188 = scalar_select %p187, %s184, 9
      %s189 = smul.addr %s186, 10
      %s190 = sadd.s32 %s188, %s189
      %s191 = smul.addr %s190, 4
      %s192 = scalar_lea.vmem %s3, %s191
      %s193 = smul.u32 10, %s19
      %v195 = vld [vmem:[%s183] sm:$0xf]
      %v196 = vld [vmem:[%s183 + $0x4] sm:$0xf]
      %v197 = vld [vmem:[%s183 + $0x8] sm:$0xf]
      %v198 = vld [vmem:[%s183 + $0xc] sm:$0xf]
      %v199 = vld [vmem:[%s183 + $0x10] sm:$0xf]
      %v200 = vld [vmem:[%s183 + $0x14] sm:$0xf]
      %v201 = vld [vmem:[%s183 + $0x18] sm:$0xf]
      %v202 = vld [vmem:[%s183 + $0x1c] sm:$0xf]
      %v203 = vld [vmem:[%s183 + $0x20] sm:$0xf]
      %v204 = vld [vmem:[%s183 + $0x24] sm:$0xf]
      %v205 = vld [vmem:[%s1] sm:$0x3]
      %s206 = scalar_lea.vmem %s183, 48
      %v207 = vld [vmem:[%s206] sm:$0xf]
      %v208 = vld [vmem:[%s206 + $0x4] sm:$0xf]
      %v209 = vld [vmem:[%s206 + $0x8] sm:$0xf]
      %v210 = vld [vmem:[%s206 + $0xc] sm:$0xf]
      %v211 = vld [vmem:[%s206 + $0x10] sm:$0xf]
      %v212 = vld [vmem:[%s206 + $0x14] sm:$0xf]
      %v213 = vld [vmem:[%s206 + $0x18] sm:$0xf]
      %v214 = vld [vmem:[%s206 + $0x1c] sm:$0xf]
      %v215 = vld [vmem:[%s206 + $0x20] sm:$0xf]
      %v216 = vld [vmem:[%s206 + $0x24] sm:$0xf]
      %s217 = scalar_lea.vmem %s1, 2
      %v218 = vld [vmem:[%s217] sm:$0x3]
      %v229 = vunpack.c.l.b16 %v207
      %v230 = vunpack.c.l.b16 %v208
      %v231 = vunpack.c.l.b16 %v209
      %v232 = vunpack.c.l.b16 %v210
      %v233 = vunpack.c.l.b16 %v211
      %v234 = vunpack.c.l.b16 %v212
      %v235 = vunpack.c.l.b16 %v213
      %v236 = vunpack.c.l.b16 %v214
      %v237 = vunpack.c.l.b16 %v215
      %v238 = vunpack.c.l.b16 %v216
      %v239 = vpack.c.b16 %v230, %v229
      %v240 = vpack.c.b16 %v232, %v231
      %v241 = vpack.c.b16 %v234, %v233
      %v242 = vpack.c.b16 %v236, %v235
      %v243 = vpack.c.b16 %v238, %v237
      %vm244 = vcmask 31744
      %v246 = vsel %vm244, %v239, 0
      %v249 = vsel %vm244, %v240, 0
      %v252 = vsel %vm244, %v241, 0
      %v255 = vsel %vm244, %v242, 0
      %v258 = vsel %vm244, %v243, 0
      %vm260 = vcmask 1041408
      %v262 = vsel %vm260, %v218, 0
      %264 = vmatprep.subr.bf16.mxu0 0
      %265 = vmatpush1.bf16.msra.mxu0 %v262
      %266 = vmatprep.subr.bf16.mxu0 0
      %267 = vmatpush1.bf16.msra.mxu0 0
      %268 = vmatprep.subr.bf16.mxu0 0
      %269 = vmatpush1.bf16.msra.mxu0 0
      %270 = vmatprep.subr.bf16.mxu0 0
      %271 = vmatpush1.bf16.msra.mxu0 0
      %272 = vmatprep.subr.bf16.mxu0 0
      %273 = vmatpush1.bf16.msra.mxu0 0
      %274 = vmatprep.subr.bf16.mxu0 0
      %275 = vmatpush1.bf16.msra.mxu0 0
      %276 = vmatprep.subr.bf16.mxu0 0
      %277 = vmatpush1.bf16.msra.mxu0 0
      %278 = vmatprep.subr.bf16.mxu0 0
      %279 = vmatpush1.bf16.msra.mxu0 0
      %280 = vmatprep.subr.bf16.mxu0 0
      %281 = vmatpush1.bf16.msra.mxu0 0
      %282 = vmatprep.subr.bf16.mxu0 0
      %283 = vmatpush1.bf16.msra.mxu0 0
      %284 = vmatprep.subr.bf16.mxu0 0
      %285 = vmatpush1.bf16.msra.mxu0 0
      %286 = vmatprep.subr.bf16.mxu0 0
      %287 = vmatpush1.bf16.msra.mxu0 0
      %288 = vmatprep.subr.bf16.mxu0 0
      %289 = vmatpush1.bf16.msra.mxu0 0
      %290 = vmatprep.subr.bf16.mxu0 0
      %291 = vmatpush1.bf16.msra.mxu0 0
      %292 = vmatprep.subr.bf16.mxu0 0
      %293 = vmatpush1.bf16.msra.mxu0 0
      %294 = vmatprep.subr.bf16.mxu0 0
      %295 = vmatpush1.bf16.msra.mxu0 0
      %296 = vmatprep.mubr.bf16.mxu0 0
      %297 = vmatmul.mubr.bf16.gmra.mrb[0].mxu0 %v246
      %v298 = vpop.f32.mrb[0].mxu0
      %v299 = vadd.f32 0.0, %v298
      %v300 = vpop.f32.mrb[0].mxu0
      %v301 = vpop.f32.mrb[0].mxu0
      %v302 = vadd.f32 0.0, %v301
      %v303 = vpop.f32.mrb[0].mxu0
      %304 = vmatprep.mubr.bf16.mxu0 0
      %305 = vmatmul.mubr.bf16.gmra.mrb[0].mxu0 %v249
      %v306 = vpop.f32.mrb[0].mxu0
      %v307 = vadd.f32 0.0, %v306
      %v308 = vpop.f32.mrb[0].mxu0
      %v309 = vpop.f32.mrb[0].mxu0
      %v310 = vadd.f32 0.0, %v309
      %v311 = vpop.f32.mrb[0].mxu0
      %312 = vmatprep.mubr.bf16.mxu0 0
      %313 = vmatmul.mubr.bf16.gmra.mrb[0].mxu0 %v252
      %v314 = vpop.f32.mrb[0].mxu0
      %v315 = vadd.f32 0.0, %v314
      %v316 = vpop.f32.mrb[0].mxu0
      %v317 = vpop.f32.mrb[0].mxu0
      %v318 = vadd.f32 0.0, %v317
      %v319 = vpop.f32.mrb[0].mxu0
      %320 = vmatprep.mubr.bf16.mxu0 0
      %321 = vmatmul.mubr.bf16.gmra.mrb[0].mxu0 %v255
      %v322 = vpop.f32.mrb[0].mxu0
      %v323 = vadd.f32 0.0, %v322
      %v324 = vpop.f32.mrb[0].mxu0
      %v325 = vpop.f32.mrb[0].mxu0
      %v326 = vadd.f32 0.0, %v325
      %v327 = vpop.f32.mrb[0].mxu0
      %328 = vmatprep.mubr.bf16.mxu0 0
      %329 = vmatmul.mubr.bf16.gmra.mrb[0].mxu0 %v258
      %v330 = vpop.f32.mrb[0].mxu0
      %v331 = vadd.f32 0.0, %v330
      %v332 = vpop.f32.mrb[0].mxu0
      %v333 = vpop.f32.mrb[0].mxu0
      %v334 = vadd.f32 0.0, %v333
      %v335 = vpop.f32.mrb[0].mxu0
      %336 = vdwg.mxu0
      %v347 = vunpack.c.l.b16 %v195
      %v348 = vunpack.c.l.b16 %v196
      %v349 = vunpack.c.l.b16 %v197
      %v350 = vunpack.c.l.b16 %v198
      %v351 = vunpack.c.l.b16 %v199
      %v352 = vunpack.c.l.b16 %v200
      %v353 = vunpack.c.l.b16 %v201
      %v354 = vunpack.c.l.b16 %v202
      %v355 = vunpack.c.l.b16 %v203
      %v356 = vunpack.c.l.b16 %v204
      %v357 = vpack.c.b16 %v348, %v347
      %v358 = vpack.c.b16 %v350, %v349
      %v359 = vpack.c.b16 %v352, %v351
      %v360 = vpack.c.b16 %v354, %v353
      %v361 = vpack.c.b16 %v356, %v355
      %v363 = vsel %vm244, %v357, 0
      %v366 = vsel %vm244, %v358, 0
      %v369 = vsel %vm244, %v359, 0
      %v372 = vsel %vm244, %v360, 0
      %v375 = vsel %vm244, %v361, 0
      %v378 = vsel %vm260, %v205, 0
      %380 = vmatprep.subr.bf16.mxu0 0
      %381 = vmatpush1.bf16.msra.mxu0 %v378
      %382 = vmatprep.subr.bf16.mxu0 0
      %383 = vmatpush1.bf16.msra.mxu0 0
      %384 = vmatprep.subr.bf16.mxu0 0
      %385 = vmatpush1.bf16.msra.mxu0 0
      %386 = vmatprep.subr.bf16.mxu0 0
      %387 = vmatpush1.bf16.msra.mxu0 0
      %388 = vmatprep.subr.bf16.mxu0 0
      %389 = vmatpush1.bf16.msra.mxu0 0
      %390 = vmatprep.subr.bf16.mxu0 0
      %391 = vmatpush1.bf16.msra.mxu0 0
      %392 = vmatprep.subr.bf16.mxu0 0
      %393 = vmatpush1.bf16.msra.mxu0 0
      %394 = vmatprep.subr.bf16.mxu0 0
      %395 = vmatpush1.bf16.msra.mxu0 0
      %396 = vmatprep.subr.bf16.mxu0 0
      %397 = vmatpush1.bf16.msra.mxu0 0
      %398 = vmatprep.subr.bf16.mxu0 0
      %399 = vmatpush1.bf16.msra.mxu0 0
      %400 = vmatprep.subr.bf16.mxu0 0
      %401 = vmatpush1.bf16.msra.mxu0 0
      %402 = vmatprep.subr.bf16.mxu0 0
      %403 = vmatpush1.bf16.msra.mxu0 0
      %404 = vmatprep.subr.bf16.mxu0 0
      %405 = vmatpush1.bf16.msra.mxu0 0
      %406 = vmatprep.subr.bf16.mxu0 0
      %407 = vmatpush1.bf16.msra.mxu0 0
      %408 = vmatprep.subr.bf16.mxu0 0
      %409 = vmatpush1.bf16.msra.mxu0 0
      %410 = vmatprep.subr.bf16.mxu0 0
      %411 = vmatpush1.bf16.msra.mxu0 0
      %412 = vmatprep.mubr.bf16.mxu0 0
      %413 = vmatmul.mubr.bf16.gmra.mrb[0].mxu0 %v363
      %v414 = vpop.f32.mrb[0].mxu0
      %v415 = vadd.f32 %v299, %v414
      %v416 = vpop.f32.mrb[0].mxu0
      %v417 = vpop.f32.mrb[0].mxu0
      %v418 = vadd.f32 %v302, %v417
      %v419 = vpop.f32.mrb[0].mxu0
      %420 = vmatprep.mubr.bf16.mxu0 0
      %421 = vmatmul.mubr.bf16.gmra.mrb[0].mxu0 %v366
      %v422 = vpop.f32.mrb[0].mxu0
      %v423 = vadd.f32 %v307, %v422
      %v424 = vpop.f32.mrb[0].mxu0
      %v425 = vpop.f32.mrb[0].mxu0
      %v426 = vadd.f32 %v310, %v425
      %v427 = vpop.f32.mrb[0].mxu0
      %428 = vmatprep.mubr.bf16.mxu0 0
      %429 = vmatmul.mubr.bf16.gmra.mrb[0].mxu0 %v369
      %v430 = vpop.f32.mrb[0].mxu0
      %v431 = vadd.f32 %v315, %v430
      %v432 = vpop.f32.mrb[0].mxu0
      %v433 = vpop.f32.mrb[0].mxu0
      %v434 = vadd.f32 %v318, %v433
      %v435 = vpop.f32.mrb[0].mxu0
      %436 = vmatprep.mubr.bf16.mxu0 0
      %437 = vmatmul.mubr.bf16.gmra.mrb[0].mxu0 %v372
      %v438 = vpop.f32.mrb[0].mxu0
      %v439 = vadd.f32 %v323, %v438
      %v440 = vpop.f32.mrb[0].mxu0
      %v441 = vpop.f32.mrb[0].mxu0
      %v442 = vadd.f32 %v326, %v441
      %v443 = vpop.f32.mrb[0].mxu0
      %444 = vmatprep.mubr.bf16.mxu0 0
      %445 = vmatmul.mubr.bf16.gmra.mrb[0].mxu0 %v375
      %v446 = vpop.f32.mrb[0].mxu0
      %v447 = vadd.f32 %v331, %v446
      %v448 = vpop.f32.mrb[0].mxu0
      %v449 = vpop.f32.mrb[0].mxu0
      %v450 = vadd.f32 %v334, %v449
      %v451 = vpop.f32.mrb[0].mxu0
      %452 = vdwg.mxu0
      %v453 = vld [vmem:[%s183] sm:$0xf]
      %v454 = vld [vmem:[%s183 + $0x4] sm:$0xf]
      %v455 = vld [vmem:[%s183 + $0x8] sm:$0xf]
      %v456 = vld [vmem:[%s183 + $0xc] sm:$0xf]
      %v457 = vld [vmem:[%s183 + $0x10] sm:$0xf]
      %v458 = vld [vmem:[%s183 + $0x14] sm:$0xf]
      %v459 = vld [vmem:[%s183 + $0x18] sm:$0xf]
      %v460 = vld [vmem:[%s183 + $0x1c] sm:$0xf]
      %v461 = vld [vmem:[%s183 + $0x20] sm:$0xf]
      %v462 = vld [vmem:[%s183 + $0x24] sm:$0xf]
      %v463 = vld [vmem:[%s183 + $0x28] sm:$0x1]
      %s464 = scalar_lea.vmem %s1, 4
      %v465 = vld [vmem:[%s464] sm:$0x3]
      %v477 = vunpack.c.l.b16 %v453
      %v478 = vunpack.c.l.b16 %v454
      %v479 = vunpack.c.l.b16 %v455
      %v480 = vunpack.c.l.b16 %v456
      %v481 = vunpack.c.l.b16 %v457
      %v482 = vunpack.c.l.b16 %v458
      %v483 = vunpack.c.l.b16 %v459
      %v484 = vunpack.c.l.b16 %v460
      %v485 = vunpack.c.l.b16 %v461
      %v486 = vunpack.c.l.b16 %v462
      %v487 = vunpack.c.l.b16 %v463
      %v488 = vpack.c.b16 %v478, %v477
      %v489 = vpack.c.b16 %v480, %v479
      %v490 = vpack.c.b16 %v482, %v481
      %v491 = vpack.c.b16 %v484, %v483
      %v492 = vpack.c.b16 %v486, %v485
      %v493 = vpack.c.b16 %v487, %v487
      %vm494 = vsmask.f32 7424
      %v496 = vshrl.u32 %v488, 16
      %v498 = vshll.u32 %v488, 16
      %v500 = vrot.slane %v498, 1
      %v501 = vor.u32 %v496, %v500
      %v503 = vshll.u32 %v489, 16
      %v505 = vrot.slane %v503, 1
      %v506 = vsel %vm494, %v501, %v505
      %v507 = vshrl.u32 %v489, 16
      %v509 = vor.u32 %v507, %v505
      %v511 = vshll.u32 %v490, 16
      %v513 = vrot.slane %v511, 1
      %v514 = vsel %vm494, %v509, %v513
      %v515 = vshrl.u32 %v490, 16
      %v517 = vor.u32 %v515, %v513
      %v519 = vshll.u32 %v491, 16
      %v521 = vrot.slane %v519, 1
      %v522 = vsel %vm494, %v517, %v521
      %v523 = vshrl.u32 %v491, 16
      %v525 = vor.u32 %v523, %v521
      %v527 = vshll.u32 %v492, 16
      %v529 = vrot.slane %v527, 1
      %v530 = vsel %vm494, %v525, %v529
      %v531 = vshrl.u32 %v492, 16
      %v533 = vor.u32 %v531, %v529
      %v535 = vshll.u32 %v493, 16
      %v537 = vrot.slane %v535, 1
      %v538 = vsel %vm494, %v533, %v537
      %v540 = vsel %vm244, %v506, 0
      %v543 = vsel %vm244, %v514, 0
      %v546 = vsel %vm244, %v522, 0
      %v549 = vsel %vm244, %v530, 0
      %v552 = vsel %vm244, %v538, 0
      %v555 = vsel %vm260, %v465, 0
      %557 = vmatprep.subr.bf16.mxu0 0
      %558 = vmatpush1.bf16.msra.mxu0 %v555
      %559 = vmatprep.subr.bf16.mxu0 0
      %560 = vmatpush1.bf16.msra.mxu0 0
      %561 = vmatprep.subr.bf16.mxu0 0
      %562 = vmatpush1.bf16.msra.mxu0 0
      %563 = vmatprep.subr.bf16.mxu0 0
      %564 = vmatpush1.bf16.msra.mxu0 0
      %565 = vmatprep.subr.bf16.mxu0 0
      %566 = vmatpush1.bf16.msra.mxu0 0
      %567 = vmatprep.subr.bf16.mxu0 0
      %568 = vmatpush1.bf16.msra.mxu0 0
      %569 = vmatprep.subr.bf16.mxu0 0
      %570 = vmatpush1.bf16.msra.mxu0 0
      %571 = vmatprep.subr.bf16.mxu0 0
      %572 = vmatpush1.bf16.msra.mxu0 0
      %573 = vmatprep.subr.bf16.mxu0 0
      %574 = vmatpush1.bf16.msra.mxu0 0
      %575 = vmatprep.subr.bf16.mxu0 0
      %576 = vmatpush1.bf16.msra.mxu0 0
      %577 = vmatprep.subr.bf16.mxu0 0
      %578 = vmatpush1.bf16.msra.mxu0 0
      %579 = vmatprep.subr.bf16.mxu0 0
      %580 = vmatpush1.bf16.msra.mxu0 0
      %581 = vmatprep.subr.bf16.mxu0 0
      %582 = vmatpush1.bf16.msra.mxu0 0
      %583 = vmatprep.subr.bf16.mxu0 0
      %584 = vmatpush1.bf16.msra.mxu0 0
      %585 = vmatprep.subr.bf16.mxu0 0
      %586 = vmatpush1.bf16.msra.mxu0 0
      %587 = vmatprep.subr.bf16.mxu0 0
      %588 = vmatpush1.bf16.msra.mxu0 0
      %589 = vmatprep.mubr.bf16.mxu0 0
      %590 = vmatmul.mubr.bf16.gmra.mrb[0].mxu0 %v540
      %v591 = vpop.f32.mrb[0].mxu0
      %v592 = vadd.f32 0.0, %v591
      %v593 = vpop.f32.mrb[0].mxu0
      %v594 = vpop.f32.mrb[0].mxu0
      %v595 = vadd.f32 0.0, %v594
      %v596 = vpop.f32.mrb[0].mxu0
      %597 = vmatprep.mubr.bf16.mxu0 0
      %598 = vmatmul.mubr.bf16.gmra.mrb[0].mxu0 %v543
      %v599 = vpop.f32.mrb[0].mxu0
      %v600 = vadd.f32 0.0, %v599
      %v601 = vpop.f32.mrb[0].mxu0
      %v602 = vpop.f32.mrb[0].mxu0
      %v603 = vadd.f32 0.0, %v602
      %v604 = vpop.f32.mrb[0].mxu0
      %605 = vmatprep.mubr.bf16.mxu0 0
      %606 = vmatmul.mubr.bf16.gmra.mrb[0].mxu0 %v546
      %v607 = vpop.f32.mrb[0].mxu0
      %v608 = vadd.f32 0.0, %v607
      %v609 = vpop.f32.mrb[0].mxu0
      %v610 = vpop.f32.mrb[0].mxu0
      %v611 = vadd.f32 0.0, %v610
      %v612 = vpop.f32.mrb[0].mxu0
      %613 = vmatprep.mubr.bf16.mxu0 0
      %614 = vmatmul.mubr.bf16.gmra.mrb[0].mxu0 %v549
      %v615 = vpop.f32.mrb[0].mxu0
      %v616 = vadd.f32 0.0, %v615
      %v617 = vpop.f32.mrb[0].mxu0
      %v618 = vpop.f32.mrb[0].mxu0
      %v619 = vadd.f32 0.0, %v618
      %v620 = vpop.f32.mrb[0].mxu0
      %621 = vmatprep.mubr.bf16.mxu0 0
      %622 = vmatmul.mubr.bf16.gmra.mrb[0].mxu0 %v552
      %v623 = vpop.f32.mrb[0].mxu0
      %v624 = vadd.f32 0.0, %v623
      %v625 = vpop.f32.mrb[0].mxu0
      %v626 = vpop.f32.mrb[0].mxu0
      %v627 = vadd.f32 0.0, %v626
      %v628 = vpop.f32.mrb[0].mxu0
      %629 = vdwg.mxu0
      %v630 = vadd.f32 %v415, %v592
      %v631 = vadd.f32 %v418, %v595
      %v632 = vadd.f32 %v423, %v600
      %v633 = vadd.f32 %v426, %v603
      %v634 = vadd.f32 %v431, %v608
      %v635 = vadd.f32 %v434, %v611
      %v636 = vadd.f32 %v439, %v616
      %v637 = vadd.f32 %v442, %v619
      %v638 = vadd.f32 %v447, %v624
      %v639 = vadd.f32 %v450, %v627
      %s640 = scalar_lea.vmem %s183, 96
      %v641 = vld [vmem:[%s640] sm:$0xf]
      %v642 = vld [vmem:[%s640 + $0x4] sm:$0xf]
      %v643 = vld [vmem:[%s640 + $0x8] sm:$0xf]
      %v644 = vld [vmem:[%s640 + $0xc] sm:$0xf]
      %v645 = vld [vmem:[%s640 + $0x10] sm:$0xf]
      %v646 = vld [vmem:[%s640 + $0x14] sm:$0xf]
      %v647 = vld [vmem:[%s640 + $0x18] sm:$0xf]
      %v648 = vld [vmem:[%s640 + $0x1c] sm:$0xf]
      %v649 = vld [vmem:[%s640 + $0x20] sm:$0xf]
      %v650 = vld [vmem:[%s640 + $0x24] sm:$0xf]
      %s651 = scalar_lea.vmem %s1, 6
      %v652 = vld [vmem:[%s651] sm:$0x3]
      %v663 = vunpack.c.l.b16 %v641
      %v664 = vunpack.c.l.b16 %v642
      %v665 = vunpack.c.l.b16 %v643
      %v666 = vunpack.c.l.b16 %v644
      %v667 = vunpack.c.l.b16 %v645
      %v668 = vunpack.c.l.b16 %v646
      %v669 = vunpack.c.l.b16 %v647
      %v670 = vunpack.c.l.b16 %v648
      %v671 = vunpack.c.l.b16 %v649
      %v672 = vunpack.c.l.b16 %v650
      %v673 = vpack.c.b16 %v664, %v663
      %v674 = vpack.c.b16 %v666, %v665
      %v675 = vpack.c.b16 %v668, %v667
      %v676 = vpack.c.b16 %v670, %v669
      %v677 = vpack.c.b16 %v672, %v671
      %v679 = vsel %vm244, %v673, 0
      %v682 = vsel %vm244, %v674, 0
      %v685 = vsel %vm244, %v675, 0
      %v688 = vsel %vm244, %v676, 0
      %v691 = vsel %vm244, %v677, 0
      %v694 = vsel %vm260, %v652, 0
      %696 = vmatprep.subr.bf16.mxu0 0
      %697 = vmatpush1.bf16.msra.mxu0 %v694
      %698 = vmatprep.subr.bf16.mxu0 0
      %699 = vmatpush1.bf16.msra.mxu0 0
      %700 = vmatprep.subr.bf16.mxu0 0
      %701 = vmatpush1.bf16.msra.mxu0 0
      %702 = vmatprep.subr.bf16.mxu0 0
      %703 = vmatpush1.bf16.msra.mxu0 0
      %704 = vmatprep.subr.bf16.mxu0 0
      %705 = vmatpush1.bf16.msra.mxu0 0
      %706 = vmatprep.subr.bf16.mxu0 0
      %707 = vmatpush1.bf16.msra.mxu0 0
      %708 = vmatprep.subr.bf16.mxu0 0
      %709 = vmatpush1.bf16.msra.mxu0 0
      %710 = vmatprep.subr.bf16.mxu0 0
      %711 = vmatpush1.bf16.msra.mxu0 0
      %712 = vmatprep.subr.bf16.mxu0 0
      %713 = vmatpush1.bf16.msra.mxu0 0
      %714 = vmatprep.subr.bf16.mxu0 0
      %715 = vmatpush1.bf16.msra.mxu0 0
      %716 = vmatprep.subr.bf16.mxu0 0
      %717 = vmatpush1.bf16.msra.mxu0 0
      %718 = vmatprep.subr.bf16.mxu0 0
      %719 = vmatpush1.bf16.msra.mxu0 0
      %720 = vmatprep.subr.bf16.mxu0 0
      %721 = vmatpush1.bf16.msra.mxu0 0
      %722 = vmatprep.subr.bf16.mxu0 0
      %723 = vmatpush1.bf16.msra.mxu0 0
      %724 = vmatprep.subr.bf16.mxu0 0
      %725 = vmatpush1.bf16.msra.mxu0 0
      %726 = vmatprep.subr.bf16.mxu0 0
      %727 = vmatpush1.bf16.msra.mxu0 0
      %728 = vmatprep.mubr.bf16.mxu0 0
      %729 = vmatmul.mubr.bf16.gmra.mrb[0].mxu0 %v679
      %v730 = vpop.f32.mrb[0].mxu0
      %v731 = vadd.f32 0.0, %v730
      %v732 = vpop.f32.mrb[0].mxu0
      %v733 = vpop.f32.mrb[0].mxu0
      %v734 = vadd.f32 0.0, %v733
      %v735 = vpop.f32.mrb[0].mxu0
      %736 = vmatprep.mubr.bf16.mxu0 0
      %737 = vmatmul.mubr.bf16.gmra.mrb[0].mxu0 %v682
      %v738 = vpop.f32.mrb[0].mxu0
      %v739 = vadd.f32 0.0, %v738
      %v740 = vpop.f32.mrb[0].mxu0
      %v741 = vpop.f32.mrb[0].mxu0
      %v742 = vadd.f32 0.0, %v741
      %v743 = vpop.f32.mrb[0].mxu0
      %744 = vmatprep.mubr.bf16.mxu0 0
      %745 = vmatmul.mubr.bf16.gmra.mrb[0].mxu0 %v685
      %v746 = vpop.f32.mrb[0].mxu0
      %v747 = vadd.f32 0.0, %v746
      %v748 = vpop.f32.mrb[0].mxu0
      %v749 = vpop.f32.mrb[0].mxu0
      %v750 = vadd.f32 0.0, %v749
      %v751 = vpop.f32.mrb[0].mxu0
      %752 = vmatprep.mubr.bf16.mxu0 0
      %753 = vmatmul.mubr.bf16.gmra.mrb[0].mxu0 %v688
      %v754 = vpop.f32.mrb[0].mxu0
      %v755 = vadd.f32 0.0, %v754
      %v756 = vpop.f32.mrb[0].mxu0
      %v757 = vpop.f32.mrb[0].mxu0
      %v758 = vadd.f32 0.0, %v757
      %v759 = vpop.f32.mrb[0].mxu0
      %760 = vmatprep.mubr.bf16.mxu0 0
      %761 = vmatmul.mubr.bf16.gmra.mrb[0].mxu0 %v691
      %v762 = vpop.f32.mrb[0].mxu0
      %v763 = vadd.f32 0.0, %v762
      %v764 = vpop.f32.mrb[0].mxu0
      %v765 = vpop.f32.mrb[0].mxu0
      %v766 = vadd.f32 0.0, %v765
      %v767 = vpop.f32.mrb[0].mxu0
      %768 = vdwg.mxu0
      %v769 = vadd.f32 %v630, %v731
      %v770 = vadd.f32 %v631, %v734
      %v771 = vadd.f32 %v632, %v739
      %v772 = vadd.f32 %v633, %v742
      %v773 = vadd.f32 %v634, %v747
      %v774 = vadd.f32 %v635, %v750
      %v775 = vadd.f32 %v636, %v755
      %v776 = vadd.f32 %v637, %v758
      %v777 = vadd.f32 %v638, %v763
      %v778 = vadd.f32 %v639, %v766
      %s779 = scalar_lea.vmem %s183, 144
      %v780 = vld [vmem:[%s779] sm:$0xf]
      %v781 = vld [vmem:[%s779 + $0x4] sm:$0xf]
      %v782 = vld [vmem:[%s779 + $0x8] sm:$0xf]
      %v783 = vld [vmem:[%s779 + $0xc] sm:$0xf]
      %v784 = vld [vmem:[%s779 + $0x10] sm:$0xf]
      %v785 = vld [vmem:[%s779 + $0x14] sm:$0xf]
      %v786 = vld [vmem:[%s779 + $0x18] sm:$0xf]
      %v787 = vld [vmem:[%s779 + $0x1c] sm:$0xf]
      %v788 = vld [vmem:[%s779 + $0x20] sm:$0xf]
      %v789 = vld [vmem:[%s779 + $0x24] sm:$0xf]
      %s790 = scalar_lea.vmem %s1, 8
      %v791 = vld [vmem:[%s790] sm:$0x3]
      %v802 = vunpack.c.l.b16 %v780
      %v803 = vunpack.c.l.b16 %v781
      %v804 = vunpack.c.l.b16 %v782
      %v805 = vunpack.c.l.b16 %v783
      %v806 = vunpack.c.l.b16 %v784
      %v807 = vunpack.c.l.b16 %v785
      %v808 = vunpack.c.l.b16 %v786
      %v809 = vunpack.c.l.b16 %v787
      %v810 = vunpack.c.l.b16 %v788
      %v811 = vunpack.c.l.b16 %v789
      %v812 = vpack.c.b16 %v803, %v802
      %v813 = vpack.c.b16 %v805, %v804
      %v814 = vpack.c.b16 %v807, %v806
      %v815 = vpack.c.b16 %v809, %v808
      %v816 = vpack.c.b16 %v811, %v810
      %v818 = vsel %vm244, %v812, 0
      %v821 = vsel %vm244, %v813, 0
      %v824 = vsel %vm244, %v814, 0
      %v827 = vsel %vm244, %v815, 0
      %v830 = vsel %vm244, %v816, 0
      %v833 = vsel %vm260, %v791, 0
      %835 = vmatprep.subr.bf16.mxu0 0
      %836 = vmatpush1.bf16.msra.mxu0 %v833
      %837 = vmatprep.subr.bf16.mxu0 0
      %838 = vmatpush1.bf16.msra.mxu0 0
      %839 = vmatprep.subr.bf16.mxu0 0
      %840 = vmatpush1.bf16.msra.mxu0 0
      %841 = vmatprep.subr.bf16.mxu0 0
      %842 = vmatpush1.bf16.msra.mxu0 0
      %843 = vmatprep.subr.bf16.mxu0 0
      %844 = vmatpush1.bf16.msra.mxu0 0
      %845 = vmatprep.subr.bf16.mxu0 0
      %846 = vmatpush1.bf16.msra.mxu0 0
      %847 = vmatprep.subr.bf16.mxu0 0
      %848 = vmatpush1.bf16.msra.mxu0 0
      %849 = vmatprep.subr.bf16.mxu0 0
      %850 = vmatpush1.bf16.msra.mxu0 0
      %851 = vmatprep.subr.bf16.mxu0 0
      %852 = vmatpush1.bf16.msra.mxu0 0
      %853 = vmatprep.subr.bf16.mxu0 0
      %854 = vmatpush1.bf16.msra.mxu0 0
      %855 = vmatprep.subr.bf16.mxu0 0
      %856 = vmatpush1.bf16.msra.mxu0 0
      %857 = vmatprep.subr.bf16.mxu0 0
      %858 = vmatpush1.bf16.msra.mxu0 0
      %859 = vmatprep.subr.bf16.mxu0 0
      %860 = vmatpush1.bf16.msra.mxu0 0
      %861 = vmatprep.subr.bf16.mxu0 0
      %862 = vmatpush1.bf16.msra.mxu0 0
      %863 = vmatprep.subr.bf16.mxu0 0
      %864 = vmatpush1.bf16.msra.mxu0 0
      %865 = vmatprep.subr.bf16.mxu0 0
      %866 = vmatpush1.bf16.msra.mxu0 0
      %867 = vmatprep.mubr.bf16.mxu0 0
      %868 = vmatmul.mubr.bf16.gmra.mrb[0].mxu0 %v818
      %v869 = vpop.f32.mrb[0].mxu0
      %v870 = vadd.f32 0.0, %v869
      %v871 = vpop.f32.mrb[0].mxu0
      %v872 = vpop.f32.mrb[0].mxu0
      %v873 = vadd.f32 0.0, %v872
      %v874 = vpop.f32.mrb[0].mxu0
      %875 = vmatprep.mubr.bf16.mxu0 0
      %876 = vmatmul.mubr.bf16.gmra.mrb[0].mxu0 %v821
      %v877 = vpop.f32.mrb[0].mxu0
      %v878 = vadd.f32 0.0, %v877
      %v879 = vpop.f32.mrb[0].mxu0
      %v880 = vpop.f32.mrb[0].mxu0
      %v881 = vadd.f32 0.0, %v880
      %v882 = vpop.f32.mrb[0].mxu0
      %883 = vmatprep.mubr.bf16.mxu0 0
      %884 = vmatmul.mubr.bf16.gmra.mrb[0].mxu0 %v824
      %v885 = vpop.f32.mrb[0].mxu0
      %v886 = vadd.f32 0.0, %v885
      %v887 = vpop.f32.mrb[0].mxu0
      %v888 = vpop.f32.mrb[0].mxu0
      %v889 = vadd.f32 0.0, %v888
      %v890 = vpop.f32.mrb[0].mxu0
      %891 = vmatprep.mubr.bf16.mxu0 0
      %892 = vmatmul.mubr.bf16.gmra.mrb[0].mxu0 %v827
      %v893 = vpop.f32.mrb[0].mxu0
      %v894 = vadd.f32 0.0, %v893
      %v895 = vpop.f32.mrb[0].mxu0
      %v896 = vpop.f32.mrb[0].mxu0
      %v897 = vadd.f32 0.0, %v896
      %v898 = vpop.f32.mrb[0].mxu0
      %899 = vmatprep.mubr.bf16.mxu0 0
      %900 = vmatmul.mubr.bf16.gmra.mrb[0].mxu0 %v830
      %v901 = vpop.f32.mrb[0].mxu0
      %v902 = vadd.f32 0.0, %v901
      %v903 = vpop.f32.mrb[0].mxu0
      %v904 = vpop.f32.mrb[0].mxu0
      %v905 = vadd.f32 0.0, %v904
      %v906 = vpop.f32.mrb[0].mxu0
      %907 = vdwg.mxu0
      %v908 = vadd.f32 %v769, %v870
      %v909 = vadd.f32 %v770, %v873
      %v910 = vadd.f32 %v771, %v878
      %v911 = vadd.f32 %v772, %v881
      %v912 = vadd.f32 %v773, %v886
      %v913 = vadd.f32 %v774, %v889
      %v914 = vadd.f32 %v775, %v894
      %v915 = vadd.f32 %v776, %v897
      %v916 = vadd.f32 %v777, %v902
      %v917 = vadd.f32 %v778, %v905
      %v918 = vld [vmem:[%s640] sm:$0xf]
      %v919 = vld [vmem:[%s640 + $0x4] sm:$0xf]
      %v920 = vld [vmem:[%s640 + $0x8] sm:$0xf]
      %v921 = vld [vmem:[%s640 + $0xc] sm:$0xf]
      %v922 = vld [vmem:[%s640 + $0x10] sm:$0xf]
      %v923 = vld [vmem:[%s640 + $0x14] sm:$0xf]
      %v924 = vld [vmem:[%s640 + $0x18] sm:$0xf]
      %v925 = vld [vmem:[%s640 + $0x1c] sm:$0xf]
      %v926 = vld [vmem:[%s640 + $0x20] sm:$0xf]
      %v927 = vld [vmem:[%s640 + $0x24] sm:$0xf]
      %v928 = vld [vmem:[%s640 + $0x28] sm:$0x1]
      %s929 = scalar_lea.vmem %s1, 10
      %v930 = vld [vmem:[%s929] sm:$0x3]
      %v942 = vunpack.c.l.b16 %v918
      %v943 = vunpack.c.l.b16 %v919
      %v944 = vunpack.c.l.b16 %v920
      %v945 = vunpack.c.l.b16 %v921
      %v946 = vunpack.c.l.b16 %v922
      %v947 = vunpack.c.l.b16 %v923
      %v948 = vunpack.c.l.b16 %v924
      %v949 = vunpack.c.l.b16 %v925
      %v950 = vunpack.c.l.b16 %v926
      %v951 = vunpack.c.l.b16 %v927
      %v952 = vunpack.c.l.b16 %v928
      %v953 = vpack.c.b16 %v943, %v942
      %v954 = vpack.c.b16 %v945, %v944
      %v955 = vpack.c.b16 %v947, %v946
      %v956 = vpack.c.b16 %v949, %v948
      %v957 = vpack.c.b16 %v951, %v950
      %v958 = vpack.c.b16 %v952, %v952
      %v960 = vshrl.u32 %v953, 16
      %v962 = vshll.u32 %v953, 16
      %v964 = vrot.slane %v962, 1
      %v965 = vor.u32 %v960, %v964
      %v967 = vshll.u32 %v954, 16
      %v969 = vrot.slane %v967, 1
      %v970 = vsel %vm494, %v965, %v969
      %v971 = vshrl.u32 %v954, 16
      %v973 = vor.u32 %v971, %v969
      %v975 = vshll.u32 %v955, 16
      %v977 = vrot.slane %v975, 1
      %v978 = vsel %vm494, %v973, %v977
      %v979 = vshrl.u32 %v955, 16
      %v981 = vor.u32 %v979, %v977
      %v983 = vshll.u32 %v956, 16
      %v985 = vrot.slane %v983, 1
      %v986 = vsel %vm494, %v981, %v985
      %v987 = vshrl.u32 %v956, 16
      %v989 = vor.u32 %v987, %v985
      %v991 = vshll.u32 %v957, 16
      %v993 = vrot.slane %v991, 1
      %v994 = vsel %vm494, %v989, %v993
      %v995 = vshrl.u32 %v957, 16
      %v997 = vor.u32 %v995, %v993
      %v999 = vshll.u32 %v958, 16
      %v1001 = vrot.slane %v999, 1
      %v1002 = vsel %vm494, %v997, %v1001
      %v1004 = vsel %vm244, %v970, 0
      %v1007 = vsel %vm244, %v978, 0
      %v1010 = vsel %vm244, %v986, 0
      %v1013 = vsel %vm244, %v994, 0
      %v1016 = vsel %vm244, %v1002, 0
      %v1019 = vsel %vm260, %v930, 0
      %1021 = vmatprep.subr.bf16.mxu0 0
      %1022 = vmatpush1.bf16.msra.mxu0 %v1019
      %1023 = vmatprep.subr.bf16.mxu0 0
      %1024 = vmatpush1.bf16.msra.mxu0 0
      %1025 = vmatprep.subr.bf16.mxu0 0
      %1026 = vmatpush1.bf16.msra.mxu0 0
      %1027 = vmatprep.subr.bf16.mxu0 0
      %1028 = vmatpush1.bf16.msra.mxu0 0
      %1029 = vmatprep.subr.bf16.mxu0 0
      %1030 = vmatpush1.bf16.msra.mxu0 0
      %1031 = vmatprep.subr.bf16.mxu0 0
      %1032 = vmatpush1.bf16.msra.mxu0 0
      %1033 = vmatprep.subr.bf16.mxu0 0
      %1034 = vmatpush1.bf16.msra.mxu0 0
      %1035 = vmatprep.subr.bf16.mxu0 0
      %1036 = vmatpush1.bf16.msra.mxu0 0
      %1037 = vmatprep.subr.bf16.mxu0 0
      %1038 = vmatpush1.bf16.msra.mxu0 0
      %1039 = vmatprep.subr.bf16.mxu0 0
      %1040 = vmatpush1.bf16.msra.mxu0 0
      %1041 = vmatprep.subr.bf16.mxu0 0
      %1042 = vmatpush1.bf16.msra.mxu0 0
      %1043 = vmatprep.subr.bf16.mxu0 0
      %1044 = vmatpush1.bf16.msra.mxu0 0
      %1045 = vmatprep.subr.bf16.mxu0 0
      %1046 = vmatpush1.bf16.msra.mxu0 0
      %1047 = vmatprep.subr.bf16.mxu0 0
      %1048 = vmatpush1.bf16.msra.mxu0 0
      %1049 = vmatprep.subr.bf16.mxu0 0
      %1050 = vmatpush1.bf16.msra.mxu0 0
      %1051 = vmatprep.subr.bf16.mxu0 0
      %1052 = vmatpush1.bf16.msra.mxu0 0
      %1053 = vmatprep.mubr.bf16.mxu0 0
      %1054 = vmatmul.mubr.bf16.gmra.mrb[0].mxu0 %v1004
      %v1055 = vpop.f32.mrb[0].mxu0
      %v1056 = vadd.f32 0.0, %v1055
      %v1057 = vpop.f32.mrb[0].mxu0
      %v1058 = vpop.f32.mrb[0].mxu0
      %v1059 = vadd.f32 0.0, %v1058
      %v1060 = vpop.f32.mrb[0].mxu0
      %1061 = vmatprep.mubr.bf16.mxu0 0
      %1062 = vmatmul.mubr.bf16.gmra.mrb[0].mxu0 %v1007
      %v1063 = vpop.f32.mrb[0].mxu0
      %v1064 = vadd.f32 0.0, %v1063
      %v1065 = vpop.f32.mrb[0].mxu0
      %v1066 = vpop.f32.mrb[0].mxu0
      %v1067 = vadd.f32 0.0, %v1066
      %v1068 = vpop.f32.mrb[0].mxu0
      %1069 = vmatprep.mubr.bf16.mxu0 0
      %1070 = vmatmul.mubr.bf16.gmra.mrb[0].mxu0 %v1010
      %v1071 = vpop.f32.mrb[0].mxu0
      %v1072 = vadd.f32 0.0, %v1071
      %v1073 = vpop.f32.mrb[0].mxu0
      %v1074 = vpop.f32.mrb[0].mxu0
      %v1075 = vadd.f32 0.0, %v1074
      %v1076 = vpop.f32.mrb[0].mxu0
      %1077 = vmatprep.mubr.bf16.mxu0 0
      %1078 = vmatmul.mubr.bf16.gmra.mrb[0].mxu0 %v1013
      %v1079 = vpop.f32.mrb[0].mxu0
      %v1080 = vadd.f32 0.0, %v1079
      %v1081 = vpop.f32.mrb[0].mxu0
      %v1082 = vpop.f32.mrb[0].mxu0
      %v1083 = vadd.f32 0.0, %v1082
      %v1084 = vpop.f32.mrb[0].mxu0
      %1085 = vmatprep.mubr.bf16.mxu0 0
      %1086 = vmatmul.mubr.bf16.gmra.mrb[0].mxu0 %v1016
      %v1087 = vpop.f32.mrb[0].mxu0
      %v1088 = vadd.f32 0.0, %v1087
      %v1089 = vpop.f32.mrb[0].mxu0
      %v1090 = vpop.f32.mrb[0].mxu0
      %v1091 = vadd.f32 0.0, %v1090
      %v1092 = vpop.f32.mrb[0].mxu0
      %1093 = vdwg.mxu0
      %v1094 = vadd.f32 %v908, %v1056
      %v1095 = vadd.f32 %v909, %v1059
      %v1096 = vadd.f32 %v910, %v1064
      %v1097 = vadd.f32 %v911, %v1067
      %v1098 = vadd.f32 %v912, %v1072
      %v1099 = vadd.f32 %v913, %v1075
      %v1100 = vadd.f32 %v914, %v1080
      %v1101 = vadd.f32 %v915, %v1083
      %v1102 = vadd.f32 %v916, %v1088
      %v1103 = vadd.f32 %v917, %v1091
      %v1104 = vld [vmem:[%s183 + $0x4] sm:$0xf]
      %v1105 = vld [vmem:[%s183 + $0x8] sm:$0xf]
      %v1106 = vld [vmem:[%s183 + $0xc] sm:$0xf]
      %v1107 = vld [vmem:[%s183 + $0x10] sm:$0xf]
      %v1108 = vld [vmem:[%s183 + $0x14] sm:$0xf]
      %v1109 = vld [vmem:[%s183 + $0x18] sm:$0xf]
      %v1110 = vld [vmem:[%s183 + $0x1c] sm:$0xf]
      %v1111 = vld [vmem:[%s183 + $0x20] sm:$0xf]
      %v1112 = vld [vmem:[%s183 + $0x24] sm:$0xf]
      %v1113 = vld [vmem:[%s183 + $0x28] sm:$0xf]
      %v1114 = vld [vmem:[%s183 + $0x2c] sm:$0x1]
      %s1115 = scalar_lea.vmem %s1, 12
      %v1116 = vld [vmem:[%s1115] sm:$0x3]
      %v1128 = vunpack.c.l.b16 %v1104
      %v1129 = vunpack.c.l.b16 %v1105
      %v1130 = vunpack.c.l.b16 %v1106
      %v1131 = vunpack.c.l.b16 %v1107
      %v1132 = vunpack.c.l.b16 %v1108
      %v1133 = vunpack.c.l.b16 %v1109
      %v1134 = vunpack.c.l.b16 %v1110
      %v1135 = vunpack.c.l.b16 %v1111
      %v1136 = vunpack.c.l.b16 %v1112
      %v1137 = vunpack.c.l.b16 %v1113
      %v1138 = vunpack.c.l.b16 %v1114
      %v1139 = vpack.c.b16 %v1129, %v1128
      %v1140 = vpack.c.b16 %v1131, %v1130
      %v1141 = vpack.c.b16 %v1133, %v1132
      %v1142 = vpack.c.b16 %v1135, %v1134
      %v1143 = vpack.c.b16 %v1137, %v1136
      %v1144 = vpack.c.b16 %v1138, %v1138
      %v1146 = vshrl.u32 %v1139, 16
      %v1148 = vshll.u32 %v1139, 16
      %v1150 = vrot.slane %v1148, 1
      %v1151 = vor.u32 %v1146, %v1150
      %v1153 = vshll.u32 %v1140, 16
      %v1155 = vrot.slane %v1153, 1
      %v1156 = vsel %vm494, %v1151, %v1155
      %v1157 = vshrl.u32 %v1140, 16
      %v1159 = vor.u32 %v1157, %v1155
      %v1161 = vshll.u32 %v1141, 16
      %v1163 = vrot.slane %v1161, 1
      %v1164 = vsel %vm494, %v1159, %v1163
      %v1165 = vshrl.u32 %v1141, 16
      %v1167 = vor.u32 %v1165, %v1163
      %v1169 = vshll.u32 %v1142, 16
      %v1171 = vrot.slane %v1169, 1
      %v1172 = vsel %vm494, %v1167, %v1171
      %v1173 = vshrl.u32 %v1142, 16
      %v1175 = vor.u32 %v1173, %v1171
      %v1177 = vshll.u32 %v1143, 16
      %v1179 = vrot.slane %v1177, 1
      %v1180 = vsel %vm494, %v1175, %v1179
      %v1181 = vshrl.u32 %v1143, 16
      %v1183 = vor.u32 %v1181, %v1179
      %v1185 = vshll.u32 %v1144, 16
      %v1187 = vrot.slane %v1185, 1
      %v1188 = vsel %vm494, %v1183, %v1187
      %v1190 = vsel %vm244, %v1156, 0
      %v1193 = vsel %vm244, %v1164, 0
      %v1196 = vsel %vm244, %v1172, 0
      %v1199 = vsel %vm244, %v1180, 0
      %v1202 = vsel %vm244, %v1188, 0
      %v1205 = vsel %vm260, %v1116, 0
      %1207 = vmatprep.subr.bf16.mxu0 0
      %1208 = vmatpush1.bf16.msra.mxu0 %v1205
      %1209 = vmatprep.subr.bf16.mxu0 0
      %1210 = vmatpush1.bf16.msra.mxu0 0
      %1211 = vmatprep.subr.bf16.mxu0 0
      %1212 = vmatpush1.bf16.msra.mxu0 0
      %1213 = vmatprep.subr.bf16.mxu0 0
      %1214 = vmatpush1.bf16.msra.mxu0 0
      %1215 = vmatprep.subr.bf16.mxu0 0
      %1216 = vmatpush1.bf16.msra.mxu0 0
      %1217 = vmatprep.subr.bf16.mxu0 0
      %1218 = vmatpush1.bf16.msra.mxu0 0
      %1219 = vmatprep.subr.bf16.mxu0 0
      %1220 = vmatpush1.bf16.msra.mxu0 0
      %1221 = vmatprep.subr.bf16.mxu0 0
      %1222 = vmatpush1.bf16.msra.mxu0 0
      %1223 = vmatprep.subr.bf16.mxu0 0
      %1224 = vmatpush1.bf16.msra.mxu0 0
      %1225 = vmatprep.subr.bf16.mxu0 0
      %1226 = vmatpush1.bf16.msra.mxu0 0
      %1227 = vmatprep.subr.bf16.mxu0 0
      %1228 = vmatpush1.bf16.msra.mxu0 0
      %1229 = vmatprep.subr.bf16.mxu0 0
      %1230 = vmatpush1.bf16.msra.mxu0 0
      %1231 = vmatprep.subr.bf16.mxu0 0
      %1232 = vmatpush1.bf16.msra.mxu0 0
      %1233 = vmatprep.subr.bf16.mxu0 0
      %1234 = vmatpush1.bf16.msra.mxu0 0
      %1235 = vmatprep.subr.bf16.mxu0 0
      %1236 = vmatpush1.bf16.msra.mxu0 0
      %1237 = vmatprep.subr.bf16.mxu0 0
      %1238 = vmatpush1.bf16.msra.mxu0 0
      %1239 = vmatprep.mubr.bf16.mxu0 0
      %1240 = vmatmul.mubr.bf16.gmra.mrb[0].mxu0 %v1190
      %v1241 = vpop.f32.mrb[0].mxu0
      %v1242 = vadd.f32 0.0, %v1241
      %v1243 = vpop.f32.mrb[0].mxu0
      %v1244 = vpop.f32.mrb[0].mxu0
      %v1245 = vadd.f32 0.0, %v1244
      %v1246 = vpop.f32.mrb[0].mxu0
      %1247 = vmatprep.mubr.bf16.mxu0 0
      %1248 = vmatmul.mubr.bf16.gmra.mrb[0].mxu0 %v1193
      %v1249 = vpop.f32.mrb[0].mxu0
      %v1250 = vadd.f32 0.0, %v1249
      %v1251 = vpop.f32.mrb[0].mxu0
      %v1252 = vpop.f32.mrb[0].mxu0
      %v1253 = vadd.f32 0.0, %v1252
      %v1254 = vpop.f32.mrb[0].mxu0
      %1255 = vmatprep.mubr.bf16.mxu0 0
      %1256 = vmatmul.mubr.bf16.gmra.mrb[0].mxu0 %v1196
      %v1257 = vpop.f32.mrb[0].mxu0
      %v1258 = vadd.f32 0.0, %v1257
      %v1259 = vpop.f32.mrb[0].mxu0
      %v1260 = vpop.f32.mrb[0].mxu0
      %v1261 = vadd.f32 0.0, %v1260
      %v1262 = vpop.f32.mrb[0].mxu0
      %1263 = vmatprep.mubr.bf16.mxu0 0
      %1264 = vmatmul.mubr.bf16.gmra.mrb[0].mxu0 %v1199
      %v1265 = vpop.f32.mrb[0].mxu0
      %v1266 = vadd.f32 0.0, %v1265
      %v1267 = vpop.f32.mrb[0].mxu0
      %v1268 = vpop.f32.mrb[0].mxu0
      %v1269 = vadd.f32 0.0, %v1268
      %v1270 = vpop.f32.mrb[0].mxu0
      %1271 = vmatprep.mubr.bf16.mxu0 0
      %1272 = vmatmul.mubr.bf16.gmra.mrb[0].mxu0 %v1202
      %v1273 = vpop.f32.mrb[0].mxu0
      %v1274 = vadd.f32 0.0, %v1273
      %v1275 = vpop.f32.mrb[0].mxu0
      %v1276 = vpop.f32.mrb[0].mxu0
      %v1277 = vadd.f32 0.0, %v1276
      %v1278 = vpop.f32.mrb[0].mxu0
      %1279 = vdwg.mxu0
      %v1280 = vadd.f32 %v1094, %v1242
      %v1281 = vadd.f32 %v1095, %v1245
      %v1282 = vadd.f32 %v1096, %v1250
      %v1283 = vadd.f32 %v1097, %v1253
      %v1284 = vadd.f32 %v1098, %v1258
      %v1285 = vadd.f32 %v1099, %v1261
      %v1286 = vadd.f32 %v1100, %v1266
      %v1287 = vadd.f32 %v1101, %v1269
      %v1288 = vadd.f32 %v1102, %v1274
      %v1289 = vadd.f32 %v1103, %v1277
      %v1290 = vld [vmem:[%s206 + $0x4] sm:$0xf]
      %v1291 = vld [vmem:[%s206 + $0x8] sm:$0xf]
      %v1292 = vld [vmem:[%s206 + $0xc] sm:$0xf]
      %v1293 = vld [vmem:[%s206 + $0x10] sm:$0xf]
      %v1294 = vld [vmem:[%s206 + $0x14] sm:$0xf]
      %v1295 = vld [vmem:[%s206 + $0x18] sm:$0xf]
      %v1296 = vld [vmem:[%s206 + $0x1c] sm:$0xf]
      %v1297 = vld [vmem:[%s206 + $0x20] sm:$0xf]
      %v1298 = vld [vmem:[%s206 + $0x24] sm:$0xf]
      %v1299 = vld [vmem:[%s206 + $0x28] sm:$0xf]
      %v1300 = vld [vmem:[%s206 + $0x2c] sm:$0x1]
      %s1301 = scalar_lea.vmem %s1, 14
      %v1302 = vld [vmem:[%s1301] sm:$0x3]
      %v1314 = vunpack.c.l.b16 %v1290
      %v1315 = vunpack.c.l.b16 %v1291
      %v1316 = vunpack.c.l.b16 %v1292
      %v1317 = vunpack.c.l.b16 %v1293
      %v1318 = vunpack.c.l.b16 %v1294
      %v1319 = vunpack.c.l.b16 %v1295
      %v1320 = vunpack.c.l.b16 %v1296
      %v1321 = vunpack.c.l.b16 %v1297
      %v1322 = vunpack.c.l.b16 %v1298
      %v1323 = vunpack.c.l.b16 %v1299
      %v1324 = vunpack.c.l.b16 %v1300
      %v1325 = vpack.c.b16 %v1315, %v1314
      %v1326 = vpack.c.b16 %v1317, %v1316
      %v1327 = vpack.c.b16 %v1319, %v1318
      %v1328 = vpack.c.b16 %v1321, %v1320
      %v1329 = vpack.c.b16 %v1323, %v1322
      %v1330 = vpack.c.b16 %v1324, %v1324
      %v1332 = vshrl.u32 %v1325, 16
      %v1334 = vshll.u32 %v1325, 16
      %v1336 = vrot.slane %v1334, 1
      %v1337 = vor.u32 %v1332, %v1336
      %v1339 = vshll.u32 %v1326, 16
      %v1341 = vrot.slane %v1339, 1
      %v1342 = vsel %vm494, %v1337, %v1341
      %v1343 = vshrl.u32 %v1326, 16
      %v1345 = vor.u32 %v1343, %v1341
      %v1347 = vshll.u32 %v1327, 16
      %v1349 = vrot.slane %v1347, 1
      %v1350 = vsel %vm494, %v1345, %v1349
      %v1351 = vshrl.u32 %v1327, 16
      %v1353 = vor.u32 %v1351, %v1349
      %v1355 = vshll.u32 %v1328, 16
      %v1357 = vrot.slane %v1355, 1
      %v1358 = vsel %vm494, %v1353, %v1357
      %v1359 = vshrl.u32 %v1328, 16
      %v1361 = vor.u32 %v1359, %v1357
      %v1363 = vshll.u32 %v1329, 16
      %v1365 = vrot.slane %v1363, 1
      %v1366 = vsel %vm494, %v1361, %v1365
      %v1367 = vshrl.u32 %v1329, 16
      %v1369 = vor.u32 %v1367, %v1365
      %v1371 = vshll.u32 %v1330, 16
      %v1373 = vrot.slane %v1371, 1
      %v1374 = vsel %vm494, %v1369, %v1373
      %v1376 = vsel %vm244, %v1342, 0
      %v1379 = vsel %vm244, %v1350, 0
      %v1382 = vsel %vm244, %v1358, 0
      %v1385 = vsel %vm244, %v1366, 0
      %v1388 = vsel %vm244, %v1374, 0
      %v1391 = vsel %vm260, %v1302, 0
      %1393 = vmatprep.subr.bf16.mxu0 0
      %1394 = vmatpush1.bf16.msra.mxu0 %v1391
      %1395 = vmatprep.subr.bf16.mxu0 0
      %1396 = vmatpush1.bf16.msra.mxu0 0
      %1397 = vmatprep.subr.bf16.mxu0 0
      %1398 = vmatpush1.bf16.msra.mxu0 0
      %1399 = vmatprep.subr.bf16.mxu0 0
      %1400 = vmatpush1.bf16.msra.mxu0 0
      %1401 = vmatprep.subr.bf16.mxu0 0
      %1402 = vmatpush1.bf16.msra.mxu0 0
      %1403 = vmatprep.subr.bf16.mxu0 0
      %1404 = vmatpush1.bf16.msra.mxu0 0
      %1405 = vmatprep.subr.bf16.mxu0 0
      %1406 = vmatpush1.bf16.msra.mxu0 0
      %1407 = vmatprep.subr.bf16.mxu0 0
      %1408 = vmatpush1.bf16.msra.mxu0 0
      %1409 = vmatprep.subr.bf16.mxu0 0
      %1410 = vmatpush1.bf16.msra.mxu0 0
      %1411 = vmatprep.subr.bf16.mxu0 0
      %1412 = vmatpush1.bf16.msra.mxu0 0
      %1413 = vmatprep.subr.bf16.mxu0 0
      %1414 = vmatpush1.bf16.msra.mxu0 0
      %1415 = vmatprep.subr.bf16.mxu0 0
      %1416 = vmatpush1.bf16.msra.mxu0 0
      %1417 = vmatprep.subr.bf16.mxu0 0
      %1418 = vmatpush1.bf16.msra.mxu0 0
      %1419 = vmatprep.subr.bf16.mxu0 0
      %1420 = vmatpush1.bf16.msra.mxu0 0
      %1421 = vmatprep.subr.bf16.mxu0 0
      %1422 = vmatpush1.bf16.msra.mxu0 0
      %1423 = vmatprep.subr.bf16.mxu0 0
      %1424 = vmatpush1.bf16.msra.mxu0 0
      %1425 = vmatprep.mubr.bf16.mxu0 0
      %1426 = vmatmul.mubr.bf16.gmra.mrb[0].mxu0 %v1376
      %v1427 = vpop.f32.mrb[0].mxu0
      %v1428 = vadd.f32 0.0, %v1427
      %v1429 = vpop.f32.mrb[0].mxu0
      %v1430 = vpop.f32.mrb[0].mxu0
      %v1431 = vadd.f32 0.0, %v1430
      %v1432 = vpop.f32.mrb[0].mxu0
      %1433 = vmatprep.mubr.bf16.mxu0 0
      %1434 = vmatmul.mubr.bf16.gmra.mrb[0].mxu0 %v1379
      %v1435 = vpop.f32.mrb[0].mxu0
      %v1436 = vadd.f32 0.0, %v1435
      %v1437 = vpop.f32.mrb[0].mxu0
      %v1438 = vpop.f32.mrb[0].mxu0
      %v1439 = vadd.f32 0.0, %v1438
      %v1440 = vpop.f32.mrb[0].mxu0
      %1441 = vmatprep.mubr.bf16.mxu0 0
      %1442 = vmatmul.mubr.bf16.gmra.mrb[0].mxu0 %v1382
      %v1443 = vpop.f32.mrb[0].mxu0
      %v1444 = vadd.f32 0.0, %v1443
      %v1445 = vpop.f32.mrb[0].mxu0
      %v1446 = vpop.f32.mrb[0].mxu0
      %v1447 = vadd.f32 0.0, %v1446
      %v1448 = vpop.f32.mrb[0].mxu0
      %1449 = vmatprep.mubr.bf16.mxu0 0
      %1450 = vmatmul.mubr.bf16.gmra.mrb[0].mxu0 %v1385
      %v1451 = vpop.f32.mrb[0].mxu0
      %v1452 = vadd.f32 0.0, %v1451
      %v1453 = vpop.f32.mrb[0].mxu0
      %v1454 = vpop.f32.mrb[0].mxu0
      %v1455 = vadd.f32 0.0, %v1454
      %v1456 = vpop.f32.mrb[0].mxu0
      %1457 = vmatprep.mubr.bf16.mxu0 0
      %1458 = vmatmul.mubr.bf16.gmra.mrb[0].mxu0 %v1388
      %v1459 = vpop.f32.mrb[0].mxu0
      %v1460 = vadd.f32 0.0, %v1459
      %v1461 = vpop.f32.mrb[0].mxu0
      %v1462 = vpop.f32.mrb[0].mxu0
      %v1463 = vadd.f32 0.0, %v1462
      %v1464 = vpop.f32.mrb[0].mxu0
      %1465 = vdwg.mxu0
      %v1466 = vadd.f32 %v1280, %v1428
      %v1467 = vadd.f32 %v1281, %v1431
      %v1468 = vadd.f32 %v1282, %v1436
      %v1469 = vadd.f32 %v1283, %v1439
      %v1470 = vadd.f32 %v1284, %v1444
      %v1471 = vadd.f32 %v1285, %v1447
      %v1472 = vadd.f32 %v1286, %v1452
      %v1473 = vadd.f32 %v1287, %v1455
      %v1474 = vadd.f32 %v1288, %v1460
      %v1475 = vadd.f32 %v1289, %v1463
      %v1476 = vld [vmem:[%s183 + $0x4] sm:$0xe]
      %s1477 = scalar_lea.vmem %s1, 16
      %v1478 = vld [vmem:[%s1477] sm:$0x3]
      %v1480 = vunpack.c.l.b16 %v1476
      %v1481 = vpack.c.b16 %v1129, %v1480
      %vm1482 = vcmask 1046528
      %v1483 = vrot.slane %v1481, 1
      %v1484 = vrot.slane %v1140, 1
      %v1485 = vsel %vm1482, %v1483, %v1484
      %v1486 = vrot.slane %v1141, 1
      %v1487 = vsel %vm1482, %v1484, %v1486
      %v1488 = vrot.slane %v1142, 1
      %v1489 = vsel %vm1482, %v1486, %v1488
      %v1490 = vrot.slane %v1143, 1
      %v1491 = vsel %vm1482, %v1488, %v1490
      %v1492 = vrot.slane %v1144, 1
      %v1493 = vsel %vm1482, %v1490, %v1492
      %v1495 = vsel %vm244, %v1485, 0
      %v1498 = vsel %vm244, %v1487, 0
      %v1501 = vsel %vm244, %v1489, 0
      %v1504 = vsel %vm244, %v1491, 0
      %v1507 = vsel %vm244, %v1493, 0
      %v1510 = vsel %vm260, %v1478, 0
      %1512 = vmatprep.subr.bf16.mxu0 0
      %1513 = vmatpush1.bf16.msra.mxu0 %v1510
      %1514 = vmatprep.subr.bf16.mxu0 0
      %1515 = vmatpush1.bf16.msra.mxu0 0
      %1516 = vmatprep.subr.bf16.mxu0 0
      %1517 = vmatpush1.bf16.msra.mxu0 0
      %1518 = vmatprep.subr.bf16.mxu0 0
      %1519 = vmatpush1.bf16.msra.mxu0 0
      %1520 = vmatprep.subr.bf16.mxu0 0
      %1521 = vmatpush1.bf16.msra.mxu0 0
      %1522 = vmatprep.subr.bf16.mxu0 0
      %1523 = vmatpush1.bf16.msra.mxu0 0
      %1524 = vmatprep.subr.bf16.mxu0 0
      %1525 = vmatpush1.bf16.msra.mxu0 0
      %1526 = vmatprep.subr.bf16.mxu0 0
      %1527 = vmatpush1.bf16.msra.mxu0 0
      %1528 = vmatprep.subr.bf16.mxu0 0
      %1529 = vmatpush1.bf16.msra.mxu0 0
      %1530 = vmatprep.subr.bf16.mxu0 0
      %1531 = vmatpush1.bf16.msra.mxu0 0
      %1532 = vmatprep.subr.bf16.mxu0 0
      %1533 = vmatpush1.bf16.msra.mxu0 0
      %1534 = vmatprep.subr.bf16.mxu0 0
      %1535 = vmatpush1.bf16.msra.mxu0 0
      %1536 = vmatprep.subr.bf16.mxu0 0
      %1537 = vmatpush1.bf16.msra.mxu0 0
      %1538 = vmatprep.subr.bf16.mxu0 0
      %1539 = vmatpush1.bf16.msra.mxu0 0
      %1540 = vmatprep.subr.bf16.mxu0 0
      %1541 = vmatpush1.bf16.msra.mxu0 0
      %1542 = vmatprep.subr.bf16.mxu0 0
      %1543 = vmatpush1.bf16.msra.mxu0 0
      %1544 = vmatprep.mubr.bf16.mxu0 0
      %1545 = vmatmul.mubr.bf16.gmra.mrb[0].mxu0 %v1495
      %v1546 = vpop.f32.mrb[0].mxu0
      %v1547 = vadd.f32 0.0, %v1546
      %v1548 = vpop.f32.mrb[0].mxu0
      %v1549 = vpop.f32.mrb[0].mxu0
      %v1550 = vadd.f32 0.0, %v1549
      %v1551 = vpop.f32.mrb[0].mxu0
      %1552 = vmatprep.mubr.bf16.mxu0 0
      %1553 = vmatmul.mubr.bf16.gmra.mrb[0].mxu0 %v1498
      %v1554 = vpop.f32.mrb[0].mxu0
      %v1555 = vadd.f32 0.0, %v1554
      %v1556 = vpop.f32.mrb[0].mxu0
      %v1557 = vpop.f32.mrb[0].mxu0
      %v1558 = vadd.f32 0.0, %v1557
      %v1559 = vpop.f32.mrb[0].mxu0
      %1560 = vmatprep.mubr.bf16.mxu0 0
      %1561 = vmatmul.mubr.bf16.gmra.mrb[0].mxu0 %v1501
      %v1562 = vpop.f32.mrb[0].mxu0
      %v1563 = vadd.f32 0.0, %v1562
      %v1564 = vpop.f32.mrb[0].mxu0
      %v1565 = vpop.f32.mrb[0].mxu0
      %v1566 = vadd.f32 0.0, %v1565
      %v1567 = vpop.f32.mrb[0].mxu0
      %1568 = vmatprep.mubr.bf16.mxu0 0
      %1569 = vmatmul.mubr.bf16.gmra.mrb[0].mxu0 %v1504
      %v1570 = vpop.f32.mrb[0].mxu0
      %v1571 = vadd.f32 0.0, %v1570
      %v1572 = vpop.f32.mrb[0].mxu0
      %v1573 = vpop.f32.mrb[0].mxu0
      %v1574 = vadd.f32 0.0, %v1573
      %v1575 = vpop.f32.mrb[0].mxu0
      %1576 = vmatprep.mubr.bf16.mxu0 0
      %1577 = vmatmul.mubr.bf16.gmra.mrb[0].mxu0 %v1507
      %v1578 = vpop.f32.mrb[0].mxu0
      %v1579 = vadd.f32 0.0, %v1578
      %v1580 = vpop.f32.mrb[0].mxu0
      %v1581 = vpop.f32.mrb[0].mxu0
      %v1582 = vadd.f32 0.0, %v1581
      %v1583 = vpop.f32.mrb[0].mxu0
      %1584 = vdwg.mxu0
      %v1585 = vadd.f32 %v1466, %v1547
      %v1586 = vadd.f32 %v1467, %v1550
      %v1587 = vadd.f32 %v1468, %v1555
      %v1588 = vadd.f32 %v1469, %v1558
      %v1589 = vadd.f32 %v1470, %v1563
      %v1590 = vadd.f32 %v1471, %v1566
      %v1591 = vadd.f32 %v1472, %v1571
      %v1592 = vadd.f32 %v1473, %v1574
      %v1593 = vadd.f32 %v1474, %v1579
      %v1594 = vadd.f32 %v1475, %v1582
      %v1595 = vld [vmem:[%s2] sm:$0x1]
      %v1597 = vlaneseq
      %v1598 = vshrl.u32 %v1597, 7
      %v1599 = vsub.s32 0, %v1598
      %v1600 = vrot.slane %v1595, %v1599
      %v1602 = vadd.f32 %v1585, %v1600
      %v1603 = vadd.f32 %v1586, %v1600
      %v1604 = vadd.f32 %v1587, %v1600
      %v1605 = vadd.f32 %v1588, %v1600
      %v1606 = vadd.f32 %v1589, %v1600
      %v1607 = vadd.f32 %v1590, %v1600
      %v1608 = vadd.f32 %v1591, %v1600
      %v1609 = vadd.f32 %v1592, %v1600
      %v1610 = vadd.f32 %v1593, %v1600
      %v1611 = vadd.f32 %v1594, %v1600
      %v1612 = vmax.f32 %v1602, 0.0
      %v1613 = vmax.f32 %v1603, 0.0
      %v1614 = vmax.f32 %v1604, 0.0
      %v1615 = vmax.f32 %v1605, 0.0
      %v1616 = vmax.f32 %v1606, 0.0
      %v1617 = vmax.f32 %v1607, 0.0
      %v1618 = vmax.f32 %v1608, 0.0
      %v1619 = vmax.f32 %v1609, 0.0
      %v1620 = vmax.f32 %v1610, 0.0
      %v1621 = vmax.f32 %v1611, 0.0
      %v1622 = vpack.c.bf16 %v1613, %v1612
      %v1623 = vpack.c.bf16 %v1615, %v1614
      %v1624 = vpack.c.bf16 %v1617, %v1616
      %v1625 = vpack.c.bf16 %v1619, %v1618
      %v1626 = vpack.c.bf16 %v1621, %v1620
      %v1632 = vunpack.c.l.b16 %v1622
      %v1633 = vunpack.c.h.b16 %v1622
      %v1634 = vunpack.c.l.b16 %v1623
      %v1635 = vunpack.c.h.b16 %v1623
      %v1636 = vunpack.c.l.b16 %v1624
      %v1637 = vunpack.c.h.b16 %v1624
      %v1638 = vunpack.c.l.b16 %v1625
      %v1639 = vunpack.c.h.b16 %v1625
      %v1640 = vunpack.c.l.b16 %v1626
      %v1641 = vunpack.c.h.b16 %v1626
      %v1642 = vpack.c.b16 %v1632, %v1632
      %v1643 = vpack.c.b16 %v1633, %v1633
      %v1644 = vpack.c.b16 %v1634, %v1634
      %v1645 = vpack.c.b16 %v1635, %v1635
      %v1646 = vpack.c.b16 %v1636, %v1636
      %v1647 = vpack.c.b16 %v1637, %v1637
      %v1648 = vpack.c.b16 %v1638, %v1638
      %v1649 = vpack.c.b16 %v1639, %v1639
      %v1650 = vpack.c.b16 %v1640, %v1640
      %v1651 = vpack.c.b16 %v1641, %v1641
      %1662 = vst [vmem:[%s192] sm:$0xf] %v1642
      %1663 = vst [vmem:[%s192 + $0x4] sm:$0xf] %v1643
      %1664 = vst [vmem:[%s192 + $0x8] sm:$0xf] %v1644
      %1665 = vst [vmem:[%s192 + $0xc] sm:$0xf] %v1645
      %1666 = vst [vmem:[%s192 + $0x10] sm:$0xf] %v1646
      %1667 = vst [vmem:[%s192 + $0x14] sm:$0xf] %v1647
      %1668 = vst [vmem:[%s192 + $0x18] sm:$0xf] %v1648
      %1669 = vst [vmem:[%s192 + $0x1c] sm:$0xf] %v1649
      %1670 = vst [vmem:[%s192 + $0x20] sm:$0xf] %v1650
      %1671 = vst [vmem:[%s192 + $0x24] sm:$0xf] %v1651
      %s1672 = smul.u32 10, %s19
      %p1673 = scmp.lt.s32.totalorder %s18, 1
      %s1674 = scalar_select %p1673, %s18, 1
      %p1675 = scmp.lt.s32.totalorder %s1672, 9
      %s1676 = scalar_select %p1675, %s1672, 9
      %s1677 = smul.addr %s1674, 10
      %s1678 = sadd.s32 %s1676, %s1677
      %s1679 = smul.addr %s1678, 4
      %s1680 = scalar_lea.vmem %s3, %s1679
      // Predicated region
      $region33: #{basic_block_forward.3} parent=31 // pred_check
        %p1681 = pneg %p114
      $region34: #{basic_block_forward.3} parent=31 // pred_check_branch
        %1683 = sbr.rel (%p1681) target = $region36
      $region35: #{basic_block_forward.3} parent=31 // pred_region
        %s1684 = smul.u32 10, %s19
      $region36: #{basic_block_forward.3} parent=31 // pred_fallthru
        _
    $region32: #{basic_block_forward.3} parent=5 // pred_fallthru
      _
    %p1685 = scmp.le.s32.totalorder 2, %s9
    // Predicated region
    $region37: #{basic_block_forward.3} parent=5 // pred_check
      %p1686 = pneg %p1685
    $region38: #{basic_block_forward.3} parent=5 // pred_check_branch
      %1688 = sbr.rel (%p1686) target = $region40
    $region39: #{basic_block_forward.3} parent=5 // pred_region
      %s1689 = ssub.s32 %s9, 2
      // Predicated region
      $region41: #{basic_block_forward.3} parent=39 // pred_check
        %p1690 = pneg %p120
      $region42: #{basic_block_forward.3} parent=39 // pred_check_branch
        %1692 = sbr.rel (%p1690) target = $region44
      $region43: #{basic_block_forward.3} parent=39 // pred_region
        %s1693 = smul.u32 10, %s21
        %p1694 = scmp.lt.s32.totalorder %s20, 1
        %s1695 = scalar_select %p1694, %s20, 1
        %p1696 = scmp.lt.s32.totalorder %s1693, 9
        %s1697 = scalar_select %p1696, %s1693, 9
        %s1698 = smul.addr %s1695, 10
        %s1699 = sadd.s32 %s1697, %s1698
        %s1700 = smul.addr %s1699, 4
        %s1701 = scalar_lea.vmem %s3, %s1700
      $region44: #{basic_block_forward.3} parent=39 // pred_fallthru
        _
    $region40: #{basic_block_forward.3} parent=5 // pred_fallthru
      _
  $region6: #{basic_block_forward.3} parent=0 // loop_footer
    %s13 = sadd.s32 1, %s9
  $region7: #{basic_block_forward.3} parent=0 // loop_footer_branch
    %8 = sbr.rel target = $region3
  $region8: #{basic_block_forward.3} parent=0 // loop_exit
    _

// kernel: basic_block_forward.5
$region0: #{basic_block_forward.5}
  #allocation0 [shape = 'u32[]', space=smem, size = 0x4, offset = 0x4, fixed_abs, tag = 'smem constant byte address 0x4 - core index']
  #allocation1 [shape = 'u32[144,128]{1,0:T(1,128)}', space=vmem, size = 0x12000, scoped, tag = 'internal scratch']
  %s0 = inlined_call_operand.vmem [shape: bf16[2,1,112,8], index: 0, kind: input, shape index: {}]
  %s1 = inlined_call_operand.vmem [shape: bf16[9,8,128], index: 1, kind: input, shape index: {}]
  %s2 = inlined_call_operand.vmem [shape: f32[1,128], index: 2, kind: input, shape index: {}]
  %s3 = inlined_call_operand.vmem [shape: bf16[2,80,128], index: 3, kind: input, shape index: {}]
  %s4 = inlined_call_operand.vmem [shape: f32[2,80,128], index: 4, kind: output, shape index: {}]
  %s5 = sld [smem:[#allocation0]]
  $region49: #{basic_block_forward.5} parent=0
    _
  %s7 = ssub.s32 1, %s5
  %s8 = scalar_select 0, %s7, %s5
  loop: start=0, step=1, limit=4
  $region2: #{basic_block_forward.5} parent=0 // loop_pre_header
    _
  $region3: #{basic_block_forward.5} parent=0 // loop_header
    %s10 = sphi 0, %s14
    %p11 = scmp.ge.s32.totalorder %s10, 4
    %s17 = sphi 0, %s29
    %s18 = sphi 0, %s25
    %s19 = sphi 0, %s17
    %s20 = sphi 0, %s18
    %s21 = sphi 0, %s19
    %s22 = sphi 0, %s20
    %s32 = sphi 0, %s34
    %s35 = sphi 0, %s32
    %s36 = sphi 0, %s35
    %s52 = sphi 0, %s36
    %s56 = sphi 0, %s56
    %s58 = sphi 0, %s56
    %s59 = sphi 0, %s58
    %s73 = sphi 0, %s59
    %s77 = sphi 0, %s77
    %s79 = sphi 0, %s77
    %s80 = sphi 0, %s79
    %s94 = sphi 0, %s80
    %s102 = sphi 0, %s104
    %s105 = sphi 0, %s102
    %s106 = sphi 0, %s105
    %s122 = sphi 0, %s106
    %s130 = sphi 0, %s132
    %s133 = sphi 0, %s130
    %s134 = sphi 0, %s133
    %s150 = sphi 0, %s134
  $region4: #{basic_block_forward.5} parent=0 // loop_header_branch
    %13 = sbr.rel (%p11) target = $region8
  $region5: #{basic_block_forward.5} parent=0 // loop_body
    %s15 = ssub.s32 %s10, 1
    %s16 = ssub.s32 %s10, 2
    %s23 = sadd.s32 1, %s18
    %p24 = scmp.ge.s32.totalorder %s23, 1
    %s25 = scalar_select %p24, 0, %s23
    %s26 = sadd.s32 1, %s17
    %s27 = scalar_select %p24, %s26, %s17
    %p28 = scmp.ge.s32.totalorder %s27, 2
    %s29 = scalar_select %p28, 0, %s27
    %s30 = ssub.s32 %s17, %s29
    %p31 = scmp.eq.s32.totalorder %s30, 0
    %s33 = sadd.s32 %s32, 1
    %s34 = scalar_select %p31, %s32, %s33
    %p37 = pneg %p31
    %p38 = scmp.eq.s32.totalorder %s10, 1
    %p39 = por %p37, %p38
    %p40 = scmp.ne.s32.totalorder %s32, %s35
    %p41 = scmp.eq.s32.totalorder %s10, 0
    %p42 = por %p40, %p41
    %p43 = scmp.ne.s32.totalorder %s32, %s35
    %p44 = scmp.eq.s32.totalorder %s15, 1
    %p45 = por %p43, %p44
    %p46 = scmp.ne.s32.totalorder %s35, %s36
    %p47 = scmp.eq.s32.totalorder %s15, 0
    %p48 = por %p46, %p47
    %p49 = scmp.ne.s32.totalorder %s35, %s36
    %p50 = scmp.eq.s32.totalorder %s16, 1
    %p51 = por %p49, %p50
    %p53 = scmp.ne.s32.totalorder %s36, %s52
    %p54 = scmp.eq.s32.totalorder %s16, 0
    %p55 = por %p53, %p54
    %s57 = sadd.s32 %s56, 1
    %p60 = scmp.eq.s32.totalorder %s10, 1
    %p61 = scmp.ne.s32.totalorder %s56, %s58
    %p62 = scmp.eq.s32.totalorder %s10, 0
    %p63 = por %p61, %p62
    %p64 = scmp.ne.s32.totalorder %s56, %s58
    %p65 = scmp.eq.s32.totalorder %s15, 1
    %p66 = por %p64, %p65
    %p67 = scmp.ne.s32.totalorder %s58, %s59
    %p68 = scmp.eq.s32.totalorder %s15, 0
    %p69 = por %p67, %p68
    %p70 = scmp.ne.s32.totalorder %s58, %s59
    %p71 = scmp.eq.s32.totalorder %s16, 1
    %p72 = por %p70, %p71
    %p74 = scmp.ne.s32.totalorder %s59, %s73
    %p75 = scmp.eq.s32.totalorder %s16, 0
    %p76 = por %p74, %p75
    %s78 = sadd.s32 %s77, 1
    %p81 = scmp.eq.s32.totalorder %s10, 1
    %p82 = scmp.ne.s32.totalorder %s77, %s79
    %p83 = scmp.eq.s32.totalorder %s10, 0
    %p84 = por %p82, %p83
    %p85 = scmp.ne.s32.totalorder %s77, %s79
    %p86 = scmp.eq.s32.totalorder %s15, 1
    %p87 = por %p85, %p86
    %p88 = scmp.ne.s32.totalorder %s79, %s80
    %p89 = scmp.eq.s32.totalorder %s15, 0
    %p90 = por %p88, %p89
    %p91 = scmp.ne.s32.totalorder %s79, %s80
    %p92 = scmp.eq.s32.totalorder %s16, 1
    %p93 = por %p91, %p92
    %p95 = scmp.ne.s32.totalorder %s80, %s94
    %p96 = scmp.eq.s32.totalorder %s16, 0
    %p97 = por %p95, %p96
    %s98 = ssub.s32 %s17, %s29
    %s99 = ssub.s32 %s18, %s25
    %s100 = sor.u32 %s98, %s99
    %p101 = scmp.eq.s32.totalorder %s100, 0
    %s103 = sadd.s32 %s102, 1
    %s104 = scalar_select %p101, %s102, %s103
    %p107 = pneg %p101
    %p108 = scmp.eq.s32.totalorder %s10, 1
    %p109 = por %p107, %p108
    %p110 = scmp.ne.s32.totalorder %s102, %s105
    %p111 = scmp.eq.s32.totalorder %s10, 0
    %p112 = por %p110, %p111
    %p113 = scmp.ne.s32.totalorder %s102, %s105
    %p114 = scmp.eq.s32.totalorder %s15, 1
    %p115 = por %p113, %p114
    %p116 = scmp.ne.s32.totalorder %s105, %s106
    %p117 = scmp.eq.s32.totalorder %s15, 0
    %p118 = por %p116, %p117
    %p119 = scmp.ne.s32.totalorder %s105, %s106
    %p120 = scmp.eq.s32.totalorder %s16, 1
    %p121 = por %p119, %p120
    %p123 = scmp.ne.s32.totalorder %s106, %s122
    %p124 = scmp.eq.s32.totalorder %s16, 0
    %p125 = por %p123, %p124
    %s126 = ssub.s32 %s17, %s29
    %s127 = ssub.s32 %s18, %s25
    %s128 = sor.u32 %s126, %s127
    %p129 = scmp.eq.s32.totalorder %s128, 0
    %s131 = sadd.s32 %s130, 1
    %s132 = scalar_select %p129, %s130, %s131
    %p135 = pneg %p129
    %p136 = scmp.eq.s32.totalorder %s10, 1
    %p137 = por %p135, %p136
    %p138 = scmp.ne.s32.totalorder %s130, %s133
    %p139 = scmp.eq.s32.totalorder %s10, 0
    %p140 = por %p138, %p139
    %p141 = scmp.ne.s32.totalorder %s130, %s133
    %p142 = scmp.eq.s32.totalorder %s15, 1
    %p143 = por %p141, %p142
    %p144 = scmp.ne.s32.totalorder %s133, %s134
    %p145 = scmp.eq.s32.totalorder %s15, 0
    %p146 = por %p144, %p145
    %p147 = scmp.ne.s32.totalorder %s133, %s134
    %p148 = scmp.eq.s32.totalorder %s16, 1
    %p149 = por %p147, %p148
    %p151 = scmp.ne.s32.totalorder %s134, %s150
    %p152 = scmp.eq.s32.totalorder %s16, 0
    %p153 = por %p151, %p152
    %p154 = scmp.le.s32.totalorder 1, %s10
    %p155 = scmp.lt.s32.totalorder %s10, 3
    %p156 = pnand %p154, %p155
    %p157 = pneg %p156
    // Predicated region
    $region9: #{basic_block_forward.5} parent=5 // pred_check
      _
    $region10: #{basic_block_forward.5} parent=5 // pred_check_branch
      %159 = sbr.rel (%p156) target = $region12
    $region11: #{basic_block_forward.5} parent=5 // pred_region
      %s160 = ssub.s32 %s10, 1
      // Predicated region
      $region13: #{basic_block_forward.5} parent=11 // pred_check
        %p161 = pneg %p69
      $region14: #{basic_block_forward.5} parent=11 // pred_check_branch
        %163 = sbr.rel (%p161) target = $region16
      $region15: #{basic_block_forward.5} parent=11 // pred_region
        _
      $region16: #{basic_block_forward.5} parent=11 // pred_fallthru
        _
      // Predicated region
      $region17: #{basic_block_forward.5} parent=11 // pred_check
        %p164 = pneg %p90
      $region18: #{basic_block_forward.5} parent=11 // pred_check_branch
        %166 = sbr.rel (%p164) target = $region20
      $region19: #{basic_block_forward.5} parent=11 // pred_region
        _
      $region20: #{basic_block_forward.5} parent=11 // pred_fallthru
        _
    $region12: #{basic_block_forward.5} parent=5 // pred_fallthru
      _
    %p167 = scmp.lt.s32.totalorder %s10, 2
    // Predicated region
    $region21: #{basic_block_forward.5} parent=5 // pred_check
      %p168 = pneg %p167
    $region22: #{basic_block_forward.5} parent=5 // pred_check_branch
      %170 = sbr.rel (%p168) target = $region24
    $region23: #{basic_block_forward.5} parent=5 // pred_region
      // Predicated region
      $region25: #{basic_block_forward.5} parent=23 // pred_check
        %p171 = pneg %p42
      $region26: #{basic_block_forward.5} parent=23 // pred_check_branch
        %173 = sbr.rel (%p171) target = $region28
      $region27: #{basic_block_forward.5} parent=23 // pred_region
        %p174 = scmp.lt.s32.totalorder %s17, 1
        %s175 = scalar_select %p174, %s17, 1
        %s176 = smul.addr %s175, 14
        %s177 = smul.addr %s176, 4
        %s178 = scalar_lea.vmem %s0, %s177
      $region28: #{basic_block_forward.5} parent=23 // pred_fallthru
        _
      // Predicated region
      $region29: #{basic_block_forward.5} parent=23 // pred_check
        %p179 = pneg %p112
      $region30: #{basic_block_forward.5} parent=23 // pred_check_branch
        %181 = sbr.rel (%p179) target = $region32
      $region31: #{basic_block_forward.5} parent=23 // pred_region
        %s182 = smul.u32 10, %s18
        %p183 = scmp.lt.s32.totalorder %s17, 1
        %s184 = scalar_select %p183, %s17, 1
        %p185 = scmp.lt.s32.totalorder %s182, 9
        %s186 = scalar_select %p185, %s182, 9
        %s187 = smul.addr %s184, 10
        %s188 = sadd.s32 %s186, %s187
        %s189 = smul.addr %s188, 4
        %s190 = scalar_lea.vmem %s3, %s189
        %s191 = smul.u32 10, %s18
      $region32: #{basic_block_forward.5} parent=23 // pred_fallthru
        _
    $region24: #{basic_block_forward.5} parent=5 // pred_fallthru
      _
    %p192 = scmp.le.s32.totalorder 1, %s10
    %p193 = scmp.lt.s32.totalorder %s10, 3
    %p194 = pnand %p192, %p193
    %p195 = pneg %p194
    // Predicated region
    $region33: #{basic_block_forward.5} parent=5 // pred_check
      _
    $region34: #{basic_block_forward.5} parent=5 // pred_check_branch
      %197 = sbr.rel (%p194) target = $region36
    $region35: #{basic_block_forward.5} parent=5 // pred_region
      %s198 = ssub.s32 %s10, 1
      %p199 = scmp.lt.s32.totalorder %s19, 1
      %s200 = scalar_select %p199, %s19, 1
      %s201 = smul.addr %s200, 14
      %s202 = smul.addr %s201, 4
      %s203 = scalar_lea.vmem %s0, %s202
      %p204 = pneg %p48
      %p205 = pneg %p45
      %p206 = pneg %p69
      %p207 = pneg %p66
      %p208 = pneg %p90
      %p209 = pneg %p87
      %s210 = smul.u32 10, %s20
      %p211 = scmp.lt.s32.totalorder %s19, 1
      %s212 = scalar_select %p211, %s19, 1
      %p213 = scmp.lt.s32.totalorder %s210, 9
      %s214 = scalar_select %p213, %s210, 9
      %s215 = smul.addr %s212, 10
      %s216 = sadd.s32 %s214, %s215
      %s217 = smul.addr %s216, 4
      %s218 = scalar_lea.vmem %s3, %s217
      %p219 = pneg %p118
      %p220 = pneg %p115
      %p221 = pneg %p146
      %p222 = pneg %p143
      %s223 = smul.u32 10, %s20
      %p224 = scmp.lt.s32.totalorder %s19, 1
      %s225 = scalar_select %p224, %s19, 1
      %p226 = scmp.lt.s32.totalorder %s223, 9
      %s227 = scalar_select %p226, %s223, 9
      %s228 = smul.addr %s225, 10
      %s229 = sadd.s32 %s227, %s228
      %s230 = smul.addr %s229, 8
      %s231 = scalar_lea.vmem %s4, %s230
      %p232 = scmp.lt.s32.totalorder %s19, 1
      %s233 = scalar_select %p232, %s19, 1
      %s234 = smul.addr %s233, 14
      %s235 = smul.addr %s234, 4
      %s236 = scalar_lea.vmem %s0, %s235
      %s237 = smul.u32 10, %s20
      %p238 = scmp.lt.s32.totalorder %s19, 1
      %s239 = scalar_select %p238, %s19, 1
      %p240 = scmp.lt.s32.totalorder %s237, 9
      %s241 = scalar_select %p240, %s237, 9
      %s242 = smul.addr %s239, 10
      %s243 = sadd.s32 %s241, %s242
      %s244 = smul.addr %s243, 4
      %s245 = scalar_lea.vmem %s3, %s244
      %s246 = smul.u32 10, %s20
      %s247 = smul.u32 10, %s20
      %p248 = scmp.lt.s32.totalorder %s19, 1
      %s249 = scalar_select %p248, %s19, 1
      %p250 = scmp.lt.s32.totalorder %s247, 9
      %s251 = scalar_select %p250, %s247, 9
      %s252 = smul.addr %s249, 10
      %s253 = sadd.s32 %s251, %s252
      %s254 = smul.addr %s253, 8
      %s255 = scalar_lea.vmem %s4, %s254
      %s256 = smul.u32 10, %s20
      %v258 = vld [vmem:[%s236] sm:$0xf]
      %v259 = vld [vmem:[%s236 + $0x4] sm:$0xf]
      %v260 = vld [vmem:[%s236 + $0x8] sm:$0xf]
      %v261 = vld [vmem:[%s236 + $0xc] sm:$0xf]
      %v262 = vld [vmem:[%s236 + $0x10] sm:$0xf]
      %v263 = vld [vmem:[%s236 + $0x14] sm:$0xf]
      %v264 = vld [vmem:[%s236 + $0x18] sm:$0xf]
      %v265 = vld [vmem:[%s236 + $0x1c] sm:$0xf]
      %v266 = vld [vmem:[%s236 + $0x20] sm:$0xf]
      %v267 = vld [vmem:[%s236 + $0x24] sm:$0xf]
      %v268 = vld [vmem:[%s1] sm:$0xf]
      %v269 = vld [vmem:[%s236 + $0x28] sm:$0x1]
      %s270 = scalar_lea.vmem %s1, 4
      %v271 = vld [vmem:[%s270] sm:$0xf]
      %v283 = vunpack.c.l.b16 %v258
      %v284 = vunpack.c.l.b16 %v259
      %v285 = vunpack.c.l.b16 %v260
      %v286 = vunpack.c.l.b16 %v261
      %v287 = vunpack.c.l.b16 %v262
      %v288 = vunpack.c.l.b16 %v263
      %v289 = vunpack.c.l.b16 %v264
      %v290 = vunpack.c.l.b16 %v265
      %v291 = vunpack.c.l.b16 %v266
      %v292 = vunpack.c.l.b16 %v267
      %v293 = vunpack.c.l.b16 %v269
      %v294 = vpack.c.b16 %v284, %v283
      %v295 = vpack.c.b16 %v286, %v285
      %v296 = vpack.c.b16 %v288, %v287
      %v297 = vpack.c.b16 %v290, %v289
      %v298 = vpack.c.b16 %v292, %v291
      %v299 = vpack.c.b16 %v293, %v293
      %vm300 = vsmask.f32 7424
      %v302 = vshrl.u32 %v294, 16
      %v304 = vshll.u32 %v294, 16
      %v306 = vrot.slane %v304, 1
      %v307 = vor.u32 %v302, %v306
      %v309 = vshll.u32 %v295, 16
      %v311 = vrot.slane %v309, 1
      %v312 = vsel %vm300, %v307, %v311
      %v313 = vshrl.u32 %v295, 16
      %v315 = vor.u32 %v313, %v311
      %v317 = vshll.u32 %v296, 16
      %v319 = vrot.slane %v317, 1
      %v320 = vsel %vm300, %v315, %v319
      %v321 = vshrl.u32 %v296, 16
      %v323 = vor.u32 %v321, %v319
      %v325 = vshll.u32 %v297, 16
      %v327 = vrot.slane %v325, 1
      %v328 = vsel %vm300, %v323, %v327
      %v329 = vshrl.u32 %v297, 16
      %v331 = vor.u32 %v329, %v327
      %v333 = vshll.u32 %v298, 16
      %v335 = vrot.slane %v333, 1
      %v336 = vsel %vm300, %v331, %v335
      %v337 = vshrl.u32 %v298, 16
      %v339 = vor.u32 %v337, %v335
      %v341 = vshll.u32 %v299, 16
      %v343 = vrot.slane %v341, 1
      %v344 = vsel %vm300, %v339, %v343
      %vm345 = vcmask 64512
      %v347 = vsel %vm345, %v312, 0
      %v350 = vsel %vm345, %v320, 0
      %v353 = vsel %vm345, %v328, 0
      %v356 = vsel %vm345, %v336, 0
      %v359 = vsel %vm345, %v344, 0
      %vm361 = vcmask 1043456
      %v363 = vsel %vm361, %v271, 0
      %365 = vmatprep.subr.bf16.mxu0 0
      %366 = vmatpush1.bf16.msra.mxu0 %v363
      %367 = vmatprep.subr.bf16.mxu0 0
      %368 = vmatpush1.bf16.msra.mxu0 0
      %369 = vmatprep.subr.bf16.mxu0 0
      %370 = vmatpush1.bf16.msra.mxu0 0
      %371 = vmatprep.subr.bf16.mxu0 0
      %372 = vmatpush1.bf16.msra.mxu0 0
      %373 = vmatprep.subr.bf16.mxu0 0
      %374 = vmatpush1.bf16.msra.mxu0 0
      %375 = vmatprep.subr.bf16.mxu0 0
      %376 = vmatpush1.bf16.msra.mxu0 0
      %377 = vmatprep.subr.bf16.mxu0 0
      %378 = vmatpush1.bf16.msra.mxu0 0
      %379 = vmatprep.subr.bf16.mxu0 0
      %380 = vmatpush1.bf16.msra.mxu0 0
      %381 = vmatprep.subr.bf16.mxu0 0
      %382 = vmatpush1.bf16.msra.mxu0 0
      %383 = vmatprep.subr.bf16.mxu0 0
      %384 = vmatpush1.bf16.msra.mxu0 0
      %385 = vmatprep.subr.bf16.mxu0 0
      %386 = vmatpush1.bf16.msra.mxu0 0
      %387 = vmatprep.subr.bf16.mxu0 0
      %388 = vmatpush1.bf16.msra.mxu0 0
      %389 = vmatprep.subr.bf16.mxu0 0
      %390 = vmatpush1.bf16.msra.mxu0 0
      %391 = vmatprep.subr.bf16.mxu0 0
      %392 = vmatpush1.bf16.msra.mxu0 0
      %393 = vmatprep.subr.bf16.mxu0 0
      %394 = vmatpush1.bf16.msra.mxu0 0
      %395 = vmatprep.subr.bf16.mxu0 0
      %396 = vmatpush1.bf16.msra.mxu0 0
      %397 = vmatprep.mubr.bf16.mxu0 0
      %398 = vmatmul.mubr.bf16.gmra.mrb[0].mxu0 %v347
      %v399 = vpop.f32.mrb[0].mxu0
      %v400 = vadd.f32 0.0, %v399
      %v401 = vpop.f32.mrb[0].mxu0
      %v402 = vpop.f32.mrb[0].mxu0
      %v403 = vadd.f32 0.0, %v402
      %v404 = vpop.f32.mrb[0].mxu0
      %405 = vmatprep.mubr.bf16.mxu0 0
      %406 = vmatmul.mubr.bf16.gmra.mrb[0].mxu0 %v350
      %v407 = vpop.f32.mrb[0].mxu0
      %v408 = vadd.f32 0.0, %v407
      %v409 = vpop.f32.mrb[0].mxu0
      %v410 = vpop.f32.mrb[0].mxu0
      %v411 = vadd.f32 0.0, %v410
      %v412 = vpop.f32.mrb[0].mxu0
      %413 = vmatprep.mubr.bf16.mxu0 0
      %414 = vmatmul.mubr.bf16.gmra.mrb[0].mxu0 %v353
      %v415 = vpop.f32.mrb[0].mxu0
      %v416 = vadd.f32 0.0, %v415
      %v417 = vpop.f32.mrb[0].mxu0
      %v418 = vpop.f32.mrb[0].mxu0
      %v419 = vadd.f32 0.0, %v418
      %v420 = vpop.f32.mrb[0].mxu0
      %421 = vmatprep.mubr.bf16.mxu0 0
      %422 = vmatmul.mubr.bf16.gmra.mrb[0].mxu0 %v356
      %v423 = vpop.f32.mrb[0].mxu0
      %v424 = vadd.f32 0.0, %v423
      %v425 = vpop.f32.mrb[0].mxu0
      %v426 = vpop.f32.mrb[0].mxu0
      %v427 = vadd.f32 0.0, %v426
      %v428 = vpop.f32.mrb[0].mxu0
      %429 = vmatprep.mubr.bf16.mxu0 0
      %430 = vmatmul.mubr.bf16.gmra.mrb[0].mxu0 %v359
      %v431 = vpop.f32.mrb[0].mxu0
      %v432 = vadd.f32 0.0, %v431
      %v433 = vpop.f32.mrb[0].mxu0
      %v434 = vpop.f32.mrb[0].mxu0
      %v435 = vadd.f32 0.0, %v434
      %v436 = vpop.f32.mrb[0].mxu0
      %437 = vdwg.mxu0
      %v438 = vsel %vm345, %v294, 0
      %v440 = vsel %vm345, %v295, 0
      %v442 = vsel %vm345, %v296, 0
      %v444 = vsel %vm345, %v297, 0
      %v446 = vsel %vm345, %v298, 0
      %v449 = vsel %vm361, %v268, 0
      %451 = vmatprep.subr.bf16.mxu0 0
      %452 = vmatpush1.bf16.msra.mxu0 %v449
      %453 = vmatprep.subr.bf16.mxu0 0
      %454 = vmatpush1.bf16.msra.mxu0 0
      %455 = vmatprep.subr.bf16.mxu0 0
      %456 = vmatpush1.bf16.msra.mxu0 0
      %457 = vmatprep.subr.bf16.mxu0 0
      %458 = vmatpush1.bf16.msra.mxu0 0
      %459 = vmatprep.subr.bf16.mxu0 0
      %460 = vmatpush1.bf16.msra.mxu0 0
      %461 = vmatprep.subr.bf16.mxu0 0
      %462 = vmatpush1.bf16.msra.mxu0 0
      %463 = vmatprep.subr.bf16.mxu0 0
      %464 = vmatpush1.bf16.msra.mxu0 0
      %465 = vmatprep.subr.bf16.mxu0 0
      %466 = vmatpush1.bf16.msra.mxu0 0
      %467 = vmatprep.subr.bf16.mxu0 0
      %468 = vmatpush1.bf16.msra.mxu0 0
      %469 = vmatprep.subr.bf16.mxu0 0
      %470 = vmatpush1.bf16.msra.mxu0 0
      %471 = vmatprep.subr.bf16.mxu0 0
      %472 = vmatpush1.bf16.msra.mxu0 0
      %473 = vmatprep.subr.bf16.mxu0 0
      %474 = vmatpush1.bf16.msra.mxu0 0
      %475 = vmatprep.subr.bf16.mxu0 0
      %476 = vmatpush1.bf16.msra.mxu0 0
      %477 = vmatprep.subr.bf16.mxu0 0
      %478 = vmatpush1.bf16.msra.mxu0 0
      %479 = vmatprep.subr.bf16.mxu0 0
      %480 = vmatpush1.bf16.msra.mxu0 0
      %481 = vmatprep.subr.bf16.mxu0 0
      %482 = vmatpush1.bf16.msra.mxu0 0
      %483 = vmatprep.mubr.bf16.mxu0 0
      %484 = vmatmul.mubr.bf16.gmra.mrb[0].mxu0 %v438
      %v485 = vpop.f32.mrb[0].mxu0
      %v486 = vadd.f32 %v400, %v485
      %v487 = vpop.f32.mrb[0].mxu0
      %v488 = vpop.f32.mrb[0].mxu0
      %v489 = vadd.f32 %v403, %v488
      %v490 = vpop.f32.mrb[0].mxu0
      %491 = vmatprep.mubr.bf16.mxu0 0
      %492 = vmatmul.mubr.bf16.gmra.mrb[0].mxu0 %v440
      %v493 = vpop.f32.mrb[0].mxu0
      %v494 = vadd.f32 %v408, %v493
      %v495 = vpop.f32.mrb[0].mxu0
      %v496 = vpop.f32.mrb[0].mxu0
      %v497 = vadd.f32 %v411, %v496
      %v498 = vpop.f32.mrb[0].mxu0
      %499 = vmatprep.mubr.bf16.mxu0 0
      %500 = vmatmul.mubr.bf16.gmra.mrb[0].mxu0 %v442
      %v501 = vpop.f32.mrb[0].mxu0
      %v502 = vadd.f32 %v416, %v501
      %v503 = vpop.f32.mrb[0].mxu0
      %v504 = vpop.f32.mrb[0].mxu0
      %v505 = vadd.f32 %v419, %v504
      %v506 = vpop.f32.mrb[0].mxu0
      %507 = vmatprep.mubr.bf16.mxu0 0
      %508 = vmatmul.mubr.bf16.gmra.mrb[0].mxu0 %v444
      %v509 = vpop.f32.mrb[0].mxu0
      %v510 = vadd.f32 %v424, %v509
      %v511 = vpop.f32.mrb[0].mxu0
      %v512 = vpop.f32.mrb[0].mxu0
      %v513 = vadd.f32 %v427, %v512
      %v514 = vpop.f32.mrb[0].mxu0
      %515 = vmatprep.mubr.bf16.mxu0 0
      %516 = vmatmul.mubr.bf16.gmra.mrb[0].mxu0 %v446
      %v517 = vpop.f32.mrb[0].mxu0
      %v518 = vadd.f32 %v432, %v517
      %v519 = vpop.f32.mrb[0].mxu0
      %v520 = vpop.f32.mrb[0].mxu0
      %v521 = vadd.f32 %v435, %v520
      %v522 = vpop.f32.mrb[0].mxu0
      %523 = vdwg.mxu0
      %v524 = vld [vmem:[%s236] sm:$0xe]
      %s525 = scalar_lea.vmem %s1, 8
      %v526 = vld [vmem:[%s525] sm:$0xf]
      %v528 = vunpack.c.l.b16 %v524
      %v529 = vpack.c.b16 %v284, %v528
      %vm530 = vcmask 1046528
      %v531 = vrot.slane %v529, 1
      %v532 = vrot.slane %v295, 1
      %v533 = vsel %vm530, %v531, %v532
      %v534 = vrot.slane %v296, 1
      %v535 = vsel %vm530, %v532, %v534
      %v536 = vrot.slane %v297, 1
      %v537 = vsel %vm530, %v534, %v536
      %v538 = vrot.slane %v298, 1
      %v539 = vsel %vm530, %v536, %v538
      %v540 = vrot.slane %v299, 1
      %v541 = vsel %vm530, %v538, %v540
      %v543 = vsel %vm345, %v533, 0
      %v546 = vsel %vm345, %v535, 0
      %v549 = vsel %vm345, %v537, 0
      %v552 = vsel %vm345, %v539, 0
      %v555 = vsel %vm345, %v541, 0
      %v558 = vsel %vm361, %v526, 0
      %560 = vmatprep.subr.bf16.mxu0 0
      %561 = vmatpush1.bf16.msra.mxu0 %v558
      %562 = vmatprep.subr.bf16.mxu0 0
      %563 = vmatpush1.bf16.msra.mxu0 0
      %564 = vmatprep.subr.bf16.mxu0 0
      %565 = vmatpush1.bf16.msra.mxu0 0
      %566 = vmatprep.subr.bf16.mxu0 0
      %567 = vmatpush1.bf16.msra.mxu0 0
      %568 = vmatprep.subr.bf16.mxu0 0
      %569 = vmatpush1.bf16.msra.mxu0 0
      %570 = vmatprep.subr.bf16.mxu0 0
      %571 = vmatpush1.bf16.msra.mxu0 0
      %572 = vmatprep.subr.bf16.mxu0 0
      %573 = vmatpush1.bf16.msra.mxu0 0
      %574 = vmatprep.subr.bf16.mxu0 0
      %575 = vmatpush1.bf16.msra.mxu0 0
      %576 = vmatprep.subr.bf16.mxu0 0
      %577 = vmatpush1.bf16.msra.mxu0 0
      %578 = vmatprep.subr.bf16.mxu0 0
      %579 = vmatpush1.bf16.msra.mxu0 0
      %580 = vmatprep.subr.bf16.mxu0 0
      %581 = vmatpush1.bf16.msra.mxu0 0
      %582 = vmatprep.subr.bf16.mxu0 0
      %583 = vmatpush1.bf16.msra.mxu0 0
      %584 = vmatprep.subr.bf16.mxu0 0
      %585 = vmatpush1.bf16.msra.mxu0 0
      %586 = vmatprep.subr.bf16.mxu0 0
      %587 = vmatpush1.bf16.msra.mxu0 0
      %588 = vmatprep.subr.bf16.mxu0 0
      %589 = vmatpush1.bf16.msra.mxu0 0
      %590 = vmatprep.subr.bf16.mxu0 0
      %591 = vmatpush1.bf16.msra.mxu0 0
      %592 = vmatprep.mubr.bf16.mxu0 0
      %593 = vmatmul.mubr.bf16.gmra.mrb[0].mxu0 %v543
      %v594 = vpop.f32.mrb[0].mxu0
      %v595 = vadd.f32 0.0, %v594
      %v596 = vpop.f32.mrb[0].mxu0
      %v597 = vpop.f32.mrb[0].mxu0
      %v598 = vadd.f32 0.0, %v597
      %v599 = vpop.f32.mrb[0].mxu0
      %600 = vmatprep.mubr.bf16.mxu0 0
      %601 = vmatmul.mubr.bf16.gmra.mrb[0].mxu0 %v546
      %v602 = vpop.f32.mrb[0].mxu0
      %v603 = vadd.f32 0.0, %v602
      %v604 = vpop.f32.mrb[0].mxu0
      %v605 = vpop.f32.mrb[0].mxu0
      %v606 = vadd.f32 0.0, %v605
      %v607 = vpop.f32.mrb[0].mxu0
      %608 = vmatprep.mubr.bf16.mxu0 0
      %609 = vmatmul.mubr.bf16.gmra.mrb[0].mxu0 %v549
      %v610 = vpop.f32.mrb[0].mxu0
      %v611 = vadd.f32 0.0, %v610
      %v612 = vpop.f32.mrb[0].mxu0
      %v613 = vpop.f32.mrb[0].mxu0
      %v614 = vadd.f32 0.0, %v613
      %v615 = vpop.f32.mrb[0].mxu0
      %616 = vmatprep.mubr.bf16.mxu0 0
      %617 = vmatmul.mubr.bf16.gmra.mrb[0].mxu0 %v552
      %v618 = vpop.f32.mrb[0].mxu0
      %v619 = vadd.f32 0.0, %v618
      %v620 = vpop.f32.mrb[0].mxu0
      %v621 = vpop.f32.mrb[0].mxu0
      %v622 = vadd.f32 0.0, %v621
      %v623 = vpop.f32.mrb[0].mxu0
      %624 = vmatprep.mubr.bf16.mxu0 0
      %625 = vmatmul.mubr.bf16.gmra.mrb[0].mxu0 %v555
      %v626 = vpop.f32.mrb[0].mxu0
      %v627 = vadd.f32 0.0, %v626
      %v628 = vpop.f32.mrb[0].mxu0
      %v629 = vpop.f32.mrb[0].mxu0
      %v630 = vadd.f32 0.0, %v629
      %v631 = vpop.f32.mrb[0].mxu0
      %632 = vdwg.mxu0
      %v633 = vadd.f32 %v486, %v595
      %v634 = vadd.f32 %v489, %v598
      %v635 = vadd.f32 %v494, %v603
      %v636 = vadd.f32 %v497, %v606
      %v637 = vadd.f32 %v502, %v611
      %v638 = vadd.f32 %v505, %v614
      %v639 = vadd.f32 %v510, %v619
      %v640 = vadd.f32 %v513, %v622
      %v641 = vadd.f32 %v518, %v627
      %v642 = vadd.f32 %v521, %v630
      %v643 = vld [vmem:[%s236 + $0x4] sm:$0xe]
      %v644 = vld [vmem:[%s236 + $0x8] sm:$0xf]
      %v645 = vld [vmem:[%s236 + $0xc] sm:$0xf]
      %v646 = vld [vmem:[%s236 + $0x10] sm:$0xf]
      %v647 = vld [vmem:[%s236 + $0x14] sm:$0xf]
      %v648 = vld [vmem:[%s236 + $0x18] sm:$0xf]
      %v649 = vld [vmem:[%s236 + $0x1c] sm:$0xf]
      %v650 = vld [vmem:[%s236 + $0x20] sm:$0xf]
      %v651 = vld [vmem:[%s236 + $0x24] sm:$0xf]
      %v652 = vld [vmem:[%s236 + $0x28] sm:$0xf]
      %v653 = vld [vmem:[%s236 + $0x2c] sm:$0x1]
      %s654 = scalar_lea.vmem %s1, 12
      %v655 = vld [vmem:[%s654] sm:$0xf]
      %v667 = vunpack.c.l.b16 %v643
      %v668 = vunpack.c.l.b16 %v644
      %v669 = vunpack.c.l.b16 %v645
      %v670 = vunpack.c.l.b16 %v646
      %v671 = vunpack.c.l.b16 %v647
      %v672 = vunpack.c.l.b16 %v648
      %v673 = vunpack.c.l.b16 %v649
      %v674 = vunpack.c.l.b16 %v650
      %v675 = vunpack.c.l.b16 %v651
      %v676 = vunpack.c.l.b16 %v652
      %v677 = vunpack.c.l.b16 %v653
      %v678 = vpack.c.b16 %v668, %v667
      %v679 = vpack.c.b16 %v670, %v669
      %v680 = vpack.c.b16 %v672, %v671
      %v681 = vpack.c.b16 %v674, %v673
      %v682 = vpack.c.b16 %v676, %v675
      %v683 = vpack.c.b16 %v677, %v677
      %v684 = vrot.slane %v678, 1
      %v685 = vrot.slane %v679, 1
      %v686 = vsel %vm530, %v684, %v685
      %v687 = vrot.slane %v680, 1
      %v688 = vsel %vm530, %v685, %v687
      %v689 = vrot.slane %v681, 1
      %v690 = vsel %vm530, %v687, %v689
      %v691 = vrot.slane %v682, 1
      %v692 = vsel %vm530, %v689, %v691
      %v693 = vrot.slane %v683, 1
      %v694 = vsel %vm530, %v691, %v693
      %v696 = vsel %vm345, %v686, 0
      %v699 = vsel %vm345, %v688, 0
      %v702 = vsel %vm345, %v690, 0
      %v705 = vsel %vm345, %v692, 0
      %v708 = vsel %vm345, %v694, 0
      %v711 = vsel %vm361, %v655, 0
      %713 = vmatprep.subr.bf16.mxu0 0
      %714 = vmatpush1.bf16.msra.mxu0 %v711
      %715 = vmatprep.subr.bf16.mxu0 0
      %716 = vmatpush1.bf16.msra.mxu0 0
      %717 = vmatprep.subr.bf16.mxu0 0
      %718 = vmatpush1.bf16.msra.mxu0 0
      %719 = vmatprep.subr.bf16.mxu0 0
      %720 = vmatpush1.bf16.msra.mxu0 0
      %721 = vmatprep.subr.bf16.mxu0 0
      %722 = vmatpush1.bf16.msra.mxu0 0
      %723 = vmatprep.subr.bf16.mxu0 0
      %724 = vmatpush1.bf16.msra.mxu0 0
      %725 = vmatprep.subr.bf16.mxu0 0
      %726 = vmatpush1.bf16.msra.mxu0 0
      %727 = vmatprep.subr.bf16.mxu0 0
      %728 = vmatpush1.bf16.msra.mxu0 0
      %729 = vmatprep.subr.bf16.mxu0 0
      %730 = vmatpush1.bf16.msra.mxu0 0
      %731 = vmatprep.subr.bf16.mxu0 0
      %732 = vmatpush1.bf16.msra.mxu0 0
      %733 = vmatprep.subr.bf16.mxu0 0
      %734 = vmatpush1.bf16.msra.mxu0 0
      %735 = vmatprep.subr.bf16.mxu0 0
      %736 = vmatpush1.bf16.msra.mxu0 0
      %737 = vmatprep.subr.bf16.mxu0 0
      %738 = vmatpush1.bf16.msra.mxu0 0
      %739 = vmatprep.subr.bf16.mxu0 0
      %740 = vmatpush1.bf16.msra.mxu0 0
      %741 = vmatprep.subr.bf16.mxu0 0
      %742 = vmatpush1.bf16.msra.mxu0 0
      %743 = vmatprep.subr.bf16.mxu0 0
      %744 = vmatpush1.bf16.msra.mxu0 0
      %745 = vmatprep.mubr.bf16.mxu0 0
      %746 = vmatmul.mubr.bf16.gmra.mrb[0].mxu0 %v696
      %v747 = vpop.f32.mrb[0].mxu0
      %v748 = vadd.f32 0.0, %v747
      %v749 = vpop.f32.mrb[0].mxu0
      %v750 = vpop.f32.mrb[0].mxu0
      %v751 = vadd.f32 0.0, %v750
      %v752 = vpop.f32.mrb[0].mxu0
      %753 = vmatprep.mubr.bf16.mxu0 0
      %754 = vmatmul.mubr.bf16.gmra.mrb[0].mxu0 %v699
      %v755 = vpop.f32.mrb[0].mxu0
      %v756 = vadd.f32 0.0, %v755
      %v757 = vpop.f32.mrb[0].mxu0
      %v758 = vpop.f32.mrb[0].mxu0
      %v759 = vadd.f32 0.0, %v758
      %v760 = vpop.f32.mrb[0].mxu0
      %761 = vmatprep.mubr.bf16.mxu0 0
      %762 = vmatmul.mubr.bf16.gmra.mrb[0].mxu0 %v702
      %v763 = vpop.f32.mrb[0].mxu0
      %v764 = vadd.f32 0.0, %v763
      %v765 = vpop.f32.mrb[0].mxu0
      %v766 = vpop.f32.mrb[0].mxu0
      %v767 = vadd.f32 0.0, %v766
      %v768 = vpop.f32.mrb[0].mxu0
      %769 = vmatprep.mubr.bf16.mxu0 0
      %770 = vmatmul.mubr.bf16.gmra.mrb[0].mxu0 %v705
      %v771 = vpop.f32.mrb[0].mxu0
      %v772 = vadd.f32 0.0, %v771
      %v773 = vpop.f32.mrb[0].mxu0
      %v774 = vpop.f32.mrb[0].mxu0
      %v775 = vadd.f32 0.0, %v774
      %v776 = vpop.f32.mrb[0].mxu0
      %777 = vmatprep.mubr.bf16.mxu0 0
      %778 = vmatmul.mubr.bf16.gmra.mrb[0].mxu0 %v708
      %v779 = vpop.f32.mrb[0].mxu0
      %v780 = vadd.f32 0.0, %v779
      %v781 = vpop.f32.mrb[0].mxu0
      %v782 = vpop.f32.mrb[0].mxu0
      %v783 = vadd.f32 0.0, %v782
      %v784 = vpop.f32.mrb[0].mxu0
      %785 = vdwg.mxu0
      %v786 = vadd.f32 %v633, %v748
      %v787 = vadd.f32 %v634, %v751
      %v788 = vadd.f32 %v635, %v756
      %v789 = vadd.f32 %v636, %v759
      %v790 = vadd.f32 %v637, %v764
      %v791 = vadd.f32 %v638, %v767
      %v792 = vadd.f32 %v639, %v772
      %v793 = vadd.f32 %v640, %v775
      %v794 = vadd.f32 %v641, %v780
      %v795 = vadd.f32 %v642, %v783
      %v796 = vld [vmem:[%s236 + $0x2c] sm:$0x3]
      %s797 = scalar_lea.vmem %s1, 16
      %v798 = vld [vmem:[%s797] sm:$0xf]
      %v800 = vunpack.c.l.b16 %v796
      %v801 = vpack.c.b16 %v800, %v800
      %vm802 = vsmask.f32 6400
      %v804 = vshrl.u32 %v678, 16
      %v806 = vrot.slane %v804, 1
      %v807 = vshll.u32 %v678, 16
      %v809 = vrot.slane %v807, 2
      %v810 = vor.u32 %v806, %v809
      %v812 = vshrl.u32 %v679, 16
      %v814 = vrot.slane %v812, 1
      %v815 = vshll.u32 %v679, 16
      %v817 = vrot.slane %v815, 2
      %v818 = vor.u32 %v814, %v817
      %v819 = vsel %vm802, %v810, %v818
      %v821 = vshrl.u32 %v680, 16
      %v823 = vrot.slane %v821, 1
      %v824 = vshll.u32 %v680, 16
      %v826 = vrot.slane %v824, 2
      %v827 = vor.u32 %v823, %v826
      %v828 = vsel %vm802, %v818, %v827
      %v830 = vshrl.u32 %v681, 16
      %v832 = vrot.slane %v830, 1
      %v833 = vshll.u32 %v681, 16
      %v835 = vrot.slane %v833, 2
      %v836 = vor.u32 %v832, %v835
      %v837 = vsel %vm802, %v827, %v836
      %v839 = vshrl.u32 %v682, 16
      %v841 = vrot.slane %v839, 1
      %v842 = vshll.u32 %v682, 16
      %v844 = vrot.slane %v842, 2
      %v845 = vor.u32 %v841, %v844
      %v846 = vsel %vm802, %v836, %v845
      %v848 = vshrl.u32 %v801, 16
      %v850 = vrot.slane %v848, 1
      %v851 = vshll.u32 %v801, 16
      %v853 = vrot.slane %v851, 2
      %v854 = vor.u32 %v850, %v853
      %v855 = vsel %vm802, %v845, %v854
      %v857 = vsel %vm345, %v819, 0
      %v860 = vsel %vm345, %v828, 0
      %v863 = vsel %vm345, %v837, 0
      %v866 = vsel %vm345, %v846, 0
      %v869 = vsel %vm345, %v855, 0
      %v872 = vsel %vm361, %v798, 0
      %874 = vmatprep.subr.bf16.mxu0 0
      %875 = vmatpush1.bf16.msra.mxu0 %v872
      %876 = vmatprep.subr.bf16.mxu0 0
      %877 = vmatpush1.bf16.msra.mxu0 0
      %878 = vmatprep.subr.bf16.mxu0 0
      %879 = vmatpush1.bf16.msra.mxu0 0
      %880 = vmatprep.subr.bf16.mxu0 0
      %881 = vmatpush1.bf16.msra.mxu0 0
      %882 = vmatprep.subr.bf16.mxu0 0
      %883 = vmatpush1.bf16.msra.mxu0 0
      %884 = vmatprep.subr.bf16.mxu0 0
      %885 = vmatpush1.bf16.msra.mxu0 0
      %886 = vmatprep.subr.bf16.mxu0 0
      %887 = vmatpush1.bf16.msra.mxu0 0
      %888 = vmatprep.subr.bf16.mxu0 0
      %889 = vmatpush1.bf16.msra.mxu0 0
      %890 = vmatprep.subr.bf16.mxu0 0
      %891 = vmatpush1.bf16.msra.mxu0 0
      %892 = vmatprep.subr.bf16.mxu0 0
      %893 = vmatpush1.bf16.msra.mxu0 0
      %894 = vmatprep.subr.bf16.mxu0 0
      %895 = vmatpush1.bf16.msra.mxu0 0
      %896 = vmatprep.subr.bf16.mxu0 0
      %897 = vmatpush1.bf16.msra.mxu0 0
      %898 = vmatprep.subr.bf16.mxu0 0
      %899 = vmatpush1.bf16.msra.mxu0 0
      %900 = vmatprep.subr.bf16.mxu0 0
      %901 = vmatpush1.bf16.msra.mxu0 0
      %902 = vmatprep.subr.bf16.mxu0 0
      %903 = vmatpush1.bf16.msra.mxu0 0
      %904 = vmatprep.subr.bf16.mxu0 0
      %905 = vmatpush1.bf16.msra.mxu0 0
      %906 = vmatprep.mubr.bf16.mxu0 0
      %907 = vmatmul.mubr.bf16.gmra.mrb[0].mxu0 %v857
      %v908 = vpop.f32.mrb[0].mxu0
      %v909 = vadd.f32 0.0, %v908
      %v910 = vpop.f32.mrb[0].mxu0
      %v911 = vpop.f32.mrb[0].mxu0
      %v912 = vadd.f32 0.0, %v911
      %v913 = vpop.f32.mrb[0].mxu0
      %914 = vmatprep.mubr.bf16.mxu0 0
      %915 = vmatmul.mubr.bf16.gmra.mrb[0].mxu0 %v860
      %v916 = vpop.f32.mrb[0].mxu0
      %v917 = vadd.f32 0.0, %v916
      %v918 = vpop.f32.mrb[0].mxu0
      %v919 = vpop.f32.mrb[0].mxu0
      %v920 = vadd.f32 0.0, %v919
      %v921 = vpop.f32.mrb[0].mxu0
      %922 = vmatprep.mubr.bf16.mxu0 0
      %923 = vmatmul.mubr.bf16.gmra.mrb[0].mxu0 %v863
      %v924 = vpop.f32.mrb[0].mxu0
      %v925 = vadd.f32 0.0, %v924
      %v926 = vpop.f32.mrb[0].mxu0
      %v927 = vpop.f32.mrb[0].mxu0
      %v928 = vadd.f32 0.0, %v927
      %v929 = vpop.f32.mrb[0].mxu0
      %930 = vmatprep.mubr.bf16.mxu0 0
      %931 = vmatmul.mubr.bf16.gmra.mrb[0].mxu0 %v866
      %v932 = vpop.f32.mrb[0].mxu0
      %v933 = vadd.f32 0.0, %v932
      %v934 = vpop.f32.mrb[0].mxu0
      %v935 = vpop.f32.mrb[0].mxu0
      %v936 = vadd.f32 0.0, %v935
      %v937 = vpop.f32.mrb[0].mxu0
      %938 = vmatprep.mubr.bf16.mxu0 0
      %939 = vmatmul.mubr.bf16.gmra.mrb[0].mxu0 %v869
      %v940 = vpop.f32.mrb[0].mxu0
      %v941 = vadd.f32 0.0, %v940
      %v942 = vpop.f32.mrb[0].mxu0
      %v943 = vpop.f32.mrb[0].mxu0
      %v944 = vadd.f32 0.0, %v943
      %v945 = vpop.f32.mrb[0].mxu0
      %946 = vdwg.mxu0
      %v947 = vadd.f32 %v786, %v909
      %v948 = vadd.f32 %v787, %v912
      %v949 = vadd.f32 %v788, %v917
      %v950 = vadd.f32 %v789, %v920
      %v951 = vadd.f32 %v790, %v925
      %v952 = vadd.f32 %v791, %v928
      %v953 = vadd.f32 %v792, %v933
      %v954 = vadd.f32 %v793, %v936
      %v955 = vadd.f32 %v794, %v941
      %v956 = vadd.f32 %v795, %v944
      %v957 = vld [vmem:[%s236 + $0x4] sm:$0xc]
      %s958 = scalar_lea.vmem %s1, 20
      %v959 = vld [vmem:[%s958] sm:$0xf]
      %v961 = vunpack.c.l.b16 %v957
      %v962 = vpack.c.b16 %v668, %v961
      %vm963 = vcmask 1045504
      %v964 = vrot.slane %v962, 2
      %v965 = vrot.slane %v679, 2
      %v966 = vsel %vm963, %v964, %v965
      %v967 = vrot.slane %v680, 2
      %v968 = vsel %vm963, %v965, %v967
      %v969 = vrot.slane %v681, 2
      %v970 = vsel %vm963, %v967, %v969
      %v971 = vrot.slane %v682, 2
      %v972 = vsel %vm963, %v969, %v971
      %v973 = vrot.slane %v801, 2
      %v974 = vsel %vm963, %v971, %v973
      %v976 = vsel %vm345, %v966, 0
      %v979 = vsel %vm345, %v968, 0
      %v982 = vsel %vm345, %v970, 0
      %v985 = vsel %vm345, %v972, 0
      %v988 = vsel %vm345, %v974, 0
      %v991 = vsel %vm361, %v959, 0
      %993 = vmatprep.subr.bf16.mxu0 0
      %994 = vmatpush1.bf16.msra.mxu0 %v991
      %995 = vmatprep.subr.bf16.mxu0 0
      %996 = vmatpush1.bf16.msra.mxu0 0
      %997 = vmatprep.subr.bf16.mxu0 0
      %998 = vmatpush1.bf16.msra.mxu0 0
      %999 = vmatprep.subr.bf16.mxu0 0
      %1000 = vmatpush1.bf16.msra.mxu0 0
      %1001 = vmatprep.subr.bf16.mxu0 0
      %1002 = vmatpush1.bf16.msra.mxu0 0
      %1003 = vmatprep.subr.bf16.mxu0 0
      %1004 = vmatpush1.bf16.msra.mxu0 0
      %1005 = vmatprep.subr.bf16.mxu0 0
      %1006 = vmatpush1.bf16.msra.mxu0 0
      %1007 = vmatprep.subr.bf16.mxu0 0
      %1008 = vmatpush1.bf16.msra.mxu0 0
      %1009 = vmatprep.subr.bf16.mxu0 0
      %1010 = vmatpush1.bf16.msra.mxu0 0
      %1011 = vmatprep.subr.bf16.mxu0 0
      %1012 = vmatpush1.bf16.msra.mxu0 0
      %1013 = vmatprep.subr.bf16.mxu0 0
      %1014 = vmatpush1.bf16.msra.mxu0 0
      %1015 = vmatprep.subr.bf16.mxu0 0
      %1016 = vmatpush1.bf16.msra.mxu0 0
      %1017 = vmatprep.subr.bf16.mxu0 0
      %1018 = vmatpush1.bf16.msra.mxu0 0
      %1019 = vmatprep.subr.bf16.mxu0 0
      %1020 = vmatpush1.bf16.msra.mxu0 0
      %1021 = vmatprep.subr.bf16.mxu0 0
      %1022 = vmatpush1.bf16.msra.mxu0 0
      %1023 = vmatprep.subr.bf16.mxu0 0
      %1024 = vmatpush1.bf16.msra.mxu0 0
      %1025 = vmatprep.mubr.bf16.mxu0 0
      %1026 = vmatmul.mubr.bf16.gmra.mrb[0].mxu0 %v976
      %v1027 = vpop.f32.mrb[0].mxu0
      %v1028 = vadd.f32 0.0, %v1027
      %v1029 = vpop.f32.mrb[0].mxu0
      %v1030 = vpop.f32.mrb[0].mxu0
      %v1031 = vadd.f32 0.0, %v1030
      %v1032 = vpop.f32.mrb[0].mxu0
      %1033 = vmatprep.mubr.bf16.mxu0 0
      %1034 = vmatmul.mubr.bf16.gmra.mrb[0].mxu0 %v979
      %v1035 = vpop.f32.mrb[0].mxu0
      %v1036 = vadd.f32 0.0, %v1035
      %v1037 = vpop.f32.mrb[0].mxu0
      %v1038 = vpop.f32.mrb[0].mxu0
      %v1039 = vadd.f32 0.0, %v1038
      %v1040 = vpop.f32.mrb[0].mxu0
      %1041 = vmatprep.mubr.bf16.mxu0 0
      %1042 = vmatmul.mubr.bf16.gmra.mrb[0].mxu0 %v982
      %v1043 = vpop.f32.mrb[0].mxu0
      %v1044 = vadd.f32 0.0, %v1043
      %v1045 = vpop.f32.mrb[0].mxu0
      %v1046 = vpop.f32.mrb[0].mxu0
      %v1047 = vadd.f32 0.0, %v1046
      %v1048 = vpop.f32.mrb[0].mxu0
      %1049 = vmatprep.mubr.bf16.mxu0 0
      %1050 = vmatmul.mubr.bf16.gmra.mrb[0].mxu0 %v985
      %v1051 = vpop.f32.mrb[0].mxu0
      %v1052 = vadd.f32 0.0, %v1051
      %v1053 = vpop.f32.mrb[0].mxu0
      %v1054 = vpop.f32.mrb[0].mxu0
      %v1055 = vadd.f32 0.0, %v1054
      %v1056 = vpop.f32.mrb[0].mxu0
      %1057 = vmatprep.mubr.bf16.mxu0 0
      %1058 = vmatmul.mubr.bf16.gmra.mrb[0].mxu0 %v988
      %v1059 = vpop.f32.mrb[0].mxu0
      %v1060 = vadd.f32 0.0, %v1059
      %v1061 = vpop.f32.mrb[0].mxu0
      %v1062 = vpop.f32.mrb[0].mxu0
      %v1063 = vadd.f32 0.0, %v1062
      %v1064 = vpop.f32.mrb[0].mxu0
      %1065 = vdwg.mxu0
      %v1066 = vadd.f32 %v947, %v1028
      %v1067 = vadd.f32 %v948, %v1031
      %v1068 = vadd.f32 %v949, %v1036
      %v1069 = vadd.f32 %v950, %v1039
      %v1070 = vadd.f32 %v951, %v1044
      %v1071 = vadd.f32 %v952, %v1047
      %v1072 = vadd.f32 %v953, %v1052
      %v1073 = vadd.f32 %v954, %v1055
      %v1074 = vadd.f32 %v955, %v1060
      %v1075 = vadd.f32 %v956, %v1063
      %v1076 = vld [vmem:[%s236 + $0x8] sm:$0xc]
      %v1077 = vld [vmem:[%s236 + $0xc] sm:$0xf]
      %v1078 = vld [vmem:[%s236 + $0x10] sm:$0xf]
      %v1079 = vld [vmem:[%s236 + $0x14] sm:$0xf]
      %v1080 = vld [vmem:[%s236 + $0x18] sm:$0xf]
      %v1081 = vld [vmem:[%s236 + $0x1c] sm:$0xf]
      %v1082 = vld [vmem:[%s236 + $0x20] sm:$0xf]
      %v1083 = vld [vmem:[%s236 + $0x24] sm:$0xf]
      %v1084 = vld [vmem:[%s236 + $0x28] sm:$0xf]
      %v1085 = vld [vmem:[%s236 + $0x2c] sm:$0xf]
      %v1086 = vld [vmem:[%s236 + $0x30] sm:$0x3]
      %s1087 = scalar_lea.vmem %s1, 24
      %v1088 = vld [vmem:[%s1087] sm:$0xf]
      %v1100 = vunpack.c.l.b16 %v1076
      %v1101 = vunpack.c.l.b16 %v1077
      %v1102 = vunpack.c.l.b16 %v1078
      %v1103 = vunpack.c.l.b16 %v1079
      %v1104 = vunpack.c.l.b16 %v1080
      %v1105 = vunpack.c.l.b16 %v1081
      %v1106 = vunpack.c.l.b16 %v1082
      %v1107 = vunpack.c.l.b16 %v1083
      %v1108 = vunpack.c.l.b16 %v1084
      %v1109 = vunpack.c.l.b16 %v1085
      %v1110 = vunpack.c.l.b16 %v1086
      %v1111 = vpack.c.b16 %v1101, %v1100
      %v1112 = vpack.c.b16 %v1103, %v1102
      %v1113 = vpack.c.b16 %v1105, %v1104
      %v1114 = vpack.c.b16 %v1107, %v1106
      %v1115 = vpack.c.b16 %v1109, %v1108
      %v1116 = vpack.c.b16 %v1110, %v1110
      %v1117 = vrot.slane %v1111, 2
      %v1118 = vrot.slane %v1112, 2
      %v1119 = vsel %vm963, %v1117, %v1118
      %v1120 = vrot.slane %v1113, 2
      %v1121 = vsel %vm963, %v1118, %v1120
      %v1122 = vrot.slane %v1114, 2
      %v1123 = vsel %vm963, %v1120, %v1122
      %v1124 = vrot.slane %v1115, 2
      %v1125 = vsel %vm963, %v1122, %v1124
      %v1126 = vrot.slane %v1116, 2
      %v1127 = vsel %vm963, %v1124, %v1126
      %v1129 = vsel %vm345, %v1119, 0
      %v1132 = vsel %vm345, %v1121, 0
      %v1135 = vsel %vm345, %v1123, 0
      %v1138 = vsel %vm345, %v1125, 0
      %v1141 = vsel %vm345, %v1127, 0
      %v1144 = vsel %vm361, %v1088, 0
      %1146 = vmatprep.subr.bf16.mxu0 0
      %1147 = vmatpush1.bf16.msra.mxu0 %v1144
      %1148 = vmatprep.subr.bf16.mxu0 0
      %1149 = vmatpush1.bf16.msra.mxu0 0
      %1150 = vmatprep.subr.bf16.mxu0 0
      %1151 = vmatpush1.bf16.msra.mxu0 0
      %1152 = vmatprep.subr.bf16.mxu0 0
      %1153 = vmatpush1.bf16.msra.mxu0 0
      %1154 = vmatprep.subr.bf16.mxu0 0
      %1155 = vmatpush1.bf16.msra.mxu0 0
      %1156 = vmatprep.subr.bf16.mxu0 0
      %1157 = vmatpush1.bf16.msra.mxu0 0
      %1158 = vmatprep.subr.bf16.mxu0 0
      %1159 = vmatpush1.bf16.msra.mxu0 0
      %1160 = vmatprep.subr.bf16.mxu0 0
      %1161 = vmatpush1.bf16.msra.mxu0 0
      %1162 = vmatprep.subr.bf16.mxu0 0
      %1163 = vmatpush1.bf16.msra.mxu0 0
      %1164 = vmatprep.subr.bf16.mxu0 0
      %1165 = vmatpush1.bf16.msra.mxu0 0
      %1166 = vmatprep.subr.bf16.mxu0 0
      %1167 = vmatpush1.bf16.msra.mxu0 0
      %1168 = vmatprep.subr.bf16.mxu0 0
      %1169 = vmatpush1.bf16.msra.mxu0 0
      %1170 = vmatprep.subr.bf16.mxu0 0
      %1171 = vmatpush1.bf16.msra.mxu0 0
      %1172 = vmatprep.subr.bf16.mxu0 0
      %1173 = vmatpush1.bf16.msra.mxu0 0
      %1174 = vmatprep.subr.bf16.mxu0 0
      %1175 = vmatpush1.bf16.msra.mxu0 0
      %1176 = vmatprep.subr.bf16.mxu0 0
      %1177 = vmatpush1.bf16.msra.mxu0 0
      %1178 = vmatprep.mubr.bf16.mxu0 0
      %1179 = vmatmul.mubr.bf16.gmra.mrb[0].mxu0 %v1129
      %v1180 = vpop.f32.mrb[0].mxu0
      %v1181 = vadd.f32 0.0, %v1180
      %v1182 = vpop.f32.mrb[0].mxu0
      %v1183 = vpop.f32.mrb[0].mxu0
      %v1184 = vadd.f32 0.0, %v1183
      %v1185 = vpop.f32.mrb[0].mxu0
      %1186 = vmatprep.mubr.bf16.mxu0 0
      %1187 = vmatmul.mubr.bf16.gmra.mrb[0].mxu0 %v1132
      %v1188 = vpop.f32.mrb[0].mxu0
      %v1189 = vadd.f32 0.0, %v1188
      %v1190 = vpop.f32.mrb[0].mxu0
      %v1191 = vpop.f32.mrb[0].mxu0
      %v1192 = vadd.f32 0.0, %v1191
      %v1193 = vpop.f32.mrb[0].mxu0
      %1194 = vmatprep.mubr.bf16.mxu0 0
      %1195 = vmatmul.mubr.bf16.gmra.mrb[0].mxu0 %v1135
      %v1196 = vpop.f32.mrb[0].mxu0
      %v1197 = vadd.f32 0.0, %v1196
      %v1198 = vpop.f32.mrb[0].mxu0
      %v1199 = vpop.f32.mrb[0].mxu0
      %v1200 = vadd.f32 0.0, %v1199
      %v1201 = vpop.f32.mrb[0].mxu0
      %1202 = vmatprep.mubr.bf16.mxu0 0
      %1203 = vmatmul.mubr.bf16.gmra.mrb[0].mxu0 %v1138
      %v1204 = vpop.f32.mrb[0].mxu0
      %v1205 = vadd.f32 0.0, %v1204
      %v1206 = vpop.f32.mrb[0].mxu0
      %v1207 = vpop.f32.mrb[0].mxu0
      %v1208 = vadd.f32 0.0, %v1207
      %v1209 = vpop.f32.mrb[0].mxu0
      %1210 = vmatprep.mubr.bf16.mxu0 0
      %1211 = vmatmul.mubr.bf16.gmra.mrb[0].mxu0 %v1141
      %v1212 = vpop.f32.mrb[0].mxu0
      %v1213 = vadd.f32 0.0, %v1212
      %v1214 = vpop.f32.mrb[0].mxu0
      %v1215 = vpop.f32.mrb[0].mxu0
      %v1216 = vadd.f32 0.0, %v1215
      %v1217 = vpop.f32.mrb[0].mxu0
      %1218 = vdwg.mxu0
      %v1219 = vadd.f32 %v1066, %v1181
      %v1220 = vadd.f32 %v1067, %v1184
      %v1221 = vadd.f32 %v1068, %v1189
      %v1222 = vadd.f32 %v1069, %v1192
      %v1223 = vadd.f32 %v1070, %v1197
      %v1224 = vadd.f32 %v1071, %v1200
      %v1225 = vadd.f32 %v1072, %v1205
      %v1226 = vadd.f32 %v1073, %v1208
      %v1227 = vadd.f32 %v1074, %v1213
      %v1228 = vadd.f32 %v1075, %v1216
      %v1229 = vld [vmem:[%s236 + $0x30] sm:$0x7]
      %s1230 = scalar_lea.vmem %s1, 28
      %v1231 = vld [vmem:[%s1230] sm:$0xf]
      %v1233 = vunpack.c.l.b16 %v1229
      %v1234 = vpack.c.b16 %v1233, %v1233
      %vm1235 = vsmask.f32 5376
      %v1237 = vshrl.u32 %v1111, 16
      %v1239 = vrot.slane %v1237, 2
      %v1240 = vshll.u32 %v1111, 16
      %v1242 = vrot.slane %v1240, 3
      %v1243 = vor.u32 %v1239, %v1242
      %v1245 = vshrl.u32 %v1112, 16
      %v1247 = vrot.slane %v1245, 2
      %v1248 = vshll.u32 %v1112, 16
      %v1250 = vrot.slane %v1248, 3
      %v1251 = vor.u32 %v1247, %v1250
      %v1252 = vsel %vm1235, %v1243, %v1251
      %v1254 = vshrl.u32 %v1113, 16
      %v1256 = vrot.slane %v1254, 2
      %v1257 = vshll.u32 %v1113, 16
      %v1259 = vrot.slane %v1257, 3
      %v1260 = vor.u32 %v1256, %v1259
      %v1261 = vsel %vm1235, %v1251, %v1260
      %v1263 = vshrl.u32 %v1114, 16
      %v1265 = vrot.slane %v1263, 2
      %v1266 = vshll.u32 %v1114, 16
      %v1268 = vrot.slane %v1266, 3
      %v1269 = vor.u32 %v1265, %v1268
      %v1270 = vsel %vm1235, %v1260, %v1269
      %v1272 = vshrl.u32 %v1115, 16
      %v1274 = vrot.slane %v1272, 2
      %v1275 = vshll.u32 %v1115, 16
      %v1277 = vrot.slane %v1275, 3
      %v1278 = vor.u32 %v1274, %v1277
      %v1279 = vsel %vm1235, %v1269, %v1278
      %v1281 = vshrl.u32 %v1234, 16
      %v1283 = vrot.slane %v1281, 2
      %v1284 = vshll.u32 %v1234, 16
      %v1286 = vrot.slane %v1284, 3
      %v1287 = vor.u32 %v1283, %v1286
      %v1288 = vsel %vm1235, %v1278, %v1287
      %v1290 = vsel %vm345, %v1252, 0
      %v1293 = vsel %vm345, %v1261, 0
      %v1296 = vsel %vm345, %v1270, 0
      %v1299 = vsel %vm345, %v1279, 0
      %v1302 = vsel %vm345, %v1288, 0
      %v1305 = vsel %vm361, %v1231, 0
      %1307 = vmatprep.subr.bf16.mxu0 0
      %1308 = vmatpush1.bf16.msra.mxu0 %v1305
      %1309 = vmatprep.subr.bf16.mxu0 0
      %1310 = vmatpush1.bf16.msra.mxu0 0
      %1311 = vmatprep.subr.bf16.mxu0 0
      %1312 = vmatpush1.bf16.msra.mxu0 0
      %1313 = vmatprep.subr.bf16.mxu0 0
      %1314 = vmatpush1.bf16.msra.mxu0 0
      %1315 = vmatprep.subr.bf16.mxu0 0
      %1316 = vmatpush1.bf16.msra.mxu0 0
      %1317 = vmatprep.subr.bf16.mxu0 0
      %1318 = vmatpush1.bf16.msra.mxu0 0
      %1319 = vmatprep.subr.bf16.mxu0 0
      %1320 = vmatpush1.bf16.msra.mxu0 0
      %1321 = vmatprep.subr.bf16.mxu0 0
      %1322 = vmatpush1.bf16.msra.mxu0 0
      %1323 = vmatprep.subr.bf16.mxu0 0
      %1324 = vmatpush1.bf16.msra.mxu0 0
      %1325 = vmatprep.subr.bf16.mxu0 0
      %1326 = vmatpush1.bf16.msra.mxu0 0
      %1327 = vmatprep.subr.bf16.mxu0 0
      %1328 = vmatpush1.bf16.msra.mxu0 0
      %1329 = vmatprep.subr.bf16.mxu0 0
      %1330 = vmatpush1.bf16.msra.mxu0 0
      %1331 = vmatprep.subr.bf16.mxu0 0
      %1332 = vmatpush1.bf16.msra.mxu0 0
      %1333 = vmatprep.subr.bf16.mxu0 0
      %1334 = vmatpush1.bf16.msra.mxu0 0
      %1335 = vmatprep.subr.bf16.mxu0 0
      %1336 = vmatpush1.bf16.msra.mxu0 0
      %1337 = vmatprep.subr.bf16.mxu0 0
      %1338 = vmatpush1.bf16.msra.mxu0 0
      %1339 = vmatprep.mubr.bf16.mxu0 0
      %1340 = vmatmul.mubr.bf16.gmra.mrb[0].mxu0 %v1290
      %v1341 = vpop.f32.mrb[0].mxu0
      %v1342 = vadd.f32 0.0, %v1341
      %v1343 = vpop.f32.mrb[0].mxu0
      %v1344 = vpop.f32.mrb[0].mxu0
      %v1345 = vadd.f32 0.0, %v1344
      %v1346 = vpop.f32.mrb[0].mxu0
      %1347 = vmatprep.mubr.bf16.mxu0 0
      %1348 = vmatmul.mubr.bf16.gmra.mrb[0].mxu0 %v1293
      %v1349 = vpop.f32.mrb[0].mxu0
      %v1350 = vadd.f32 0.0, %v1349
      %v1351 = vpop.f32.mrb[0].mxu0
      %v1352 = vpop.f32.mrb[0].mxu0
      %v1353 = vadd.f32 0.0, %v1352
      %v1354 = vpop.f32.mrb[0].mxu0
      %1355 = vmatprep.mubr.bf16.mxu0 0
      %1356 = vmatmul.mubr.bf16.gmra.mrb[0].mxu0 %v1296
      %v1357 = vpop.f32.mrb[0].mxu0
      %v1358 = vadd.f32 0.0, %v1357
      %v1359 = vpop.f32.mrb[0].mxu0
      %v1360 = vpop.f32.mrb[0].mxu0
      %v1361 = vadd.f32 0.0, %v1360
      %v1362 = vpop.f32.mrb[0].mxu0
      %1363 = vmatprep.mubr.bf16.mxu0 0
      %1364 = vmatmul.mubr.bf16.gmra.mrb[0].mxu0 %v1299
      %v1365 = vpop.f32.mrb[0].mxu0
      %v1366 = vadd.f32 0.0, %v1365
      %v1367 = vpop.f32.mrb[0].mxu0
      %v1368 = vpop.f32.mrb[0].mxu0
      %v1369 = vadd.f32 0.0, %v1368
      %v1370 = vpop.f32.mrb[0].mxu0
      %1371 = vmatprep.mubr.bf16.mxu0 0
      %1372 = vmatmul.mubr.bf16.gmra.mrb[0].mxu0 %v1302
      %v1373 = vpop.f32.mrb[0].mxu0
      %v1374 = vadd.f32 0.0, %v1373
      %v1375 = vpop.f32.mrb[0].mxu0
      %v1376 = vpop.f32.mrb[0].mxu0
      %v1377 = vadd.f32 0.0, %v1376
      %v1378 = vpop.f32.mrb[0].mxu0
      %1379 = vdwg.mxu0
      %v1380 = vadd.f32 %v1219, %v1342
      %v1381 = vadd.f32 %v1220, %v1345
      %v1382 = vadd.f32 %v1221, %v1350
      %v1383 = vadd.f32 %v1222, %v1353
      %v1384 = vadd.f32 %v1223, %v1358
      %v1385 = vadd.f32 %v1224, %v1361
      %v1386 = vadd.f32 %v1225, %v1366
      %v1387 = vadd.f32 %v1226, %v1369
      %v1388 = vadd.f32 %v1227, %v1374
      %v1389 = vadd.f32 %v1228, %v1377
      %v1390 = vld [vmem:[%s236 + $0x8] sm:$0x8]
      %s1391 = scalar_lea.vmem %s1, 32
      %v1392 = vld [vmem:[%s1391] sm:$0xf]
      %v1394 = vunpack.c.l.b16 %v1390
      %v1395 = vpack.c.b16 %v1101, %v1394
      %vm1396 = vcmask 1044480
      %v1397 = vrot.slane %v1395, 3
      %v1398 = vrot.slane %v1112, 3
      %v1399 = vsel %vm1396, %v1397, %v1398
      %v1400 = vrot.slane %v1113, 3
      %v1401 = vsel %vm1396, %v1398, %v1400
      %v1402 = vrot.slane %v1114, 3
      %v1403 = vsel %vm1396, %v1400, %v1402
      %v1404 = vrot.slane %v1115, 3
      %v1405 = vsel %vm1396, %v1402, %v1404
      %v1406 = vrot.slane %v1234, 3
      %v1407 = vsel %vm1396, %v1404, %v1406
      %v1409 = vsel %vm345, %v1399, 0
      %v1412 = vsel %vm345, %v1401, 0
      %v1415 = vsel %vm345, %v1403, 0
      %v1418 = vsel %vm345, %v1405, 0
      %v1421 = vsel %vm345, %v1407, 0
      %v1424 = vsel %vm361, %v1392, 0
      %1426 = vmatprep.subr.bf16.mxu0 0
      %1427 = vmatpush1.bf16.msra.mxu0 %v1424
      %1428 = vmatprep.subr.bf16.mxu0 0
      %1429 = vmatpush1.bf16.msra.mxu0 0
      %1430 = vmatprep.subr.bf16.mxu0 0
      %1431 = vmatpush1.bf16.msra.mxu0 0
      %1432 = vmatprep.subr.bf16.mxu0 0
      %1433 = vmatpush1.bf16.msra.mxu0 0
      %1434 = vmatprep.subr.bf16.mxu0 0
      %1435 = vmatpush1.bf16.msra.mxu0 0
      %1436 = vmatprep.subr.bf16.mxu0 0
      %1437 = vmatpush1.bf16.msra.mxu0 0
      %1438 = vmatprep.subr.bf16.mxu0 0
      %1439 = vmatpush1.bf16.msra.mxu0 0
      %1440 = vmatprep.subr.bf16.mxu0 0
      %1441 = vmatpush1.bf16.msra.mxu0 0
      %1442 = vmatprep.subr.bf16.mxu0 0
      %1443 = vmatpush1.bf16.msra.mxu0 0
      %1444 = vmatprep.subr.bf16.mxu0 0
      %1445 = vmatpush1.bf16.msra.mxu0 0
      %1446 = vmatprep.subr.bf16.mxu0 0
      %1447 = vmatpush1.bf16.msra.mxu0 0
      %1448 = vmatprep.subr.bf16.mxu0 0
      %1449 = vmatpush1.bf16.msra.mxu0 0
      %1450 = vmatprep.subr.bf16.mxu0 0
      %1451 = vmatpush1.bf16.msra.mxu0 0
      %1452 = vmatprep.subr.bf16.mxu0 0
      %1453 = vmatpush1.bf16.msra.mxu0 0
      %1454 = vmatprep.subr.bf16.mxu0 0
      %1455 = vmatpush1.bf16.msra.mxu0 0
      %1456 = vmatprep.subr.bf16.mxu0 0
      %1457 = vmatpush1.bf16.msra.mxu0 0
      %1458 = vmatprep.mubr.bf16.mxu0 0
      %1459 = vmatmul.mubr.bf16.gmra.mrb[0].mxu0 %v1409
      %v1460 = vpop.f32.mrb[0].mxu0
      %v1461 = vadd.f32 0.0, %v1460
      %v1462 = vpop.f32.mrb[0].mxu0
      %v1463 = vpop.f32.mrb[0].mxu0
      %v1464 = vadd.f32 0.0, %v1463
      %v1465 = vpop.f32.mrb[0].mxu0
      %1466 = vmatprep.mubr.bf16.mxu0 0
      %1467 = vmatmul.mubr.bf16.gmra.mrb[0].mxu0 %v1412
      %v1468 = vpop.f32.mrb[0].mxu0
      %v1469 = vadd.f32 0.0, %v1468
      %v1470 = vpop.f32.mrb[0].mxu0
      %v1471 = vpop.f32.mrb[0].mxu0
      %v1472 = vadd.f32 0.0, %v1471
      %v1473 = vpop.f32.mrb[0].mxu0
      %1474 = vmatprep.mubr.bf16.mxu0 0
      %1475 = vmatmul.mubr.bf16.gmra.mrb[0].mxu0 %v1415
      %v1476 = vpop.f32.mrb[0].mxu0
      %v1477 = vadd.f32 0.0, %v1476
      %v1478 = vpop.f32.mrb[0].mxu0
      %v1479 = vpop.f32.mrb[0].mxu0
      %v1480 = vadd.f32 0.0, %v1479
      %v1481 = vpop.f32.mrb[0].mxu0
      %1482 = vmatprep.mubr.bf16.mxu0 0
      %1483 = vmatmul.mubr.bf16.gmra.mrb[0].mxu0 %v1418
      %v1484 = vpop.f32.mrb[0].mxu0
      %v1485 = vadd.f32 0.0, %v1484
      %v1486 = vpop.f32.mrb[0].mxu0
      %v1487 = vpop.f32.mrb[0].mxu0
      %v1488 = vadd.f32 0.0, %v1487
      %v1489 = vpop.f32.mrb[0].mxu0
      %1490 = vmatprep.mubr.bf16.mxu0 0
      %1491 = vmatmul.mubr.bf16.gmra.mrb[0].mxu0 %v1421
      %v1492 = vpop.f32.mrb[0].mxu0
      %v1493 = vadd.f32 0.0, %v1492
      %v1494 = vpop.f32.mrb[0].mxu0
      %v1495 = vpop.f32.mrb[0].mxu0
      %v1496 = vadd.f32 0.0, %v1495
      %v1497 = vpop.f32.mrb[0].mxu0
      %1498 = vdwg.mxu0
      %v1499 = vadd.f32 %v1380, %v1461
      %v1500 = vadd.f32 %v1381, %v1464
      %v1501 = vadd.f32 %v1382, %v1469
      %v1502 = vadd.f32 %v1383, %v1472
      %v1503 = vadd.f32 %v1384, %v1477
      %v1504 = vadd.f32 %v1385, %v1480
      %v1505 = vadd.f32 %v1386, %v1485
      %v1506 = vadd.f32 %v1387, %v1488
      %v1507 = vadd.f32 %v1388, %v1493
      %v1508 = vadd.f32 %v1389, %v1496
      %v1509 = vld [vmem:[%s2] sm:$0x1]
      %v1511 = vlaneseq
      %v1512 = vshrl.u32 %v1511, 7
      %v1513 = vsub.s32 0, %v1512
      %v1514 = vrot.slane %v1509, %v1513
      %v1516 = vadd.f32 %v1499, %v1514
      %v1517 = vadd.f32 %v1500, %v1514
      %v1518 = vadd.f32 %v1501, %v1514
      %v1519 = vadd.f32 %v1502, %v1514
      %v1520 = vadd.f32 %v1503, %v1514
      %v1521 = vadd.f32 %v1504, %v1514
      %v1522 = vadd.f32 %v1505, %v1514
      %v1523 = vadd.f32 %v1506, %v1514
      %v1524 = vadd.f32 %v1507, %v1514
      %v1525 = vadd.f32 %v1508, %v1514
      %v1526 = vld [vmem:[%s245] sm:$0xf]
      %v1527 = vld [vmem:[%s245 + $0x4] sm:$0xf]
      %v1528 = vld [vmem:[%s245 + $0x8] sm:$0xf]
      %v1529 = vld [vmem:[%s245 + $0xc] sm:$0xf]
      %v1530 = vld [vmem:[%s245 + $0x10] sm:$0xf]
      %v1531 = vld [vmem:[%s245 + $0x14] sm:$0xf]
      %v1532 = vld [vmem:[%s245 + $0x18] sm:$0xf]
      %v1533 = vld [vmem:[%s245 + $0x1c] sm:$0xf]
      %v1534 = vld [vmem:[%s245 + $0x20] sm:$0xf]
      %v1535 = vld [vmem:[%s245 + $0x24] sm:$0xf]
      %v1536 = vunpack.c.l.bf16 %v1526
      %v1537 = vunpack.c.l.bf16 %v1527
      %v1538 = vunpack.c.l.bf16 %v1528
      %v1539 = vunpack.c.l.bf16 %v1529
      %v1540 = vunpack.c.l.bf16 %v1530
      %v1541 = vunpack.c.l.bf16 %v1531
      %v1542 = vunpack.c.l.bf16 %v1532
      %v1543 = vunpack.c.l.bf16 %v1533
      %v1544 = vunpack.c.l.bf16 %v1534
      %v1545 = vunpack.c.l.bf16 %v1535
      %v1546 = vadd.f32 %v1516, %v1536
      %v1547 = vadd.f32 %v1517, %v1537
      %v1548 = vadd.f32 %v1518, %v1538
      %v1549 = vadd.f32 %v1519, %v1539
      %v1550 = vadd.f32 %v1520, %v1540
      %v1551 = vadd.f32 %v1521, %v1541
      %v1552 = vadd.f32 %v1522, %v1542
      %v1553 = vadd.f32 %v1523, %v1543
      %v1554 = vadd.f32 %v1524, %v1544
      %v1555 = vadd.f32 %v1525, %v1545
      %v1556 = vmax.f32 %v1546, 0.0
      %v1557 = vmax.f32 %v1547, 0.0
      %v1558 = vmax.f32 %v1548, 0.0
      %v1559 = vmax.f32 %v1549, 0.0
      %v1560 = vmax.f32 %v1550, 0.0
      %v1561 = vmax.f32 %v1551, 0.0
      %v1562 = vmax.f32 %v1552, 0.0
      %v1563 = vmax.f32 %v1553, 0.0
      %v1564 = vmax.f32 %v1554, 0.0
      %v1565 = vmax.f32 %v1555, 0.0
      %1566 = vst [vmem:[%s255] sm:$0xff] %v1556
      %1567 = vst [vmem:[%s255 + $0x8] sm:$0xff] %v1557
      %1568 = vst [vmem:[%s255 + $0x10] sm:$0xff] %v1558
      %1569 = vst [vmem:[%s255 + $0x18] sm:$0xff] %v1559
      %1570 = vst [vmem:[%s255 + $0x20] sm:$0xff] %v1560
      %1571 = vst [vmem:[%s255 + $0x28] sm:$0xff] %v1561
      %1572 = vst [vmem:[%s255 + $0x30] sm:$0xff] %v1562
      %1573 = vst [vmem:[%s255 + $0x38] sm:$0xff] %v1563
      %1574 = vst [vmem:[%s255 + $0x40] sm:$0xff] %v1564
      %1575 = vst [vmem:[%s255 + $0x48] sm:$0xff] %v1565
      %s1576 = smul.u32 10, %s20
      %p1577 = scmp.lt.s32.totalorder %s19, 1
      %s1578 = scalar_select %p1577, %s19, 1
      %p1579 = scmp.lt.s32.totalorder %s1576, 9
      %s1580 = scalar_select %p1579, %s1576, 9
      %s1581 = smul.addr %s1578, 10
      %s1582 = sadd.s32 %s1580, %s1581
      %s1583 = smul.addr %s1582, 8
      %s1584 = scalar_lea.vmem %s4, %s1583
      // Predicated region
      $region37: #{basic_block_forward.5} parent=35 // pred_check
        %p1585 = pneg %p143
      $region38: #{basic_block_forward.5} parent=35 // pred_check_branch
        %1587 = sbr.rel (%p1585) target = $region40
      $region39: #{basic_block_forward.5} parent=35 // pred_region
        %s1588 = smul.u32 10, %s20
      $region40: #{basic_block_forward.5} parent=35 // pred_fallthru
        _
    $region36: #{basic_block_forward.5} parent=5 // pred_fallthru
      _
    %p1589 = scmp.le.s32.totalorder 2, %s10
    // Predicated region
    $region41: #{basic_block_forward.5} parent=5 // pred_check
      %p1590 = pneg %p1589
    $region42: #{basic_block_forward.5} parent=5 // pred_check_branch
      %1592 = sbr.rel (%p1590) target = $region44
    $region43: #{basic_block_forward.5} parent=5 // pred_region
      %s1593 = ssub.s32 %s10, 2
      // Predicated region
      $region45: #{basic_block_forward.5} parent=43 // pred_check
        %p1594 = pneg %p149
      $region46: #{basic_block_forward.5} parent=43 // pred_check_branch
        %1596 = sbr.rel (%p1594) target = $region48
      $region47: #{basic_block_forward.5} parent=43 // pred_region
        %s1597 = smul.u32 10, %s22
        %p1598 = scmp.lt.s32.totalorder %s21, 1
        %s1599 = scalar_select %p1598, %s21, 1
        %p1600 = scmp.lt.s32.totalorder %s1597, 9
        %s1601 = scalar_select %p1600, %s1597, 9
        %s1602 = smul.addr %s1599, 10
        %s1603 = sadd.s32 %s1601, %s1602
        %s1604 = smul.addr %s1603, 8
        %s1605 = scalar_lea.vmem %s4, %s1604
      $region48: #{basic_block_forward.5} parent=43 // pred_fallthru
        _
    $region44: #{basic_block_forward.5} parent=5 // pred_fallthru
      _
  $region6: #{basic_block_forward.5} parent=0 // loop_footer
    %s14 = sadd.s32 1, %s10
  $region7: #{basic_block_forward.5} parent=0 // loop_footer_branch
    %9 = sbr.rel target = $region3
  $region8: #{basic_block_forward.5} parent=0 // loop_exit
    _

</llo_original>
